<compile_context>
chip_gen: v6e
topology: v6e:2x2x1
jax: 0.10.0
libtpu: 0.0.40
codegen_flags: <defaults>
</compile_context>

<pallas_src>
import functools

import jax
import jax.numpy as jnp
from jax.experimental import pallas as pl
from jax.experimental.pallas import tpu as pltpu


# ----------------------------------------------------------------------------
# Fused kernel: one block = (1, R, HW) with R = B_TILE * T * C, lane-dense HW.
# Operands: mats (stacked block-diag matrices), cols (bias/gain columns),
#           taps (per-row conv weights), masks (per-tap edge masks).
# ----------------------------------------------------------------------------
def _fused_kernel(x_ref, mats_ref, cols_ref, taps_ref, masks_ref,
                  o_ref, u_ref, *, mat_slices, conv_shifts, conv_bias_cols):
    f32 = jnp.float32
    x = x_ref[0]                                   # (R, HW)
    R = x.shape[0]

    def mat(i):                                    # static sublane/lane window of the matrix slab
        r0, nr, nc = mat_slices[i]
        return mats_ref[r0:r0 + nr, 0:nc]

    def col(j, nr):                                # bias / gain column j (first nr rows valid)
        return cols_ref[0:nr, j:j + 1]

    rv = mat_slices[0][1]                          # rows of Wv / Ex  (= R // 2)
    rq = mat_slices[1][1]                          # rows of Wq       (= R // T)

    # -------- stage 1: temporal polarized attention (gate on a narrow tile) --
    v = jnp.dot(mat(0), x, preferred_element_type=f32) + col(0, rv)      # (R/2, HW)
    q = jnp.dot(mat(1), x, preferred_element_type=f32) + col(1, rq)      # (R/T, HW)
    e = jnp.exp(q - jnp.max(q, axis=-1, keepdims=True))                  # softmax numerator
    er = jnp.dot(mat(2), e, preferred_element_type=f32)                  # replicated per frame slot
    num = jnp.sum(v * er, axis=-1, keepdims=True)                        # (R/2, 1) pooled <v, sm(q)>
    den = jnp.sum(er, axis=-1, keepdims=True)                            # (R/2, 1)
    GL = 128                                                             # one native lane tile
    z = jnp.broadcast_to(num / den, (rv, GL))                            # gate stays narrow, not HW
    dev = jnp.dot(mat(3), z, preferred_element_type=f32) + col(2, R)     # (I-mean)(Wz z + bz)
    var = jnp.dot(mat(4), dev * dev, preferred_element_type=f32)         # biased variance over T
    ln = col(3, R) * dev * jax.lax.rsqrt(var + 1e-5) + col(4, R)
    tw = 1.0 / (1.0 + jnp.exp(-ln))                                      # (R, GL) sigmoid gate
    u = tw[:, 0:1] * x                                                   # broadcast gate over HW
    u_ref[...] = u                                                       # stash; frees vregs below

    # -------- stage 2: large-kernel depthwise spatial attention ---------------
    # Per tap: one XLU roll over the flat HW axis + host-precomputed edge mask
    # + per-row (channel) weight FMA over the whole slab.
    tapsv = taps_ref[...]                                                # (R, n_taps), ~1 vreg
    a = u
    t = 0
    for ci, shifts in enumerate(conv_shifts):
        acc = jnp.zeros_like(a)
        for s in shifts:
            m = masks_ref[t:t + 1, :]                                    # (1, HW) edge mask
            w = tapsv[:, t:t + 1]                                        # (R, 1) tap weight
            src = pltpu.roll(a, s, axis=1) if s else a
            acc = acc + w * (src * m)
            t += 1
        a = acc + col(conv_bias_cols[ci], R)

    # conv1: block-diagonal 1x1 channel mix on the MXU, then polarized gate.
    attn = jnp.dot(mat(5), a, preferred_element_type=f32) + col(9, R)
    o_ref[0] = (u_ref[...] * attn).astype(o_ref.dtype)


# ----------------------------------------------------------------------------
# Host-side operand construction (kron block-diagonals, pre-composed LN,
# consolidated bias columns, conv taps and edge masks).
# ----------------------------------------------------------------------------
def _build_operands(p, T, C, bt, H, W):
    f32 = jnp.float32
    Th = T // 2
    R = bt * C * T
    HW = H * W
    eG = jnp.eye(bt * C, dtype=f32)          # identity over (batch-fold, channel) groups
    eI = jnp.eye(bt * T, dtype=f32)          # identity over stage-2 images
    ctr = jnp.eye(T, dtype=f32) - jnp.full((T, T), 1.0 / T, f32)   # I - mean over T

    def colvec(v, reps):
        return jnp.tile(jnp.asarray(v, f32).reshape(-1), (reps,))[:, None]

    # stage-1 block-diagonal matrices (rows ordered c-major, t-minor per batch slot)
    Wv = jnp.kron(eG, jnp.asarray(p['wv'], f32))                        # (R/2, R)
    Wq = jnp.kron(eG, jnp.asarray(p['wq'], f32)[None, :])               # (R/T, R)
    Ex = jnp.kron(eG, jnp.ones((Th, 1), f32))                           # (R/2, R/T)
    Wdev = jnp.kron(eG, ctr @ jnp.asarray(p['wz'], f32))                # (R, R/2)  pre-composed LN
    Mavg = jnp.kron(eG, jnp.full((T, T), 1.0 / T, f32))                 # (R, R)
    W1 = jnp.kron(eI, jnp.asarray(p['w1'], f32))                        # (R, R)

    mat_slices, rows, off = [], [], 0
    for m in (Wv, Wq, Ex, Wdev, Mavg, W1):
        nr, nc = m.shape
        mat_slices.append((off, nr, nc))
        pad_r = (-nr) % 8                       # keep slice offsets sublane-tile aligned
        rows.append(jnp.pad(m, ((0, pad_r), (0, R - nc))))
        off += nr + pad_r
    mats = jnp.concatenate(rows, axis=0)                                 # (sum_rows, R)

    # all bias / gain columns packed along lanes (padded to R rows)
    bdev = ctr @ jnp.asarray(p['bz'], f32)
    cols_list = [
        colvec(p['bv'], bt * C),        # 0
        colvec(p['bq'], bt * C),        # 1
        colvec(bdev, bt * C),           # 2
        colvec(p['ln_g'], bt * C),      # 3
        colvec(p['ln_b'], bt * C),      # 4
        colvec(p['b0h'], bt * T),       # 5
        colvec(p['b0v'], bt * T),       # 6
        colvec(p['bsh'], bt * T),       # 7
        colvec(p['bsv'], bt * T),       # 8
        colvec(p['b1'], bt * T),        # 9
    ]
    cols = jnp.concatenate(
        [jnp.pad(c, ((0, R - c.shape[0]), (0, 0))) for c in cols_list], axis=1)

    # depthwise-conv taps: per-tap roll shift, lane edge-mask, per-row weight column
    lane = jnp.arange(HW)
    wpos, hpos = lane % W, lane // W
    conv_defs = [  # (weights (C,K), K, dilation, pad, horizontal)
        (p['w0h'], 5, 1, 2, True), (p['w0v'], 5, 1, 2, False),
        (p['wsh'], 11, 3, 15, True), (p['wsv'], 11, 3, 15, False),
    ]
    conv_shifts, tap_cols, mask_rows = [], [], []
    for wts, K, dil, pad, horiz in conv_defs:
        wts = jnp.asarray(wts, f32)
        shifts = []
        for k in range(K):
            d = k * dil - pad
            lim = W if horiz else H
            if abs(d) >= lim:                    # tap never touches a valid pixel -> drop
                continue
            step = d if horiz else d * W
            shifts.append((-step) % HW)
            pos = wpos if horiz else hpos
            mask_rows.append(((pos + d >= 0) & (pos + d < lim)).astype(f32)[None, :])
            tap_cols.append(jnp.tile(wts[:, k], (bt * T,))[:, None])
        conv_shifts.append(tuple(shifts))
    taps = jnp.concatenate(tap_cols, axis=1)                             # (R, n_taps)
    masks = jnp.concatenate(mask_rows, axis=0)                           # (n_taps, HW)

    return mats, cols, taps, masks, tuple(mat_slices), tuple(conv_shifts)


def forward(x, params, T, num_steps=None):
    B, TC, H, W = x.shape
    C = TC // T
    HW = H * W
    assert TC == T * C

    if num_steps is None:
        # Two balanced grid steps feed both v7x TensorCores; on single-TC chips
        # (v5e/v6e) the extra step only costs ~0.35us.  Odd / single batches
        # fold into one big block.
        num_steps = 2 if (B >= 2 and B % 2 == 0) else 1
    bt = B // num_steps
    R = bt * TC

    xf = x.reshape(num_steps, R, HW)             # lane-dense; batch folded into sublanes
    assert xf.shape[-1] == H * W                 # roll/mask logic assumes an unpadded HW axis

    mats, cols, taps, masks, mat_slices, conv_shifts = _build_operands(
        params, T, C, bt, H, W)

    kern = functools.partial(_fused_kernel, mat_slices=mat_slices,
                             conv_shifts=conv_shifts, conv_bias_cols=(5, 6, 7, 8))
    const_spec = lambda w: pl.BlockSpec(w.shape, lambda i: (0, 0))

    out = pl.pallas_call(
        kern,
        out_shape=jax.ShapeDtypeStruct((num_steps, R, HW), x.dtype),
        grid=(num_steps,),
        in_specs=[pl.BlockSpec((1, R, HW), lambda i: (i, 0, 0)),
                  const_spec(mats), const_spec(cols),
                  const_spec(taps), const_spec(masks)],
        out_specs=pl.BlockSpec((1, R, HW), lambda i: (i, 0, 0)),
        scratch_shapes=[pltpu.VMEM((R, HW), jnp.float32)],
        compiler_params=pltpu.CompilerParams(
            dimension_semantics=("parallel",)),     # shards the 2 steps over v7x's 2 TCs
    )(xf, mats, cols, taps, masks)
    return out.reshape(B, TC, H, W)


# ----------------------------------------------------------------------------
# Pure-JAX reference (for correctness check only)
# ----------------------------------------------------------------------------
def reference_forward(x, p, T):
    b, tc, h, w = x.shape
    c = tc // T
    hp = jax.lax.Precision.HIGHEST
    xr = x.reshape(b * c, T, h, w)
    tv = jnp.einsum('ot,nthw->nohw', p['wv'], xr, precision=hp) + p['bv'][None, :, None, None]
    tq = jnp.einsum('t,nthw->nhw', p['wq'], xr, precision=hp) + p['bq'][0]
    tv2 = tv.reshape(b * c, T // 2, h * w)
    tq2 = jax.nn.softmax(tq.reshape(b * c, h * w), axis=1)
    z = jnp.einsum('nok,nk->no', tv2, tq2, precision=hp)
    zz = jnp.einsum('to,no->nt', p['wz'], z, precision=hp) + p['bz'][None, :]
    mean = zz.mean(-1, keepdims=True)
    var = ((zz - mean) ** 2).mean(-1, keepdims=True)
    ln = (zz - mean) / jnp.sqrt(var + 1e-5) * p['ln_g'] + p['ln_b']
    tw = jax.nn.sigmoid(ln)
    t_out = tw[:, :, None, None] * xr
    y = t_out.reshape(b * T, c, h, w)
    u = y

    def dw(xx, wt, bb, pad, dil):
        o = jax.lax.conv_general_dilated(
            xx, wt, window_strides=(1, 1), padding=pad,
            rhs_dilation=dil, feature_group_count=xx.shape[1],
            dimension_numbers=('NCHW', 'OIHW', 'NCHW'), precision=hp)
        return o + bb[None, :, None, None]

    a = dw(y, p['w0h'].reshape(c, 1, 1, 5), p['b0h'], [(0, 0), (2, 2)], (1, 1))
    a = dw(a, p['w0v'].reshape(c, 1, 5, 1), p['b0v'], [(2, 2), (0, 0)], (1, 1))
    a = dw(a, p['wsh'].reshape(c, 1, 1, 11), p['bsh'], [(0, 0), (15, 15)], (1, 3))
    a = dw(a, p['wsv'].reshape(c, 1, 11, 1), p['bsv'], [(15, 15), (0, 0)], (3, 1))
    a = jnp.einsum('oc,nchw->nohw', p['w1'], a, precision=hp) + p['b1'][None, :, None, None]
    out = u * a
    return out.reshape(b, tc, h, w)


# ----------------------------------------------------------------------------
if __name__ == "__main__":
    # small synthetic shapes: T=4 frames, channel(=c)=8, so tc = 32
    B, T, C, H, W = 2, 4, 8, 16, 16
    TC = T * C

    key = jax.random.PRNGKey(0)
    keys = jax.random.split(key, 24)

    def rnd(k, shape, scale=0.2):
        return scale * jax.random.normal(k, shape, dtype=jnp.float32)

    params = {
        'wv': rnd(keys[0], (T // 2, T)),     'bv': rnd(keys[1], (T // 2,), 0.05),
        'wq': rnd(keys[2], (T,)),            'bq': rnd(keys[3], (1,), 0.05),
        'wz': rnd(keys[4], (T, T // 2)),     'bz': rnd(keys[5], (T,), 0.05),
        'ln_g': 1.0 + rnd(keys[6], (T,), 0.05),
        'ln_b': rnd(keys[7], (T,), 0.05),
        'w0h': rnd(keys[8], (C, 5)),         'b0h': rnd(keys[9], (C,), 0.05),
        'w0v': rnd(keys[10], (C, 5)),        'b0v': rnd(keys[11], (C,), 0.05),
        'wsh': rnd(keys[12], (C, 11)),       'bsh': rnd(keys[13], (C,), 0.05),
        'wsv': rnd(keys[14], (C, 11)),       'bsv': rnd(keys[15], (C,), 0.05),
        'w1': rnd(keys[16], (C, C)),         'b1': rnd(keys[17], (C,), 0.05),
    }
    x = jax.random.normal(keys[18], (B, TC, H, W), dtype=jnp.float32)

    out = forward(x, params, T)
    out = jax.block_until_ready(out)

    ref = reference_forward(x, params, T)
    err = float(jnp.max(jnp.abs(out - ref)))
    assert out.shape == (B, TC, H, W)
    assert err < 1e-3, f"max abs error {err}"
    print("KERNEL_OK")
</pallas_src>

<mosaic_0001>
module attributes {stable_mosaic.version = 11 : i64} {
  func.func @_fused_kernel(%arg0: i32, %arg1: memref<1x32x256xf32, #tpu.memory_space<vmem>>, %arg2: memref<136x32xf32, #tpu.memory_space<vmem>>, %arg3: memref<32x10xf32, #tpu.memory_space<vmem>>, %arg4: memref<32x32xf32, #tpu.memory_space<vmem>>, %arg5: memref<32x256xf32, #tpu.memory_space<vmem>>, %arg6: memref<1x32x256xf32, #tpu.memory_space<vmem>>, %arg7: memref<32x256xf32, #tpu.memory_space<vmem>>) attributes {dimension_semantics = [#tpu.dimension_semantics<parallel>], iteration_bounds = array<i64: 2>, scalar_prefetch = 0 : i64, scratch_operands = 1 : i64, tpu.core_type = #tpu.core_type<tc>, window_params = [{transform_indices = @transform_0, window_bounds = array<i64: 1, 32, 256>}, {pipeline_mode = #tpu.pipeline_mode<synchronous>, transform_indices = @transform_1, window_bounds = array<i64: 136, 32>}, {pipeline_mode = #tpu.pipeline_mode<synchronous>, transform_indices = @transform_2, window_bounds = array<i64: 32, 10>}, {pipeline_mode = #tpu.pipeline_mode<synchronous>, transform_indices = @transform_3, window_bounds = array<i64: 32, 32>}, {pipeline_mode = #tpu.pipeline_mode<synchronous>, transform_indices = @transform_4, window_bounds = array<i64: 32, 256>}, {transform_indices = @transform_5, window_bounds = array<i64: 1, 32, 256>}]} {
    %c0 = arith.constant 0 : index
    %c0_0 = arith.constant 0 : index
    %c0_1 = arith.constant 0 : index
    %0 = vector.load %arg1[%c0, %c0_0, %c0_1] : memref<1x32x256xf32, #tpu.memory_space<vmem>>, vector<1x32x256xf32>
    %1 = vector.shape_cast %0 : vector<1x32x256xf32> to vector<32x256xf32>
    %c0_2 = arith.constant 0 : index
    %c0_3 = arith.constant 0 : index
    %2 = vector.load %arg2[%c0_2, %c0_3] : memref<136x32xf32, #tpu.memory_space<vmem>>, vector<16x32xf32>
    %cst = arith.constant dense<0.000000e+00> : vector<16x256xf32>
    %3 = tpu.matmul %2, %1, %cst {dimension_numbers = #tpu.dot_dimension_numbers<[1], [0], [0], [1], [0, 0, 1, 1], [], []>} : vector<16x32xf32>, vector<32x256xf32>, vector<16x256xf32> -> vector<16x256xf32>
    %c0_4 = arith.constant 0 : index
    %c0_5 = arith.constant 0 : index
    %4 = vector.load %arg3[%c0_4, %c0_5] : memref<32x10xf32, #tpu.memory_space<vmem>>, vector<16x1xf32>
    %5 = vector.broadcast %4 : vector<16x1xf32> to vector<16x256xf32>
    %6 = arith.addf %3, %5 : vector<16x256xf32>
    %c16 = arith.constant 16 : index
    %c0_6 = arith.constant 0 : index
    %7 = vector.load %arg2[%c16, %c0_6] : memref<136x32xf32, #tpu.memory_space<vmem>>, vector<8x32xf32>
    %cst_7 = arith.constant dense<0.000000e+00> : vector<8x256xf32>
    %8 = tpu.matmul %7, %1, %cst_7 {dimension_numbers = #tpu.dot_dimension_numbers<[1], [0], [0], [1], [0, 0, 1, 1], [], []>} : vector<8x32xf32>, vector<32x256xf32>, vector<8x256xf32> -> vector<8x256xf32>
    %c0_8 = arith.constant 0 : index
    %c1 = arith.constant 1 : index
    %9 = vector.load %arg3[%c0_8, %c1] : memref<32x10xf32, #tpu.memory_space<vmem>>, vector<8x1xf32>
    %10 = vector.broadcast %9 : vector<8x1xf32> to vector<8x256xf32>
    %11 = arith.addf %8, %10 : vector<8x256xf32>
    %cst_9 = arith.constant dense<0xFF800000> : vector<8xf32>
    %12 = vector.multi_reduction <maximumf>, %11, %cst_9 [1] : vector<8x256xf32> to vector<8xf32>
    %13 = vector.shape_cast %12 : vector<8xf32> to vector<8x1xf32>
    %14 = vector.broadcast %13 : vector<8x1xf32> to vector<8x256xf32>
    %15 = arith.subf %11, %14 : vector<8x256xf32>
    %16 = math.exp %15 : vector<8x256xf32>
    %c24 = arith.constant 24 : index
    %c0_10 = arith.constant 0 : index
    %17 = vector.load %arg2[%c24, %c0_10] : memref<136x32xf32, #tpu.memory_space<vmem>>, vector<16x8xf32>
    %cst_11 = arith.constant dense<0.000000e+00> : vector<16x256xf32>
    %18 = tpu.matmul %17, %16, %cst_11 {dimension_numbers = #tpu.dot_dimension_numbers<[1], [0], [0], [1], [0, 0, 1, 1], [], []>} : vector<16x8xf32>, vector<8x256xf32>, vector<16x256xf32> -> vector<16x256xf32>
    %19 = arith.mulf %6, %18 : vector<16x256xf32>
    %cst_12 = arith.constant dense<0.000000e+00> : vector<16xf32>
    %20 = vector.multi_reduction <add>, %19, %cst_12 [1] : vector<16x256xf32> to vector<16xf32>
    %21 = vector.shape_cast %20 : vector<16xf32> to vector<16x1xf32>
    %cst_13 = arith.constant dense<0.000000e+00> : vector<16xf32>
    %22 = vector.multi_reduction <add>, %18, %cst_13 [1] : vector<16x256xf32> to vector<16xf32>
    %23 = vector.shape_cast %22 : vector<16xf32> to vector<16x1xf32>
    %24 = arith.divf %21, %23 : vector<16x1xf32>
    %25 = vector.shape_cast %24 : vector<16x1xf32> to vector<16x1xf32>
    %26 = vector.broadcast %25 : vector<16x1xf32> to vector<16x128xf32>
    %c40 = arith.constant 40 : index
    %c0_14 = arith.constant 0 : index
    %27 = vector.load %arg2[%c40, %c0_14] : memref<136x32xf32, #tpu.memory_space<vmem>>, vector<32x16xf32>
    %cst_15 = arith.constant dense<0.000000e+00> : vector<32x128xf32>
    %28 = tpu.matmul %27, %26, %cst_15 {dimension_numbers = #tpu.dot_dimension_numbers<[1], [0], [0], [1], [0, 0, 1, 1], [], []>} : vector<32x16xf32>, vector<16x128xf32>, vector<32x128xf32> -> vector<32x128xf32>
    %c0_16 = arith.constant 0 : index
    %c2 = arith.constant 2 : index
    %29 = vector.load %arg3[%c0_16, %c2] : memref<32x10xf32, #tpu.memory_space<vmem>>, vector<32x1xf32>
    %30 = vector.broadcast %29 : vector<32x1xf32> to vector<32x128xf32>
    %31 = arith.addf %28, %30 : vector<32x128xf32>
    %c72 = arith.constant 72 : index
    %c0_17 = arith.constant 0 : index
    %32 = vector.load %arg2[%c72, %c0_17] : memref<136x32xf32, #tpu.memory_space<vmem>>, vector<32x32xf32>
    %33 = arith.mulf %31, %31 : vector<32x128xf32>
    %cst_18 = arith.constant dense<0.000000e+00> : vector<32x128xf32>
    %34 = tpu.matmul %32, %33, %cst_18 {dimension_numbers = #tpu.dot_dimension_numbers<[1], [0], [0], [1], [0, 0, 1, 1], [], []>} : vector<32x32xf32>, vector<32x128xf32>, vector<32x128xf32> -> vector<32x128xf32>
    %c0_19 = arith.constant 0 : index
    %c3 = arith.constant 3 : index
    %35 = vector.load %arg3[%c0_19, %c3] : memref<32x10xf32, #tpu.memory_space<vmem>>, vector<32x1xf32>
    %36 = vector.broadcast %35 : vector<32x1xf32> to vector<32x128xf32>
    %37 = arith.mulf %36, %31 : vector<32x128xf32>
    %cst_20 = arith.constant 9.99999974E-6 : f32
    %38 = vector.broadcast %cst_20 : f32 to vector<32x128xf32>
    %39 = arith.addf %34, %38 : vector<32x128xf32>
    %40 = math.rsqrt %39 : vector<32x128xf32>
    %41 = arith.mulf %37, %40 : vector<32x128xf32>
    %c0_21 = arith.constant 0 : index
    %c4 = arith.constant 4 : index
    %42 = vector.load %arg3[%c0_21, %c4] : memref<32x10xf32, #tpu.memory_space<vmem>>, vector<32x1xf32>
    %43 = vector.broadcast %42 : vector<32x1xf32> to vector<32x128xf32>
    %44 = arith.addf %41, %43 : vector<32x128xf32>
    %cst_22 = arith.constant 0.000000e+00 : f32
    %45 = vector.broadcast %cst_22 : f32 to vector<32x128xf32>
    %46 = arith.subf %45, %44 : vector<32x128xf32>
    %47 = math.exp %46 : vector<32x128xf32>
    %cst_23 = arith.constant 1.000000e+00 : f32
    %48 = vector.broadcast %cst_23 : f32 to vector<32x128xf32>
    %49 = arith.addf %48, %47 : vector<32x128xf32>
    %cst_24 = arith.constant 1.000000e+00 : f32
    %50 = vector.broadcast %cst_24 : f32 to vector<32x128xf32>
    %51 = arith.divf %50, %49 : vector<32x128xf32>
    %52 = vector.extract_strided_slice %51 {offsets = [0, 0], sizes = [32, 1], strides = [1, 1]} : vector<32x128xf32> to vector<32x1xf32>
    %53 = vector.broadcast %52 : vector<32x1xf32> to vector<32x256xf32>
    %54 = arith.mulf %53, %1 : vector<32x256xf32>
    %c0_25 = arith.constant 0 : index
    %c0_26 = arith.constant 0 : index
    %55 = vector.load %arg7[%c0_25, %c0_26] : memref<32x256xf32, #tpu.memory_space<vmem>>, vector<32x256xf32>
    tpu.vector_store %arg7[%c0_25, %c0_26], %54 {strides = array<i32>} : memref<32x256xf32, #tpu.memory_space<vmem>>, vector<32x256xf32>,
    %c0_27 = arith.constant 0 : index
    %c0_28 = arith.constant 0 : index
    %56 = vector.load %arg4[%c0_27, %c0_28] : memref<32x32xf32, #tpu.memory_space<vmem>>, vector<32x32xf32>
    %cst_29 = arith.constant 0.000000e+00 : f32
    %57 = vector.broadcast %cst_29 : f32 to vector<32x256xf32>
    %c0_30 = arith.constant 0 : index
    %c0_31 = arith.constant 0 : index
    %58 = vector.load %arg5[%c0_30, %c0_31] : memref<32x256xf32, #tpu.memory_space<vmem>>, vector<1x256xf32>
    %59 = vector.extract_strided_slice %56 {offsets = [0, 0], sizes = [32, 1], strides = [1, 1]} : vector<32x32xf32> to vector<32x1xf32>
    %c2_i32 = arith.constant 2 : i32
    %60 = tpu.dynamic_rotate %54 by %c2_i32 dim 1 : vector<32x256xf32>, i32 -> vector<32x256xf32>
    %61 = vector.broadcast %58 : vector<1x256xf32> to vector<32x256xf32>
    %62 = arith.mulf %60, %61 : vector<32x256xf32>
    %63 = vector.broadcast %59 : vector<32x1xf32> to vector<32x256xf32>
    %64 = arith.mulf %63, %62 : vector<32x256xf32>
    %65 = arith.addf %57, %64 : vector<32x256xf32>
    %c1_32 = arith.constant 1 : index
    %c0_33 = arith.constant 0 : index
    %66 = vector.load %arg5[%c1_32, %c0_33] : memref<32x256xf32, #tpu.memory_space<vmem>>, vector<1x256xf32>
    %67 = vector.extract_strided_slice %56 {offsets = [0, 1], sizes = [32, 1], strides = [1, 1]} : vector<32x32xf32> to vector<32x1xf32>
    %c1_i32 = arith.constant 1 : i32
    %68 = tpu.dynamic_rotate %54 by %c1_i32 dim 1 : vector<32x256xf32>, i32 -> vector<32x256xf32>
    %69 = vector.broadcast %66 : vector<1x256xf32> to vector<32x256xf32>
    %70 = arith.mulf %68, %69 : vector<32x256xf32>
    %71 = vector.broadcast %67 : vector<32x1xf32> to vector<32x256xf32>
    %72 = arith.mulf %71, %70 : vector<32x256xf32>
    %73 = arith.addf %65, %72 : vector<32x256xf32>
    %c2_34 = arith.constant 2 : index
    %c0_35 = arith.constant 0 : index
    %74 = vector.load %arg5[%c2_34, %c0_35] : memref<32x256xf32, #tpu.memory_space<vmem>>, vector<1x256xf32>
    %75 = vector.extract_strided_slice %56 {offsets = [0, 2], sizes = [32, 1], strides = [1, 1]} : vector<32x32xf32> to vector<32x1xf32>
    %76 = vector.broadcast %74 : vector<1x256xf32> to vector<32x256xf32>
    %77 = arith.mulf %54, %76 : vector<32x256xf32>
    %78 = vector.broadcast %75 : vector<32x1xf32> to vector<32x256xf32>
    %79 = arith.mulf %78, %77 : vector<32x256xf32>
    %80 = arith.addf %73, %79 : vector<32x256xf32>
    %c3_36 = arith.constant 3 : index
    %c0_37 = arith.constant 0 : index
    %81 = vector.load %arg5[%c3_36, %c0_37] : memref<32x256xf32, #tpu.memory_space<vmem>>, vector<1x256xf32>
    %82 = vector.extract_strided_slice %56 {offsets = [0, 3], sizes = [32, 1], strides = [1, 1]} : vector<32x32xf32> to vector<32x1xf32>
    %c255_i32 = arith.constant 255 : i32
    %83 = tpu.dynamic_rotate %54 by %c255_i32 dim 1 : vector<32x256xf32>, i32 -> vector<32x256xf32>
    %84 = vector.broadcast %81 : vector<1x256xf32> to vector<32x256xf32>
    %85 = arith.mulf %83, %84 : vector<32x256xf32>
    %86 = vector.broadcast %82 : vector<32x1xf32> to vector<32x256xf32>
    %87 = arith.mulf %86, %85 : vector<32x256xf32>
    %88 = arith.addf %80, %87 : vector<32x256xf32>
    %c4_38 = arith.constant 4 : index
    %c0_39 = arith.constant 0 : index
    %89 = vector.load %arg5[%c4_38, %c0_39] : memref<32x256xf32, #tpu.memory_space<vmem>>, vector<1x256xf32>
    %90 = vector.extract_strided_slice %56 {offsets = [0, 4], sizes = [32, 1], strides = [1, 1]} : vector<32x32xf32> to vector<32x1xf32>
    %c254_i32 = arith.constant 254 : i32
    %91 = tpu.dynamic_rotate %54 by %c254_i32 dim 1 : vector<32x256xf32>, i32 -> vector<32x256xf32>
    %92 = vector.broadcast %89 : vector<1x256xf32> to vector<32x256xf32>
    %93 = arith.mulf %91, %92 : vector<32x256xf32>
    %94 = vector.broadcast %90 : vector<32x1xf32> to vector<32x256xf32>
    %95 = arith.mulf %94, %93 : vector<32x256xf32>
    %96 = arith.addf %88, %95 : vector<32x256xf32>
    %c0_40 = arith.constant 0 : index
    %c5 = arith.constant 5 : index
    %97 = vector.load %arg3[%c0_40, %c5] : memref<32x10xf32, #tpu.memory_space<vmem>>, vector<32x1xf32>
    %98 = vector.broadcast %97 : vector<32x1xf32> to vector<32x256xf32>
    %99 = arith.addf %96, %98 : vector<32x256xf32>
    %cst_41 = arith.constant 0.000000e+00 : f32
    %100 = vector.broadcast %cst_41 : f32 to vector<32x256xf32>
    %c5_42 = arith.constant 5 : index
    %c0_43 = arith.constant 0 : index
    %101 = vector.load %arg5[%c5_42, %c0_43] : memref<32x256xf32, #tpu.memory_space<vmem>>, vector<1x256xf32>
    %102 = vector.extract_strided_slice %56 {offsets = [0, 5], sizes = [32, 1], strides = [1, 1]} : vector<32x32xf32> to vector<32x1xf32>
    %c32_i32 = arith.constant 32 : i32
    %103 = tpu.dynamic_rotate %99 by %c32_i32 dim 1 : vector<32x256xf32>, i32 -> vector<32x256xf32>
    %104 = vector.broadcast %101 : vector<1x256xf32> to vector<32x256xf32>
    %105 = arith.mulf %103, %104 : vector<32x256xf32>
    %106 = vector.broadcast %102 : vector<32x1xf32> to vector<32x256xf32>
    %107 = arith.mulf %106, %105 : vector<32x256xf32>
    %108 = arith.addf %100, %107 : vector<32x256xf32>
    %c6 = arith.constant 6 : index
    %c0_44 = arith.constant 0 : index
    %109 = vector.load %arg5[%c6, %c0_44] : memref<32x256xf32, #tpu.memory_space<vmem>>, vector<1x256xf32>
    %110 = vector.extract_strided_slice %56 {offsets = [0, 6], sizes = [32, 1], strides = [1, 1]} : vector<32x32xf32> to vector<32x1xf32>
    %c16_i32 = arith.constant 16 : i32
    %111 = tpu.dynamic_rotate %99 by %c16_i32 dim 1 : vector<32x256xf32>, i32 -> vector<32x256xf32>
    %112 = vector.broadcast %109 : vector<1x256xf32> to vector<32x256xf32>
    %113 = arith.mulf %111, %112 : vector<32x256xf32>
    %114 = vector.broadcast %110 : vector<32x1xf32> to vector<32x256xf32>
    %115 = arith.mulf %114, %113 : vector<32x256xf32>
    %116 = arith.addf %108, %115 : vector<32x256xf32>
    %c7 = arith.constant 7 : index
    %c0_45 = arith.constant 0 : index
    %117 = vector.load %arg5[%c7, %c0_45] : memref<32x256xf32, #tpu.memory_space<vmem>>, vector<1x256xf32>
    %118 = vector.extract_strided_slice %56 {offsets = [0, 7], sizes = [32, 1], strides = [1, 1]} : vector<32x32xf32> to vector<32x1xf32>
    %119 = vector.broadcast %117 : vector<1x256xf32> to vector<32x256xf32>
    %120 = arith.mulf %99, %119 : vector<32x256xf32>
    %121 = vector.broadcast %118 : vector<32x1xf32> to vector<32x256xf32>
    %122 = arith.mulf %121, %120 : vector<32x256xf32>
    %123 = arith.addf %116, %122 : vector<32x256xf32>
    %c8 = arith.constant 8 : index
    %c0_46 = arith.constant 0 : index
    %124 = vector.load %arg5[%c8, %c0_46] : memref<32x256xf32, #tpu.memory_space<vmem>>, vector<1x256xf32>
    %125 = vector.extract_strided_slice %56 {offsets = [0, 8], sizes = [32, 1], strides = [1, 1]} : vector<32x32xf32> to vector<32x1xf32>
    %c240_i32 = arith.constant 240 : i32
    %126 = tpu.dynamic_rotate %99 by %c240_i32 dim 1 : vector<32x256xf32>, i32 -> vector<32x256xf32>
    %127 = vector.broadcast %124 : vector<1x256xf32> to vector<32x256xf32>
    %128 = arith.mulf %126, %127 : vector<32x256xf32>
    %129 = vector.broadcast %125 : vector<32x1xf32> to vector<32x256xf32>
    %130 = arith.mulf %129, %128 : vector<32x256xf32>
    %131 = arith.addf %123, %130 : vector<32x256xf32>
    %c9 = arith.constant 9 : index
    %c0_47 = arith.constant 0 : index
    %132 = vector.load %arg5[%c9, %c0_47] : memref<32x256xf32, #tpu.memory_space<vmem>>, vector<1x256xf32>
    %133 = vector.extract_strided_slice %56 {offsets = [0, 9], sizes = [32, 1], strides = [1, 1]} : vector<32x32xf32> to vector<32x1xf32>
    %c224_i32 = arith.constant 224 : i32
    %134 = tpu.dynamic_rotate %99 by %c224_i32 dim 1 : vector<32x256xf32>, i32 -> vector<32x256xf32>
    %135 = vector.broadcast %132 : vector<1x256xf32> to vector<32x256xf32>
    %136 = arith.mulf %134, %135 : vector<32x256xf32>
    %137 = vector.broadcast %133 : vector<32x1xf32> to vector<32x256xf32>
    %138 = arith.mulf %137, %136 : vector<32x256xf32>
    %139 = arith.addf %131, %138 : vector<32x256xf32>
    %c0_48 = arith.constant 0 : index
    %c6_49 = arith.constant 6 : index
    %140 = vector.load %arg3[%c0_48, %c6_49] : memref<32x10xf32, #tpu.memory_space<vmem>>, vector<32x1xf32>
    %141 = vector.broadcast %140 : vector<32x1xf32> to vector<32x256xf32>
    %142 = arith.addf %139, %141 : vector<32x256xf32>
    %cst_50 = arith.constant 0.000000e+00 : f32
    %143 = vector.broadcast %cst_50 : f32 to vector<32x256xf32>
    %c10 = arith.constant 10 : index
    %c0_51 = arith.constant 0 : index
    %144 = vector.load %arg5[%c10, %c0_51] : memref<32x256xf32, #tpu.memory_space<vmem>>, vector<1x256xf32>
    %145 = vector.extract_strided_slice %56 {offsets = [0, 10], sizes = [32, 1], strides = [1, 1]} : vector<32x32xf32> to vector<32x1xf32>
    %c15_i32 = arith.constant 15 : i32
    %146 = tpu.dynamic_rotate %142 by %c15_i32 dim 1 : vector<32x256xf32>, i32 -> vector<32x256xf32>
    %147 = vector.broadcast %144 : vector<1x256xf32> to vector<32x256xf32>
    %148 = arith.mulf %146, %147 : vector<32x256xf32>
    %149 = vector.broadcast %145 : vector<32x1xf32> to vector<32x256xf32>
    %150 = arith.mulf %149, %148 : vector<32x256xf32>
    %151 = arith.addf %143, %150 : vector<32x256xf32>
    %c11 = arith.constant 11 : index
    %c0_52 = arith.constant 0 : index
    %152 = vector.load %arg5[%c11, %c0_52] : memref<32x256xf32, #tpu.memory_space<vmem>>, vector<1x256xf32>
    %153 = vector.extract_strided_slice %56 {offsets = [0, 11], sizes = [32, 1], strides = [1, 1]} : vector<32x32xf32> to vector<32x1xf32>
    %c12_i32 = arith.constant 12 : i32
    %154 = tpu.dynamic_rotate %142 by %c12_i32 dim 1 : vector<32x256xf32>, i32 -> vector<32x256xf32>
    %155 = vector.broadcast %152 : vector<1x256xf32> to vector<32x256xf32>
    %156 = arith.mulf %154, %155 : vector<32x256xf32>
    %157 = vector.broadcast %153 : vector<32x1xf32> to vector<32x256xf32>
    %158 = arith.mulf %157, %156 : vector<32x256xf32>
    %159 = arith.addf %151, %158 : vector<32x256xf32>
    %c12 = arith.constant 12 : index
    %c0_53 = arith.constant 0 : index
    %160 = vector.load %arg5[%c12, %c0_53] : memref<32x256xf32, #tpu.memory_space<vmem>>, vector<1x256xf32>
    %161 = vector.extract_strided_slice %56 {offsets = [0, 12], sizes = [32, 1], strides = [1, 1]} : vector<32x32xf32> to vector<32x1xf32>
    %c9_i32 = arith.constant 9 : i32
    %162 = tpu.dynamic_rotate %142 by %c9_i32 dim 1 : vector<32x256xf32>, i32 -> vector<32x256xf32>
    %163 = vector.broadcast %160 : vector<1x256xf32> to vector<32x256xf32>
    %164 = arith.mulf %162, %163 : vector<32x256xf32>
    %165 = vector.broadcast %161 : vector<32x1xf32> to vector<32x256xf32>
    %166 = arith.mulf %165, %164 : vector<32x256xf32>
    %167 = arith.addf %159, %166 : vector<32x256xf32>
    %c13 = arith.constant 13 : index
    %c0_54 = arith.constant 0 : index
    %168 = vector.load %arg5[%c13, %c0_54] : memref<32x256xf32, #tpu.memory_space<vmem>>, vector<1x256xf32>
    %169 = vector.extract_strided_slice %56 {offsets = [0, 13], sizes = [32, 1], strides = [1, 1]} : vector<32x32xf32> to vector<32x1xf32>
    %c6_i32 = arith.constant 6 : i32
    %170 = tpu.dynamic_rotate %142 by %c6_i32 dim 1 : vector<32x256xf32>, i32 -> vector<32x256xf32>
    %171 = vector.broadcast %168 : vector<1x256xf32> to vector<32x256xf32>
    %172 = arith.mulf %170, %171 : vector<32x256xf32>
    %173 = vector.broadcast %169 : vector<32x1xf32> to vector<32x256xf32>
    %174 = arith.mulf %173, %172 : vector<32x256xf32>
    %175 = arith.addf %167, %174 : vector<32x256xf32>
    %c14 = arith.constant 14 : index
    %c0_55 = arith.constant 0 : index
    %176 = vector.load %arg5[%c14, %c0_55] : memref<32x256xf32, #tpu.memory_space<vmem>>, vector<1x256xf32>
    %177 = vector.extract_strided_slice %56 {offsets = [0, 14], sizes = [32, 1], strides = [1, 1]} : vector<32x32xf32> to vector<32x1xf32>
    %c3_i32 = arith.constant 3 : i32
    %178 = tpu.dynamic_rotate %142 by %c3_i32 dim 1 : vector<32x256xf32>, i32 -> vector<32x256xf32>
    %179 = vector.broadcast %176 : vector<1x256xf32> to vector<32x256xf32>
    %180 = arith.mulf %178, %179 : vector<32x256xf32>
    %181 = vector.broadcast %177 : vector<32x1xf32> to vector<32x256xf32>
    %182 = arith.mulf %181, %180 : vector<32x256xf32>
    %183 = arith.addf %175, %182 : vector<32x256xf32>
    %c15 = arith.constant 15 : index
    %c0_56 = arith.constant 0 : index
    %184 = vector.load %arg5[%c15, %c0_56] : memref<32x256xf32, #tpu.memory_space<vmem>>, vector<1x256xf32>
    %185 = vector.extract_strided_slice %56 {offsets = [0, 15], sizes = [32, 1], strides = [1, 1]} : vector<32x32xf32> to vector<32x1xf32>
    %186 = vector.broadcast %184 : vector<1x256xf32> to vector<32x256xf32>
    %187 = arith.mulf %142, %186 : vector<32x256xf32>
    %188 = vector.broadcast %185 : vector<32x1xf32> to vector<32x256xf32>
    %189 = arith.mulf %188, %187 : vector<32x256xf32>
    %190 = arith.addf %183, %189 : vector<32x256xf32>
    %c16_57 = arith.constant 16 : index
    %c0_58 = arith.constant 0 : index
    %191 = vector.load %arg5[%c16_57, %c0_58] : memref<32x256xf32, #tpu.memory_space<vmem>>, vector<1x256xf32>
    %192 = vector.extract_strided_slice %56 {offsets = [0, 16], sizes = [32, 1], strides = [1, 1]} : vector<32x32xf32> to vector<32x1xf32>
    %c253_i32 = arith.constant 253 : i32
    %193 = tpu.dynamic_rotate %142 by %c253_i32 dim 1 : vector<32x256xf32>, i32 -> vector<32x256xf32>
    %194 = vector.broadcast %191 : vector<1x256xf32> to vector<32x256xf32>
    %195 = arith.mulf %193, %194 : vector<32x256xf32>
    %196 = vector.broadcast %192 : vector<32x1xf32> to vector<32x256xf32>
    %197 = arith.mulf %196, %195 : vector<32x256xf32>
    %198 = arith.addf %190, %197 : vector<32x256xf32>
    %c17 = arith.constant 17 : index
    %c0_59 = arith.constant 0 : index
    %199 = vector.load %arg5[%c17, %c0_59] : memref<32x256xf32, #tpu.memory_space<vmem>>, vector<1x256xf32>
    %200 = vector.extract_strided_slice %56 {offsets = [0, 17], sizes = [32, 1], strides = [1, 1]} : vector<32x32xf32> to vector<32x1xf32>
    %c250_i32 = arith.constant 250 : i32
    %201 = tpu.dynamic_rotate %142 by %c250_i32 dim 1 : vector<32x256xf32>, i32 -> vector<32x256xf32>
    %202 = vector.broadcast %199 : vector<1x256xf32> to vector<32x256xf32>
    %203 = arith.mulf %201, %202 : vector<32x256xf32>
    %204 = vector.broadcast %200 : vector<32x1xf32> to vector<32x256xf32>
    %205 = arith.mulf %204, %203 : vector<32x256xf32>
    %206 = arith.addf %198, %205 : vector<32x256xf32>
    %c18 = arith.constant 18 : index
    %c0_60 = arith.constant 0 : index
    %207 = vector.load %arg5[%c18, %c0_60] : memref<32x256xf32, #tpu.memory_space<vmem>>, vector<1x256xf32>
    %208 = vector.extract_strided_slice %56 {offsets = [0, 18], sizes = [32, 1], strides = [1, 1]} : vector<32x32xf32> to vector<32x1xf32>
    %c247_i32 = arith.constant 247 : i32
    %209 = tpu.dynamic_rotate %142 by %c247_i32 dim 1 : vector<32x256xf32>, i32 -> vector<32x256xf32>
    %210 = vector.broadcast %207 : vector<1x256xf32> to vector<32x256xf32>
    %211 = arith.mulf %209, %210 : vector<32x256xf32>
    %212 = vector.broadcast %208 : vector<32x1xf32> to vector<32x256xf32>
    %213 = arith.mulf %212, %211 : vector<32x256xf32>
    %214 = arith.addf %206, %213 : vector<32x256xf32>
    %c19 = arith.constant 19 : index
    %c0_61 = arith.constant 0 : index
    %215 = vector.load %arg5[%c19, %c0_61] : memref<32x256xf32, #tpu.memory_space<vmem>>, vector<1x256xf32>
    %216 = vector.extract_strided_slice %56 {offsets = [0, 19], sizes = [32, 1], strides = [1, 1]} : vector<32x32xf32> to vector<32x1xf32>
    %c244_i32 = arith.constant 244 : i32
    %217 = tpu.dynamic_rotate %142 by %c244_i32 dim 1 : vector<32x256xf32>, i32 -> vector<32x256xf32>
    %218 = vector.broadcast %215 : vector<1x256xf32> to vector<32x256xf32>
    %219 = arith.mulf %217, %218 : vector<32x256xf32>
    %220 = vector.broadcast %216 : vector<32x1xf32> to vector<32x256xf32>
    %221 = arith.mulf %220, %219 : vector<32x256xf32>
    %222 = arith.addf %214, %221 : vector<32x256xf32>
    %c20 = arith.constant 20 : index
    %c0_62 = arith.constant 0 : index
    %223 = vector.load %arg5[%c20, %c0_62] : memref<32x256xf32, #tpu.memory_space<vmem>>, vector<1x256xf32>
    %224 = vector.extract_strided_slice %56 {offsets = [0, 20], sizes = [32, 1], strides = [1, 1]} : vector<32x32xf32> to vector<32x1xf32>
    %c241_i32 = arith.constant 241 : i32
    %225 = tpu.dynamic_rotate %142 by %c241_i32 dim 1 : vector<32x256xf32>, i32 -> vector<32x256xf32>
    %226 = vector.broadcast %223 : vector<1x256xf32> to vector<32x256xf32>
    %227 = arith.mulf %225, %226 : vector<32x256xf32>
    %228 = vector.broadcast %224 : vector<32x1xf32> to vector<32x256xf32>
    %229 = arith.mulf %228, %227 : vector<32x256xf32>
    %230 = arith.addf %222, %229 : vector<32x256xf32>
    %c0_63 = arith.constant 0 : index
    %c7_64 = arith.constant 7 : index
    %231 = vector.load %arg3[%c0_63, %c7_64] : memref<32x10xf32, #tpu.memory_space<vmem>>, vector<32x1xf32>
    %232 = vector.broadcast %231 : vector<32x1xf32> to vector<32x256xf32>
    %233 = arith.addf %230, %232 : vector<32x256xf32>
    %cst_65 = arith.constant 0.000000e+00 : f32
    %234 = vector.broadcast %cst_65 : f32 to vector<32x256xf32>
    %c21 = arith.constant 21 : index
    %c0_66 = arith.constant 0 : index
    %235 = vector.load %arg5[%c21, %c0_66] : memref<32x256xf32, #tpu.memory_space<vmem>>, vector<1x256xf32>
    %236 = vector.extract_strided_slice %56 {offsets = [0, 21], sizes = [32, 1], strides = [1, 1]} : vector<32x32xf32> to vector<32x1xf32>
    %c240_i32_67 = arith.constant 240 : i32
    %237 = tpu.dynamic_rotate %233 by %c240_i32_67 dim 1 : vector<32x256xf32>, i32 -> vector<32x256xf32>
    %238 = vector.broadcast %235 : vector<1x256xf32> to vector<32x256xf32>
    %239 = arith.mulf %237, %238 : vector<32x256xf32>
    %240 = vector.broadcast %236 : vector<32x1xf32> to vector<32x256xf32>
    %241 = arith.mulf %240, %239 : vector<32x256xf32>
    %242 = arith.addf %234, %241 : vector<32x256xf32>
    %c22 = arith.constant 22 : index
    %c0_68 = arith.constant 0 : index
    %243 = vector.load %arg5[%c22, %c0_68] : memref<32x256xf32, #tpu.memory_space<vmem>>, vector<1x256xf32>
    %244 = vector.extract_strided_slice %56 {offsets = [0, 22], sizes = [32, 1], strides = [1, 1]} : vector<32x32xf32> to vector<32x1xf32>
    %c192_i32 = arith.constant 192 : i32
    %245 = tpu.dynamic_rotate %233 by %c192_i32 dim 1 : vector<32x256xf32>, i32 -> vector<32x256xf32>
    %246 = vector.broadcast %243 : vector<1x256xf32> to vector<32x256xf32>
    %247 = arith.mulf %245, %246 : vector<32x256xf32>
    %248 = vector.broadcast %244 : vector<32x1xf32> to vector<32x256xf32>
    %249 = arith.mulf %248, %247 : vector<32x256xf32>
    %250 = arith.addf %242, %249 : vector<32x256xf32>
    %c23 = arith.constant 23 : index
    %c0_69 = arith.constant 0 : index
    %251 = vector.load %arg5[%c23, %c0_69] : memref<32x256xf32, #tpu.memory_space<vmem>>, vector<1x256xf32>
    %252 = vector.extract_strided_slice %56 {offsets = [0, 23], sizes = [32, 1], strides = [1, 1]} : vector<32x32xf32> to vector<32x1xf32>
    %c144_i32 = arith.constant 144 : i32
    %253 = tpu.dynamic_rotate %233 by %c144_i32 dim 1 : vector<32x256xf32>, i32 -> vector<32x256xf32>
    %254 = vector.broadcast %251 : vector<1x256xf32> to vector<32x256xf32>
    %255 = arith.mulf %253, %254 : vector<32x256xf32>
    %256 = vector.broadcast %252 : vector<32x1xf32> to vector<32x256xf32>
    %257 = arith.mulf %256, %255 : vector<32x256xf32>
    %258 = arith.addf %250, %257 : vector<32x256xf32>
    %c24_70 = arith.constant 24 : index
    %c0_71 = arith.constant 0 : index
    %259 = vector.load %arg5[%c24_70, %c0_71] : memref<32x256xf32, #tpu.memory_space<vmem>>, vector<1x256xf32>
    %260 = vector.extract_strided_slice %56 {offsets = [0, 24], sizes = [32, 1], strides = [1, 1]} : vector<32x32xf32> to vector<32x1xf32>
    %c96_i32 = arith.constant 96 : i32
    %261 = tpu.dynamic_rotate %233 by %c96_i32 dim 1 : vector<32x256xf32>, i32 -> vector<32x256xf32>
    %262 = vector.broadcast %259 : vector<1x256xf32> to vector<32x256xf32>
    %263 = arith.mulf %261, %262 : vector<32x256xf32>
    %264 = vector.broadcast %260 : vector<32x1xf32> to vector<32x256xf32>
    %265 = arith.mulf %264, %263 : vector<32x256xf32>
    %266 = arith.addf %258, %265 : vector<32x256xf32>
    %c25 = arith.constant 25 : index
    %c0_72 = arith.constant 0 : index
    %267 = vector.load %arg5[%c25, %c0_72] : memref<32x256xf32, #tpu.memory_space<vmem>>, vector<1x256xf32>
    %268 = vector.extract_strided_slice %56 {offsets = [0, 25], sizes = [32, 1], strides = [1, 1]} : vector<32x32xf32> to vector<32x1xf32>
    %c48_i32 = arith.constant 48 : i32
    %269 = tpu.dynamic_rotate %233 by %c48_i32 dim 1 : vector<32x256xf32>, i32 -> vector<32x256xf32>
    %270 = vector.broadcast %267 : vector<1x256xf32> to vector<32x256xf32>
    %271 = arith.mulf %269, %270 : vector<32x256xf32>
    %272 = vector.broadcast %268 : vector<32x1xf32> to vector<32x256xf32>
    %273 = arith.mulf %272, %271 : vector<32x256xf32>
    %274 = arith.addf %266, %273 : vector<32x256xf32>
    %c26 = arith.constant 26 : index
    %c0_73 = arith.constant 0 : index
    %275 = vector.load %arg5[%c26, %c0_73] : memref<32x256xf32, #tpu.memory_space<vmem>>, vector<1x256xf32>
    %276 = vector.extract_strided_slice %56 {offsets = [0, 26], sizes = [32, 1], strides = [1, 1]} : vector<32x32xf32> to vector<32x1xf32>
    %277 = vector.broadcast %275 : vector<1x256xf32> to vector<32x256xf32>
    %278 = arith.mulf %233, %277 : vector<32x256xf32>
    %279 = vector.broadcast %276 : vector<32x1xf32> to vector<32x256xf32>
    %280 = arith.mulf %279, %278 : vector<32x256xf32>
    %281 = arith.addf %274, %280 : vector<32x256xf32>
    %c27 = arith.constant 27 : index
    %c0_74 = arith.constant 0 : index
    %282 = vector.load %arg5[%c27, %c0_74] : memref<32x256xf32, #tpu.memory_space<vmem>>, vector<1x256xf32>
    %283 = vector.extract_strided_slice %56 {offsets = [0, 27], sizes = [32, 1], strides = [1, 1]} : vector<32x32xf32> to vector<32x1xf32>
    %c208_i32 = arith.constant 208 : i32
    %284 = tpu.dynamic_rotate %233 by %c208_i32 dim 1 : vector<32x256xf32>, i32 -> vector<32x256xf32>
    %285 = vector.broadcast %282 : vector<1x256xf32> to vector<32x256xf32>
    %286 = arith.mulf %284, %285 : vector<32x256xf32>
    %287 = vector.broadcast %283 : vector<32x1xf32> to vector<32x256xf32>
    %288 = arith.mulf %287, %286 : vector<32x256xf32>
    %289 = arith.addf %281, %288 : vector<32x256xf32>
    %c28 = arith.constant 28 : index
    %c0_75 = arith.constant 0 : index
    %290 = vector.load %arg5[%c28, %c0_75] : memref<32x256xf32, #tpu.memory_space<vmem>>, vector<1x256xf32>
    %291 = vector.extract_strided_slice %56 {offsets = [0, 28], sizes = [32, 1], strides = [1, 1]} : vector<32x32xf32> to vector<32x1xf32>
    %c160_i32 = arith.constant 160 : i32
    %292 = tpu.dynamic_rotate %233 by %c160_i32 dim 1 : vector<32x256xf32>, i32 -> vector<32x256xf32>
    %293 = vector.broadcast %290 : vector<1x256xf32> to vector<32x256xf32>
    %294 = arith.mulf %292, %293 : vector<32x256xf32>
    %295 = vector.broadcast %291 : vector<32x1xf32> to vector<32x256xf32>
    %296 = arith.mulf %295, %294 : vector<32x256xf32>
    %297 = arith.addf %289, %296 : vector<32x256xf32>
    %c29 = arith.constant 29 : index
    %c0_76 = arith.constant 0 : index
    %298 = vector.load %arg5[%c29, %c0_76] : memref<32x256xf32, #tpu.memory_space<vmem>>, vector<1x256xf32>
    %299 = vector.extract_strided_slice %56 {offsets = [0, 29], sizes = [32, 1], strides = [1, 1]} : vector<32x32xf32> to vector<32x1xf32>
    %c112_i32 = arith.constant 112 : i32
    %300 = tpu.dynamic_rotate %233 by %c112_i32 dim 1 : vector<32x256xf32>, i32 -> vector<32x256xf32>
    %301 = vector.broadcast %298 : vector<1x256xf32> to vector<32x256xf32>
    %302 = arith.mulf %300, %301 : vector<32x256xf32>
    %303 = vector.broadcast %299 : vector<32x1xf32> to vector<32x256xf32>
    %304 = arith.mulf %303, %302 : vector<32x256xf32>
    %305 = arith.addf %297, %304 : vector<32x256xf32>
    %c30 = arith.constant 30 : index
    %c0_77 = arith.constant 0 : index
    %306 = vector.load %arg5[%c30, %c0_77] : memref<32x256xf32, #tpu.memory_space<vmem>>, vector<1x256xf32>
    %307 = vector.extract_strided_slice %56 {offsets = [0, 30], sizes = [32, 1], strides = [1, 1]} : vector<32x32xf32> to vector<32x1xf32>
    %c64_i32 = arith.constant 64 : i32
    %308 = tpu.dynamic_rotate %233 by %c64_i32 dim 1 : vector<32x256xf32>, i32 -> vector<32x256xf32>
    %309 = vector.broadcast %306 : vector<1x256xf32> to vector<32x256xf32>
    %310 = arith.mulf %308, %309 : vector<32x256xf32>
    %311 = vector.broadcast %307 : vector<32x1xf32> to vector<32x256xf32>
    %312 = arith.mulf %311, %310 : vector<32x256xf32>
    %313 = arith.addf %305, %312 : vector<32x256xf32>
    %c31 = arith.constant 31 : index
    %c0_78 = arith.constant 0 : index
    %314 = vector.load %arg5[%c31, %c0_78] : memref<32x256xf32, #tpu.memory_space<vmem>>, vector<1x256xf32>
    %315 = vector.extract_strided_slice %56 {offsets = [0, 31], sizes = [32, 1], strides = [1, 1]} : vector<32x32xf32> to vector<32x1xf32>
    %c16_i32_79 = arith.constant 16 : i32
    %316 = tpu.dynamic_rotate %233 by %c16_i32_79 dim 1 : vector<32x256xf32>, i32 -> vector<32x256xf32>
    %317 = vector.broadcast %314 : vector<1x256xf32> to vector<32x256xf32>
    %318 = arith.mulf %316, %317 : vector<32x256xf32>
    %319 = vector.broadcast %315 : vector<32x1xf32> to vector<32x256xf32>
    %320 = arith.mulf %319, %318 : vector<32x256xf32>
    %321 = arith.addf %313, %320 : vector<32x256xf32>
    %c0_80 = arith.constant 0 : index
    %c8_81 = arith.constant 8 : index
    %322 = vector.load %arg3[%c0_80, %c8_81] : memref<32x10xf32, #tpu.memory_space<vmem>>, vector<32x1xf32>
    %323 = vector.broadcast %322 : vector<32x1xf32> to vector<32x256xf32>
    %324 = arith.addf %321, %323 : vector<32x256xf32>
    %c104 = arith.constant 104 : index
    %c0_82 = arith.constant 0 : index
    %325 = vector.load %arg2[%c104, %c0_82] : memref<136x32xf32, #tpu.memory_space<vmem>>, vector<32x32xf32>
    %cst_83 = arith.constant dense<0.000000e+00> : vector<32x256xf32>
    %326 = tpu.matmul %325, %324, %cst_83 {dimension_numbers = #tpu.dot_dimension_numbers<[1], [0], [0], [1], [0, 0, 1, 1], [], []>} : vector<32x32xf32>, vector<32x256xf32>, vector<32x256xf32> -> vector<32x256xf32>
    %c0_84 = arith.constant 0 : index
    %c9_85 = arith.constant 9 : index
    %327 = vector.load %arg3[%c0_84, %c9_85] : memref<32x10xf32, #tpu.memory_space<vmem>>, vector<32x1xf32>
    %328 = vector.broadcast %327 : vector<32x1xf32> to vector<32x256xf32>
    %329 = arith.addf %326, %328 : vector<32x256xf32>
    %c0_86 = arith.constant 0 : index
    %c0_87 = arith.constant 0 : index
    %330 = vector.load %arg7[%c0_86, %c0_87] : memref<32x256xf32, #tpu.memory_space<vmem>>, vector<32x256xf32>
    %331 = arith.mulf %330, %329 : vector<32x256xf32>
    %c0_88 = arith.constant 0 : index
    %c0_89 = arith.constant 0 : index
    %c0_90 = arith.constant 0 : index
    %332 = vector.load %arg6[%c0_88, %c0_89, %c0_90] : memref<1x32x256xf32, #tpu.memory_space<vmem>>, vector<1x32x256xf32>
    %333 = vector.shape_cast %332 : vector<1x32x256xf32> to vector<32x256xf32>
    %334 = vector.shape_cast %331 : vector<32x256xf32> to vector<1x32x256xf32>
    tpu.vector_store %arg6[%c0_88, %c0_89, %c0_90], %334 {strides = array<i32>} : memref<1x32x256xf32, #tpu.memory_space<vmem>>, vector<1x32x256xf32>,
    return
  }
  func.func @transform_0(%arg0: i32) -> (i32, i32, i32) {
    %c0_i32 = arith.constant 0 : i32
    %c0_i32_0 = arith.constant 0 : i32
    %c0_i32_1 = arith.constant 0 : i32
    return %arg0, %c0_i32, %c0_i32_0 : i32, i32, i32
  }
  func.func @transform_1(%arg0: i32) -> (i32, i32) {
    %c0_i32 = arith.constant 0 : i32
    %c0_i32_0 = arith.constant 0 : i32
    %c0_i32_1 = arith.constant 0 : i32
    return %c0_i32, %c0_i32_0 : i32, i32
  }
  func.func @transform_2(%arg0: i32) -> (i32, i32) {
    %c0_i32 = arith.constant 0 : i32
    %c0_i32_0 = arith.constant 0 : i32
    %c0_i32_1 = arith.constant 0 : i32
    return %c0_i32, %c0_i32_0 : i32, i32
  }
  func.func @transform_3(%arg0: i32) -> (i32, i32) {
    %c0_i32 = arith.constant 0 : i32
    %c0_i32_0 = arith.constant 0 : i32
    %c0_i32_1 = arith.constant 0 : i32
    return %c0_i32, %c0_i32_0 : i32, i32
  }
  func.func @transform_4(%arg0: i32) -> (i32, i32) {
    %c0_i32 = arith.constant 0 : i32
    %c0_i32_0 = arith.constant 0 : i32
    %c0_i32_1 = arith.constant 0 : i32
    return %c0_i32, %c0_i32_0 : i32, i32
  }
  func.func @transform_5(%arg0: i32) -> (i32, i32, i32) {
    %c0_i32 = arith.constant 0 : i32
    %c0_i32_0 = arith.constant 0 : i32
    %c0_i32_1 = arith.constant 0 : i32
    return %arg0, %c0_i32, %c0_i32_0 : i32, i32, i32
  }
}

</mosaic_0001>

<llo_original>
// kernel: tpu_custom_call.1
$region0: #{tpu_custom_call.1}
  #allocation0 [shape = 'u32[]', space=smem, size = 0x4, offset = 0x4, fixed_abs, tag = 'smem constant byte address 0x4 - core index']
  #allocation1 [shape = 'u32[144,128]{1,0:T(1,128)}', space=vmem, size = 0x12000, scoped, tag = 'internal scratch']
  #allocation2 [shape = 'f32[32,256]{1,0:T(8,128)}', space=vmem, size = 0x8000, scoped, tag = 'scratch operand']
  %s0 = inlined_call_operand.vmem [shape: f32[2,32,256], index: 0, kind: input, shape index: {}]
  %s1 = inlined_call_operand.vmem [shape: f32[136,32], index: 1, kind: input, shape index: {}]
  %s2 = inlined_call_operand.vmem [shape: f32[32,10], index: 2, kind: input, shape index: {}]
  %s3 = inlined_call_operand.vmem [shape: f32[32,32], index: 3, kind: input, shape index: {}]
  %s4 = inlined_call_operand.vmem [shape: f32[32,256], index: 4, kind: input, shape index: {}]
  %s5 = inlined_call_operand.hbm [shape: f32[2,32,256], index: 5, kind: output, shape index: {}]
  %s6 = sld [smem:[#allocation0]]
  $region53: #{tpu_custom_call.1} parent=0
    _
  %s8 = ssub.s32 1, %s6
  %s9 = scalar_select 0, %s8, %s6
  $region1: #{tpu_custom_call.1} parent=0
    #allocation3 [shape = 'u8[65536]{0}', space=vmem, size = 0x10000, scoped, tag = 'output window, operand 0']
    #allocation4 [shape = 's32[2]{0}', space=sflag, size = 0x8, scoped, tag = 'scoped memory for tpu_custom_call.1']
    %10 = vsyncpa [#allocation4], 0
    %s11 = scalar_lea.sflag [#allocation4], 1
    %12 = vsyncpa %s11, 0
    loop: start=0, step=1, limit=4
    $region2: #{tpu_custom_call.1} parent=1 // loop_pre_header
      _
    $region3: #{tpu_custom_call.1} parent=1 // loop_header
      %s14 = sphi 0, %s18
      %p15 = scmp.ge.s32.totalorder %s14, 4
      %s24 = sphi 0, %s26
      %s27 = sphi 0, %s24
      %s28 = sphi 0, %s27
      %s44 = sphi 0, %s28
      %s48 = sphi 0, %s48
      %s50 = sphi 0, %s48
      %s51 = sphi 0, %s50
      %s65 = sphi 0, %s51
      %s69 = sphi 0, %s69
      %s71 = sphi 0, %s69
      %s72 = sphi 0, %s71
      %s86 = sphi 0, %s72
      %s90 = sphi 0, %s90
      %s92 = sphi 0, %s90
      %s93 = sphi 0, %s92
      %s107 = sphi 0, %s93
      %s111 = sphi 0, %s111
      %s113 = sphi 0, %s111
      %s114 = sphi 0, %s113
      %s128 = sphi 0, %s114
      %s134 = sphi 0, %s136
      %s137 = sphi 0, %s134
      %s138 = sphi 0, %s137
      %s154 = sphi 0, %s138
    $region4: #{tpu_custom_call.1} parent=1 // loop_header_branch
      %17 = sbr.rel (%p15) target = $region8
    $region5: #{tpu_custom_call.1} parent=1 // loop_body
      %s19 = ssub.s32 %s14, 1
      %s20 = ssub.s32 %s14, 2
      %s21 = sadd.s32 %s14, 1
      %s22 = ssub.s32 %s14, %s21
      %p23 = scmp.eq.s32.totalorder %s22, 0
      %s25 = sadd.s32 %s24, 1
      %s26 = scalar_select %p23, %s24, %s25
      %p29 = pneg %p23
      %p30 = scmp.eq.s32.totalorder %s14, 1
      %p31 = por %p29, %p30
      %p32 = scmp.ne.s32.totalorder %s24, %s27
      %p33 = scmp.eq.s32.totalorder %s14, 0
      %p34 = por %p32, %p33
      %p35 = scmp.ne.s32.totalorder %s24, %s27
      %p36 = scmp.eq.s32.totalorder %s19, 1
      %p37 = por %p35, %p36
      %p38 = scmp.ne.s32.totalorder %s27, %s28
      %p39 = scmp.eq.s32.totalorder %s19, 0
      %p40 = por %p38, %p39
      %p41 = scmp.ne.s32.totalorder %s27, %s28
      %p42 = scmp.eq.s32.totalorder %s20, 1
      %p43 = por %p41, %p42
      %p45 = scmp.ne.s32.totalorder %s28, %s44
      %p46 = scmp.eq.s32.totalorder %s20, 0
      %p47 = por %p45, %p46
      %s49 = sadd.s32 %s48, 1
      %p52 = scmp.eq.s32.totalorder %s14, 1
      %p53 = scmp.ne.s32.totalorder %s48, %s50
      %p54 = scmp.eq.s32.totalorder %s14, 0
      %p55 = por %p53, %p54
      %p56 = scmp.ne.s32.totalorder %s48, %s50
      %p57 = scmp.eq.s32.totalorder %s19, 1
      %p58 = por %p56, %p57
      %p59 = scmp.ne.s32.totalorder %s50, %s51
      %p60 = scmp.eq.s32.totalorder %s19, 0
      %p61 = por %p59, %p60
      %p62 = scmp.ne.s32.totalorder %s50, %s51
      %p63 = scmp.eq.s32.totalorder %s20, 1
      %p64 = por %p62, %p63
      %p66 = scmp.ne.s32.totalorder %s51, %s65
      %p67 = scmp.eq.s32.totalorder %s20, 0
      %p68 = por %p66, %p67
      %s70 = sadd.s32 %s69, 1
      %p73 = scmp.eq.s32.totalorder %s14, 1
      %p74 = scmp.ne.s32.totalorder %s69, %s71
      %p75 = scmp.eq.s32.totalorder %s14, 0
      %p76 = por %p74, %p75
      %p77 = scmp.ne.s32.totalorder %s69, %s71
      %p78 = scmp.eq.s32.totalorder %s19, 1
      %p79 = por %p77, %p78
      %p80 = scmp.ne.s32.totalorder %s71, %s72
      %p81 = scmp.eq.s32.totalorder %s19, 0
      %p82 = por %p80, %p81
      %p83 = scmp.ne.s32.totalorder %s71, %s72
      %p84 = scmp.eq.s32.totalorder %s20, 1
      %p85 = por %p83, %p84
      %p87 = scmp.ne.s32.totalorder %s72, %s86
      %p88 = scmp.eq.s32.totalorder %s20, 0
      %p89 = por %p87, %p88
      %s91 = sadd.s32 %s90, 1
      %p94 = scmp.eq.s32.totalorder %s14, 1
      %p95 = scmp.ne.s32.totalorder %s90, %s92
      %p96 = scmp.eq.s32.totalorder %s14, 0
      %p97 = por %p95, %p96
      %p98 = scmp.ne.s32.totalorder %s90, %s92
      %p99 = scmp.eq.s32.totalorder %s19, 1
      %p100 = por %p98, %p99
      %p101 = scmp.ne.s32.totalorder %s92, %s93
      %p102 = scmp.eq.s32.totalorder %s19, 0
      %p103 = por %p101, %p102
      %p104 = scmp.ne.s32.totalorder %s92, %s93
      %p105 = scmp.eq.s32.totalorder %s20, 1
      %p106 = por %p104, %p105
      %p108 = scmp.ne.s32.totalorder %s93, %s107
      %p109 = scmp.eq.s32.totalorder %s20, 0
      %p110 = por %p108, %p109
      %s112 = sadd.s32 %s111, 1
      %p115 = scmp.eq.s32.totalorder %s14, 1
      %p116 = scmp.ne.s32.totalorder %s111, %s113
      %p117 = scmp.eq.s32.totalorder %s14, 0
      %p118 = por %p116, %p117
      %p119 = scmp.ne.s32.totalorder %s111, %s113
      %p120 = scmp.eq.s32.totalorder %s19, 1
      %p121 = por %p119, %p120
      %p122 = scmp.ne.s32.totalorder %s113, %s114
      %p123 = scmp.eq.s32.totalorder %s19, 0
      %p124 = por %p122, %p123
      %p125 = scmp.ne.s32.totalorder %s113, %s114
      %p126 = scmp.eq.s32.totalorder %s20, 1
      %p127 = por %p125, %p126
      %p129 = scmp.ne.s32.totalorder %s114, %s128
      %p130 = scmp.eq.s32.totalorder %s20, 0
      %p131 = por %p129, %p130
      %s132 = ssub.s32 %s14, %s21
      %p133 = scmp.eq.s32.totalorder %s132, 0
      %s135 = sadd.s32 %s134, 1
      %s136 = scalar_select %p133, %s134, %s135
      %p139 = pneg %p133
      %p140 = scmp.eq.s32.totalorder %s14, 1
      %p141 = por %p139, %p140
      %p142 = scmp.ne.s32.totalorder %s134, %s137
      %p143 = scmp.eq.s32.totalorder %s14, 0
      %p144 = por %p142, %p143
      %p145 = scmp.ne.s32.totalorder %s134, %s137
      %p146 = scmp.eq.s32.totalorder %s19, 1
      %p147 = por %p145, %p146
      %p148 = scmp.ne.s32.totalorder %s137, %s138
      %p149 = scmp.eq.s32.totalorder %s19, 0
      %p150 = por %p148, %p149
      %p151 = scmp.ne.s32.totalorder %s137, %s138
      %p152 = scmp.eq.s32.totalorder %s20, 1
      %p153 = por %p151, %p152
      %p155 = scmp.ne.s32.totalorder %s138, %s154
      %p156 = scmp.eq.s32.totalorder %s20, 0
      %p157 = por %p155, %p156
      %p158 = scmp.le.s32.totalorder 1, %s14
      %p159 = scmp.lt.s32.totalorder %s14, 3
      %p160 = pnand %p158, %p159
      %p161 = pneg %p160
      // Predicated region
      $region9: #{tpu_custom_call.1} parent=5 // pred_check
        _
      $region10: #{tpu_custom_call.1} parent=5 // pred_check_branch
        %163 = sbr.rel (%p160) target = $region12
      $region11: #{tpu_custom_call.1} parent=5 // pred_region
        %s164 = ssub.s32 %s14, 1
        // Predicated region
        $region13: #{tpu_custom_call.1} parent=11 // pred_check
          %p165 = pneg %p61
        $region14: #{tpu_custom_call.1} parent=11 // pred_check_branch
          %167 = sbr.rel (%p165) target = $region16
        $region15: #{tpu_custom_call.1} parent=11 // pred_region
          _
        $region16: #{tpu_custom_call.1} parent=11 // pred_fallthru
          _
        // Predicated region
        $region17: #{tpu_custom_call.1} parent=11 // pred_check
          %p168 = pneg %p82
        $region18: #{tpu_custom_call.1} parent=11 // pred_check_branch
          %170 = sbr.rel (%p168) target = $region20
        $region19: #{tpu_custom_call.1} parent=11 // pred_region
          _
        $region20: #{tpu_custom_call.1} parent=11 // pred_fallthru
          _
        // Predicated region
        $region21: #{tpu_custom_call.1} parent=11 // pred_check
          %p171 = pneg %p103
        $region22: #{tpu_custom_call.1} parent=11 // pred_check_branch
          %173 = sbr.rel (%p171) target = $region24
        $region23: #{tpu_custom_call.1} parent=11 // pred_region
          _
        $region24: #{tpu_custom_call.1} parent=11 // pred_fallthru
          _
        // Predicated region
        $region25: #{tpu_custom_call.1} parent=11 // pred_check
          %p174 = pneg %p124
        $region26: #{tpu_custom_call.1} parent=11 // pred_check_branch
          %176 = sbr.rel (%p174) target = $region28
        $region27: #{tpu_custom_call.1} parent=11 // pred_region
          _
        $region28: #{tpu_custom_call.1} parent=11 // pred_fallthru
          _
      $region12: #{tpu_custom_call.1} parent=5 // pred_fallthru
        _
      %p177 = scmp.lt.s32.totalorder %s14, 2
      // Predicated region
      $region29: #{tpu_custom_call.1} parent=5 // pred_check
        %p178 = pneg %p177
      $region30: #{tpu_custom_call.1} parent=5 // pred_check_branch
        %180 = sbr.rel (%p178) target = $region32
      $region31: #{tpu_custom_call.1} parent=5 // pred_region
        // Predicated region
        $region33: #{tpu_custom_call.1} parent=31 // pred_check
          %p181 = pneg %p34
        $region34: #{tpu_custom_call.1} parent=31 // pred_check_branch
          %183 = sbr.rel (%p181) target = $region36
        $region35: #{tpu_custom_call.1} parent=31 // pred_region
          %p184 = scmp.lt.s32.totalorder %s14, 1
          %s185 = scalar_select %p184, %s14, 1
          %s186 = smul.addr %s185, 8
          %s187 = smul.addr %s186, 8
          %s188 = scalar_lea.vmem %s0, %s187
        $region36: #{tpu_custom_call.1} parent=31 // pred_fallthru
          _
      $region32: #{tpu_custom_call.1} parent=5 // pred_fallthru
        _
      %p189 = scmp.le.s32.totalorder 1, %s14
      %p190 = scmp.lt.s32.totalorder %s14, 3
      %p191 = pnand %p189, %p190
      %p192 = pneg %p191
      // Predicated region
      $region37: #{tpu_custom_call.1} parent=5 // pred_check
        _
      $region38: #{tpu_custom_call.1} parent=5 // pred_check_branch
        %194 = sbr.rel (%p191) target = $region40
      $region39: #{tpu_custom_call.1} parent=5 // pred_region
        %s195 = ssub.s32 %s14, 1
        %p196 = scmp.lt.s32.totalorder %s19, 1
        %s197 = scalar_select %p196, %s19, 1
        %s198 = smul.addr %s197, 8
        %s199 = smul.addr %s198, 8
        %s200 = scalar_lea.vmem %s0, %s199
        %p201 = pneg %p40
        %p202 = pneg %p37
        %p203 = pneg %p61
        %p204 = pneg %p58
        %p205 = pneg %p82
        %p206 = pneg %p79
        %p207 = pneg %p103
        %p208 = pneg %p100
        %p209 = pneg %p124
        %p210 = pneg %p121
        %p211 = pneg %p150
        %p212 = pneg %p147
        %s213 = sand.u32 %s137, 1
        %s214 = scalar_lea.sflag [#allocation4], %s213
        %s215 = sand.u32 %s137, 1
        %s216 = smul.addr %s215, 64
        %s217 = scalar_lea.vmem [#allocation3], %s216
        %p218 = scmp.lt.s32.totalorder %s19, 1
        %s219 = scalar_select %p218, %s19, 1
        %s220 = smul.addr %s219, 8
        %s221 = smul.addr %s220, 8
        %s222 = scalar_lea.vmem %s0, %s221
        %v223 = vld [vmem:[%s222] sm:$0xff]
        %v224 = vld [vmem:[%s222 + $0x8] sm:$0xff]
        %v225 = vld [vmem:[%s222 + $0x10] sm:$0xff]
        %v226 = vld [vmem:[%s222 + $0x18] sm:$0xff]
        %v227 = vld [vmem:[%s222 + $0x20] sm:$0xff]
        %v228 = vld [vmem:[%s222 + $0x28] sm:$0xff]
        %v229 = vld [vmem:[%s222 + $0x30] sm:$0xff]
        %v230 = vld [vmem:[%s222 + $0x38] sm:$0xff]
        %v231 = vld [vmem:[%s1] sm:$0xff]
        %v232 = vld [vmem:[%s1 + $0x8] sm:$0xff]
        %v233 = vld [vmem:[%s2] sm:$0xff]
        %v234 = vld [vmem:[%s2 + $0x8] sm:$0xff]
        %236 = vset.pattern.permute.xlu0 0
        %237 = vperm.xlu0 %236, %v233
        %v238 = vpop.permute.xlu0 %237
        %241 = vset.pattern.permute.xlu0 0
        %242 = vperm.xlu0 %241, %v234
        %v243 = vpop.permute.xlu0 %242
        %vm245 = vcmask 261120
        %v247 = vsel %vm245, %v231, 0
        %v250 = vsel %vm245, %v232, 0
        %252 = vmatprep.subr.mxu0 0.0
        %253 = vmatpush1.msra.mxu0 0.0
        %254 = vmatprep.subr.mxu0 0.0
        %255 = vmatpush1.msra.mxu0 0.0
        %256 = vmatprep.subr.mxu0 0.0
        %257 = vmatpush1.msra.mxu0 0.0
        %258 = vmatprep.subr.mxu0 0.0
        %259 = vmatpush1.msra.mxu0 0.0
        %260 = vmatprep.subr.mxu0 0.0
        %261 = vmatpush1.msra.mxu0 0.0
        %262 = vmatprep.subr.mxu0 0.0
        %263 = vmatpush1.msra.mxu0 0.0
        %264 = vmatprep.subr.mxu0 0.0
        %265 = vmatpush1.msra.mxu0 0.0
        %266 = vmatprep.subr.mxu0 0.0
        %267 = vmatpush1.msra.mxu0 0.0
        %268 = vmatprep.subr.mxu0 0.0
        %269 = vmatpush1.msra.mxu0 0.0
        %270 = vmatprep.subr.mxu0 0.0
        %271 = vmatpush1.msra.mxu0 0.0
        %272 = vmatprep.subr.mxu0 0.0
        %273 = vmatpush1.msra.mxu0 0.0
        %274 = vmatprep.subr.mxu0 0.0
        %275 = vmatpush1.msra.mxu0 0.0
        %276 = vmatprep.subr.mxu0 %v230
        %277 = vmatpush1.msra.mxu0 %v229
        %278 = vmatprep.subr.mxu0 %v228
        %279 = vmatpush1.msra.mxu0 %v227
        %280 = vmatprep.subr.mxu0 %v226
        %281 = vmatpush1.msra.mxu0 %v225
        %282 = vmatprep.subr.mxu0 %v224
        %283 = vmatpush1.msra.mxu0 %v223
        %284 = vmatprep.subr.mxu0 0.0
        %285 = vmatpush2.msra.mxu0 0.0
        %286 = vmatprep.subr.mxu0 0.0
        %287 = vmatpush2.msra.mxu0 0.0
        %288 = vmatprep.subr.mxu0 0.0
        %289 = vmatpush2.msra.mxu0 0.0
        %290 = vmatprep.subr.mxu0 0.0
        %291 = vmatpush2.msra.mxu0 0.0
        %292 = vmatprep.subr.mxu0 0.0
        %293 = vmatpush2.msra.mxu0 0.0
        %294 = vmatprep.subr.mxu0 0.0
        %295 = vmatpush2.msra.mxu0 0.0
        %296 = vmatprep.subr.mxu0 0.0
        %297 = vmatpush2.msra.mxu0 0.0
        %298 = vmatprep.subr.mxu0 0.0
        %299 = vmatpush2.msra.mxu0 0.0
        %300 = vmatprep.subr.mxu0 0.0
        %301 = vmatpush2.msra.mxu0 0.0
        %302 = vmatprep.subr.mxu0 0.0
        %303 = vmatpush2.msra.mxu0 0.0
        %304 = vmatprep.subr.mxu0 0.0
        %305 = vmatpush2.msra.mxu0 0.0
        %306 = vmatprep.subr.mxu0 0.0
        %307 = vmatpush2.msra.mxu0 0.0
        %308 = vmatprep.subr.mxu0 0.0
        %309 = vmatpush2.msra.mxu0 0.0
        %310 = vmatprep.subr.mxu0 0.0
        %311 = vmatpush2.msra.mxu0 0.0
        %312 = vmatprep.subr.mxu0 0.0
        %313 = vmatpush2.msra.mxu0 0.0
        %314 = vmatprep.subr.mxu0 0.0
        %315 = vmatpush2.msra.mxu0 0.0
        %316 = vmatprep.mubr.f32.mxu0 0.0
        %317 = vmatmul.mubr.f32.gmra.mxu0 %v247
        %v318 = vpop.f32.mrf.mxu0
        %v319 = vadd.f32 %v238, %v318
        %v320 = vpop.f32.mrf.mxu0
        %v321 = vadd.f32 %v238, %v320
        %322 = vmatprep.mubr.f32.mxu0 0.0
        %323 = vmatmul.mubr.f32.gmra.mxu0 %v250
        %v324 = vpop.f32.mrf.mxu0
        %v325 = vadd.f32 %v243, %v324
        %v326 = vpop.f32.mrf.mxu0
        %v327 = vadd.f32 %v243, %v326
        %328 = vdwg.mxu0
        %v329 = vld [vmem:[%s1 + $0x10] sm:$0xff]
        %v330 = vld [vmem:[%s2] sm:$0xff]
        %332 = vset.pattern.permute.xlu0 1
        %333 = vperm.xlu0 %332, %v330
        %v334 = vpop.permute.xlu0 %333
        %v337 = vsel %vm245, %v329, 0
        %339 = vmatprep.subr.mxu0 0.0
        %340 = vmatpush1.msra.mxu0 0.0
        %341 = vmatprep.subr.mxu0 0.0
        %342 = vmatpush1.msra.mxu0 0.0
        %343 = vmatprep.subr.mxu0 0.0
        %344 = vmatpush1.msra.mxu0 0.0
        %345 = vmatprep.subr.mxu0 0.0
        %346 = vmatpush1.msra.mxu0 0.0
        %347 = vmatprep.subr.mxu0 0.0
        %348 = vmatpush1.msra.mxu0 0.0
        %349 = vmatprep.subr.mxu0 0.0
        %350 = vmatpush1.msra.mxu0 0.0
        %351 = vmatprep.subr.mxu0 0.0
        %352 = vmatpush1.msra.mxu0 0.0
        %353 = vmatprep.subr.mxu0 0.0
        %354 = vmatpush1.msra.mxu0 0.0
        %355 = vmatprep.subr.mxu0 0.0
        %356 = vmatpush1.msra.mxu0 0.0
        %357 = vmatprep.subr.mxu0 0.0
        %358 = vmatpush1.msra.mxu0 0.0
        %359 = vmatprep.subr.mxu0 0.0
        %360 = vmatpush1.msra.mxu0 0.0
        %361 = vmatprep.subr.mxu0 0.0
        %362 = vmatpush1.msra.mxu0 0.0
        %363 = vmatprep.subr.mxu0 %v230
        %364 = vmatpush1.msra.mxu0 %v229
        %365 = vmatprep.subr.mxu0 %v228
        %366 = vmatpush1.msra.mxu0 %v227
        %367 = vmatprep.subr.mxu0 %v226
        %368 = vmatpush1.msra.mxu0 %v225
        %369 = vmatprep.subr.mxu0 %v224
        %370 = vmatpush1.msra.mxu0 %v223
        %371 = vmatprep.subr.mxu0 0.0
        %372 = vmatpush2.msra.mxu0 0.0
        %373 = vmatprep.subr.mxu0 0.0
        %374 = vmatpush2.msra.mxu0 0.0
        %375 = vmatprep.subr.mxu0 0.0
        %376 = vmatpush2.msra.mxu0 0.0
        %377 = vmatprep.subr.mxu0 0.0
        %378 = vmatpush2.msra.mxu0 0.0
        %379 = vmatprep.subr.mxu0 0.0
        %380 = vmatpush2.msra.mxu0 0.0
        %381 = vmatprep.subr.mxu0 0.0
        %382 = vmatpush2.msra.mxu0 0.0
        %383 = vmatprep.subr.mxu0 0.0
        %384 = vmatpush2.msra.mxu0 0.0
        %385 = vmatprep.subr.mxu0 0.0
        %386 = vmatpush2.msra.mxu0 0.0
        %387 = vmatprep.subr.mxu0 0.0
        %388 = vmatpush2.msra.mxu0 0.0
        %389 = vmatprep.subr.mxu0 0.0
        %390 = vmatpush2.msra.mxu0 0.0
        %391 = vmatprep.subr.mxu0 0.0
        %392 = vmatpush2.msra.mxu0 0.0
        %393 = vmatprep.subr.mxu0 0.0
        %394 = vmatpush2.msra.mxu0 0.0
        %395 = vmatprep.subr.mxu0 0.0
        %396 = vmatpush2.msra.mxu0 0.0
        %397 = vmatprep.subr.mxu0 0.0
        %398 = vmatpush2.msra.mxu0 0.0
        %399 = vmatprep.subr.mxu0 0.0
        %400 = vmatpush2.msra.mxu0 0.0
        %401 = vmatprep.subr.mxu0 0.0
        %402 = vmatpush2.msra.mxu0 0.0
        %403 = vmatprep.mubr.f32.mxu0 0.0
        %404 = vmatmul.mubr.f32.gmra.mxu0 %v337
        %v405 = vpop.f32.mrf.mxu0
        %v406 = vadd.f32 %v334, %v405
        %v407 = vpop.f32.mrf.mxu0
        %v408 = vadd.f32 %v334, %v407
        %409 = vdwg.mxu0
        %v410 = vmax.f32 %v406, %v408
        %411 = vmax.xlane.f32.xlu0 %v410
        %v412 = vpop.xlane.xlu0 %411
        %v413 = vsub.f32 %v406, %v412
        %v414 = vsub.f32 %v408, %v412
        %v415 = vmul.f32 %v413, 1.442695
        %v416 = vpow.pop %v415
        %v417 = vmul.f32 %v414, 1.442695
        %v418 = vpow.pop %v417
        %v419 = vld [vmem:[%s1 + $0x18] sm:$0xff]
        %v420 = vld [vmem:[%s1 + $0x20] sm:$0xff]
        %vm421 = vcmask 64512
        %v423 = vsel %vm421, %v419, 0
        %v426 = vsel %vm421, %v420, 0
        %428 = vmatprep.subr.mxu0 0.0
        %429 = vmatpush1.msra.mxu0 0.0
        %430 = vmatprep.subr.mxu0 0.0
        %431 = vmatpush1.msra.mxu0 0.0
        %432 = vmatprep.subr.mxu0 0.0
        %433 = vmatpush1.msra.mxu0 0.0
        %434 = vmatprep.subr.mxu0 0.0
        %435 = vmatpush1.msra.mxu0 0.0
        %436 = vmatprep.subr.mxu0 0.0
        %437 = vmatpush1.msra.mxu0 0.0
        %438 = vmatprep.subr.mxu0 0.0
        %439 = vmatpush1.msra.mxu0 0.0
        %440 = vmatprep.subr.mxu0 0.0
        %441 = vmatpush1.msra.mxu0 0.0
        %442 = vmatprep.subr.mxu0 0.0
        %443 = vmatpush1.msra.mxu0 0.0
        %444 = vmatprep.subr.mxu0 0.0
        %445 = vmatpush1.msra.mxu0 0.0
        %446 = vmatprep.subr.mxu0 0.0
        %447 = vmatpush1.msra.mxu0 0.0
        %448 = vmatprep.subr.mxu0 0.0
        %449 = vmatpush1.msra.mxu0 0.0
        %450 = vmatprep.subr.mxu0 0.0
        %451 = vmatpush1.msra.mxu0 0.0
        %452 = vmatprep.subr.mxu0 0.0
        %453 = vmatpush1.msra.mxu0 0.0
        %454 = vmatprep.subr.mxu0 0.0
        %455 = vmatpush1.msra.mxu0 0.0
        %456 = vmatprep.subr.mxu0 0.0
        %457 = vmatpush1.msra.mxu0 0.0
        %458 = vmatprep.subr.mxu0 %v418
        %459 = vmatpush1.msra.mxu0 %v416
        %460 = vmatprep.subr.mxu0 0.0
        %461 = vmatpush2.msra.mxu0 0.0
        %462 = vmatprep.subr.mxu0 0.0
        %463 = vmatpush2.msra.mxu0 0.0
        %464 = vmatprep.subr.mxu0 0.0
        %465 = vmatpush2.msra.mxu0 0.0
        %466 = vmatprep.subr.mxu0 0.0
        %467 = vmatpush2.msra.mxu0 0.0
        %468 = vmatprep.subr.mxu0 0.0
        %469 = vmatpush2.msra.mxu0 0.0
        %470 = vmatprep.subr.mxu0 0.0
        %471 = vmatpush2.msra.mxu0 0.0
        %472 = vmatprep.subr.mxu0 0.0
        %473 = vmatpush2.msra.mxu0 0.0
        %474 = vmatprep.subr.mxu0 0.0
        %475 = vmatpush2.msra.mxu0 0.0
        %476 = vmatprep.subr.mxu0 0.0
        %477 = vmatpush2.msra.mxu0 0.0
        %478 = vmatprep.subr.mxu0 0.0
        %479 = vmatpush2.msra.mxu0 0.0
        %480 = vmatprep.subr.mxu0 0.0
        %481 = vmatpush2.msra.mxu0 0.0
        %482 = vmatprep.subr.mxu0 0.0
        %483 = vmatpush2.msra.mxu0 0.0
        %484 = vmatprep.subr.mxu0 0.0
        %485 = vmatpush2.msra.mxu0 0.0
        %486 = vmatprep.subr.mxu0 0.0
        %487 = vmatpush2.msra.mxu0 0.0
        %488 = vmatprep.subr.mxu0 0.0
        %489 = vmatpush2.msra.mxu0 0.0
        %490 = vmatprep.subr.mxu0 0.0
        %491 = vmatpush2.msra.mxu0 0.0
        %492 = vmatprep.mubr.f32.mxu0 0.0
        %493 = vmatmul.mubr.f32.gmra.mxu0 %v423
        %v494 = vpop.f32.mrf.mxu0
        %v495 = vadd.f32 0.0, %v494
        %v496 = vpop.f32.mrf.mxu0
        %v497 = vadd.f32 0.0, %v496
        %498 = vmatprep.mubr.f32.mxu0 0.0
        %499 = vmatmul.mubr.f32.gmra.mxu0 %v426
        %v500 = vpop.f32.mrf.mxu0
        %v501 = vadd.f32 0.0, %v500
        %v502 = vpop.f32.mrf.mxu0
        %v503 = vadd.f32 0.0, %v502
        %504 = vdwg.mxu0
        %v505 = vmul.f32 %v319, %v495
        %v506 = vmul.f32 %v321, %v497
        %v507 = vmul.f32 %v325, %v501
        %v508 = vmul.f32 %v327, %v503
        %v509 = vadd.f32 %v505, %v506
        %510 = vadd.xlane.f32.xlu0 %v509
        %v511 = vpop.xlane.xlu0 %510
        %v512 = vadd.f32 %v507, %v508
        %513 = vadd.xlane.f32.xlu0 %v512
        %v514 = vpop.xlane.xlu0 %513
        %v515 = vadd.f32 %v495, %v497
        %516 = vadd.xlane.f32.xlu0 %v515
        %v517 = vpop.xlane.xlu0 %516
        %v518 = vadd.f32 %v501, %v503
        %519 = vadd.xlane.f32.xlu0 %v518
        %v520 = vpop.xlane.xlu0 %519
        %v521 = vrcp.pop %v517
        %v522 = vmul.f32 %v511, %v521
        %v523 = vrcp.pop %v520
        %v524 = vmul.f32 %v514, %v523
        %v525 = vld [vmem:[%s1 + $0x28] sm:$0xff]
        %v526 = vld [vmem:[%s1 + $0x30] sm:$0xff]
        %v527 = vld [vmem:[%s1 + $0x38] sm:$0xff]
        %v528 = vld [vmem:[%s1 + $0x40] sm:$0xff]
        %v529 = vld [vmem:[%s2] sm:$0xff]
        %v530 = vld [vmem:[%s2 + $0x8] sm:$0xff]
        %v531 = vld [vmem:[%s2 + $0x10] sm:$0xff]
        %v532 = vld [vmem:[%s2 + $0x18] sm:$0xff]
        %534 = vset.pattern.permute.xlu0 2
        %535 = vperm.xlu0 %534, %v529
        %v536 = vpop.permute.xlu0 %535
        %539 = vset.pattern.permute.xlu0 2
        %540 = vperm.xlu0 %539, %v530
        %v541 = vpop.permute.xlu0 %540
        %544 = vset.pattern.permute.xlu0 2
        %545 = vperm.xlu0 %544, %v531
        %v546 = vpop.permute.xlu0 %545
        %549 = vset.pattern.permute.xlu0 2
        %550 = vperm.xlu0 %549, %v532
        %v551 = vpop.permute.xlu0 %550
        %vm553 = vcmask 130048
        %v555 = vsel %vm553, %v525, 0
        %v558 = vsel %vm553, %v526, 0
        %v561 = vsel %vm553, %v527, 0
        %v564 = vsel %vm553, %v528, 0
        %566 = vmatprep.subr.mxu0 0.0
        %567 = vmatpush1.msra.mxu0 0.0
        %568 = vmatprep.subr.mxu0 0.0
        %569 = vmatpush1.msra.mxu0 0.0
        %570 = vmatprep.subr.mxu0 0.0
        %571 = vmatpush1.msra.mxu0 0.0
        %572 = vmatprep.subr.mxu0 0.0
        %573 = vmatpush1.msra.mxu0 0.0
        %574 = vmatprep.subr.mxu0 0.0
        %575 = vmatpush1.msra.mxu0 0.0
        %576 = vmatprep.subr.mxu0 0.0
        %577 = vmatpush1.msra.mxu0 0.0
        %578 = vmatprep.subr.mxu0 0.0
        %579 = vmatpush1.msra.mxu0 0.0
        %580 = vmatprep.subr.mxu0 0.0
        %581 = vmatpush1.msra.mxu0 0.0
        %582 = vmatprep.subr.mxu0 0.0
        %583 = vmatpush1.msra.mxu0 0.0
        %584 = vmatprep.subr.mxu0 0.0
        %585 = vmatpush1.msra.mxu0 0.0
        %586 = vmatprep.subr.mxu0 0.0
        %587 = vmatpush1.msra.mxu0 0.0
        %588 = vmatprep.subr.mxu0 0.0
        %589 = vmatpush1.msra.mxu0 0.0
        %590 = vmatprep.subr.mxu0 0.0
        %591 = vmatpush1.msra.mxu0 0.0
        %592 = vmatprep.subr.mxu0 0.0
        %593 = vmatpush1.msra.mxu0 0.0
        %594 = vmatprep.subr.mxu0 0.0
        %595 = vmatpush1.msra.mxu0 %v524
        %596 = vmatprep.subr.mxu0 0.0
        %597 = vmatpush1.msra.mxu0 %v522
        %598 = vmatprep.subr.mxu0 0.0
        %599 = vmatpush2.msra.mxu0 0.0
        %600 = vmatprep.subr.mxu0 0.0
        %601 = vmatpush2.msra.mxu0 0.0
        %602 = vmatprep.subr.mxu0 0.0
        %603 = vmatpush2.msra.mxu0 0.0
        %604 = vmatprep.subr.mxu0 0.0
        %605 = vmatpush2.msra.mxu0 0.0
        %606 = vmatprep.subr.mxu0 0.0
        %607 = vmatpush2.msra.mxu0 0.0
        %608 = vmatprep.subr.mxu0 0.0
        %609 = vmatpush2.msra.mxu0 0.0
        %610 = vmatprep.subr.mxu0 0.0
        %611 = vmatpush2.msra.mxu0 0.0
        %612 = vmatprep.subr.mxu0 0.0
        %613 = vmatpush2.msra.mxu0 0.0
        %614 = vmatprep.subr.mxu0 0.0
        %615 = vmatpush2.msra.mxu0 0.0
        %616 = vmatprep.subr.mxu0 0.0
        %617 = vmatpush2.msra.mxu0 0.0
        %618 = vmatprep.subr.mxu0 0.0
        %619 = vmatpush2.msra.mxu0 0.0
        %620 = vmatprep.subr.mxu0 0.0
        %621 = vmatpush2.msra.mxu0 0.0
        %622 = vmatprep.subr.mxu0 0.0
        %623 = vmatpush2.msra.mxu0 0.0
        %624 = vmatprep.subr.mxu0 0.0
        %625 = vmatpush2.msra.mxu0 0.0
        %626 = vmatprep.subr.mxu0 0.0
        %627 = vmatpush2.msra.mxu0 0.0
        %628 = vmatprep.subr.mxu0 0.0
        %629 = vmatpush2.msra.mxu0 0.0
        %630 = vmatprep.mubr.f32.mxu0 0.0
        %631 = vmatmul.mubr.f32.gmra.mxu0 %v555
        %v632 = vpop.f32.mrf.mxu0
        %v633 = vadd.f32 %v536, %v632
        %v634 = vpop.f32.mrf.mxu0
        %635 = vmatprep.mubr.f32.mxu0 0.0
        %636 = vmatmul.mubr.f32.gmra.mxu0 %v558
        %v637 = vpop.f32.mrf.mxu0
        %v638 = vadd.f32 %v541, %v637
        %v639 = vpop.f32.mrf.mxu0
        %640 = vmatprep.mubr.f32.mxu0 0.0
        %641 = vmatmul.mubr.f32.gmra.mxu0 %v561
        %v642 = vpop.f32.mrf.mxu0
        %v643 = vadd.f32 %v546, %v642
        %v644 = vpop.f32.mrf.mxu0
        %645 = vmatprep.mubr.f32.mxu0 0.0
        %646 = vmatmul.mubr.f32.gmra.mxu0 %v564
        %v647 = vpop.f32.mrf.mxu0
        %v648 = vadd.f32 %v551, %v647
        %v649 = vpop.f32.mrf.mxu0
        %650 = vdwg.mxu0
        %v651 = vld [vmem:[%s1 + $0x48] sm:$0xff]
        %v652 = vld [vmem:[%s1 + $0x50] sm:$0xff]
        %v653 = vld [vmem:[%s1 + $0x58] sm:$0xff]
        %v654 = vld [vmem:[%s1 + $0x60] sm:$0xff]
        %v655 = vmul.f32 %v633, %v633
        %v656 = vmul.f32 %v638, %v638
        %v657 = vmul.f32 %v643, %v643
        %v658 = vmul.f32 %v648, %v648
        %659 = vset.pattern.permute.xlu0 3
        %660 = vperm.xlu0 %659, %v529
        %v661 = vpop.permute.xlu0 %660
        %663 = vset.pattern.permute.xlu0 3
        %664 = vperm.xlu0 %663, %v530
        %v665 = vpop.permute.xlu0 %664
        %667 = vset.pattern.permute.xlu0 3
        %668 = vperm.xlu0 %667, %v531
        %v669 = vpop.permute.xlu0 %668
        %671 = vset.pattern.permute.xlu0 3
        %672 = vperm.xlu0 %671, %v532
        %v673 = vpop.permute.xlu0 %672
        %v675 = vmul.f32 %v661, %v633
        %v676 = vmul.f32 %v665, %v638
        %v677 = vmul.f32 %v669, %v643
        %v678 = vmul.f32 %v673, %v648
        %v680 = vsel %vm245, %v651, 0
        %v683 = vsel %vm245, %v652, 0
        %v686 = vsel %vm245, %v653, 0
        %v689 = vsel %vm245, %v654, 0
        %691 = vmatprep.subr.mxu0 0.0
        %692 = vmatpush1.msra.mxu0 0.0
        %693 = vmatprep.subr.mxu0 0.0
        %694 = vmatpush1.msra.mxu0 0.0
        %695 = vmatprep.subr.mxu0 0.0
        %696 = vmatpush1.msra.mxu0 0.0
        %697 = vmatprep.subr.mxu0 0.0
        %698 = vmatpush1.msra.mxu0 0.0
        %699 = vmatprep.subr.mxu0 0.0
        %700 = vmatpush1.msra.mxu0 0.0
        %701 = vmatprep.subr.mxu0 0.0
        %702 = vmatpush1.msra.mxu0 0.0
        %703 = vmatprep.subr.mxu0 0.0
        %704 = vmatpush1.msra.mxu0 0.0
        %705 = vmatprep.subr.mxu0 0.0
        %706 = vmatpush1.msra.mxu0 0.0
        %707 = vmatprep.subr.mxu0 0.0
        %708 = vmatpush1.msra.mxu0 0.0
        %709 = vmatprep.subr.mxu0 0.0
        %710 = vmatpush1.msra.mxu0 0.0
        %711 = vmatprep.subr.mxu0 0.0
        %712 = vmatpush1.msra.mxu0 0.0
        %713 = vmatprep.subr.mxu0 0.0
        %714 = vmatpush1.msra.mxu0 0.0
        %715 = vmatprep.subr.mxu0 0.0
        %716 = vmatpush1.msra.mxu0 %v658
        %717 = vmatprep.subr.mxu0 0.0
        %718 = vmatpush1.msra.mxu0 %v657
        %719 = vmatprep.subr.mxu0 0.0
        %720 = vmatpush1.msra.mxu0 %v656
        %721 = vmatprep.subr.mxu0 0.0
        %722 = vmatpush1.msra.mxu0 %v655
        %723 = vmatprep.subr.mxu0 0.0
        %724 = vmatpush2.msra.mxu0 0.0
        %725 = vmatprep.subr.mxu0 0.0
        %726 = vmatpush2.msra.mxu0 0.0
        %727 = vmatprep.subr.mxu0 0.0
        %728 = vmatpush2.msra.mxu0 0.0
        %729 = vmatprep.subr.mxu0 0.0
        %730 = vmatpush2.msra.mxu0 0.0
        %731 = vmatprep.subr.mxu0 0.0
        %732 = vmatpush2.msra.mxu0 0.0
        %733 = vmatprep.subr.mxu0 0.0
        %734 = vmatpush2.msra.mxu0 0.0
        %735 = vmatprep.subr.mxu0 0.0
        %736 = vmatpush2.msra.mxu0 0.0
        %737 = vmatprep.subr.mxu0 0.0
        %738 = vmatpush2.msra.mxu0 0.0
        %739 = vmatprep.subr.mxu0 0.0
        %740 = vmatpush2.msra.mxu0 0.0
        %741 = vmatprep.subr.mxu0 0.0
        %742 = vmatpush2.msra.mxu0 0.0
        %743 = vmatprep.subr.mxu0 0.0
        %744 = vmatpush2.msra.mxu0 0.0
        %745 = vmatprep.subr.mxu0 0.0
        %746 = vmatpush2.msra.mxu0 0.0
        %747 = vmatprep.subr.mxu0 0.0
        %748 = vmatpush2.msra.mxu0 0.0
        %749 = vmatprep.subr.mxu0 0.0
        %750 = vmatpush2.msra.mxu0 0.0
        %751 = vmatprep.subr.mxu0 0.0
        %752 = vmatpush2.msra.mxu0 0.0
        %753 = vmatprep.subr.mxu0 0.0
        %754 = vmatpush2.msra.mxu0 0.0
        %755 = vmatprep.mubr.f32.mxu0 0.0
        %756 = vmatmul.mubr.f32.gmra.mxu0 %v680
        %v757 = vpop.f32.mrf.mxu0
        %v758 = vadd.f32 1e-05, %v757
        %v759 = vpop.f32.mrf.mxu0
        %760 = vmatprep.mubr.f32.mxu0 0.0
        %761 = vmatmul.mubr.f32.gmra.mxu0 %v683
        %v762 = vpop.f32.mrf.mxu0
        %v763 = vadd.f32 1e-05, %v762
        %v764 = vpop.f32.mrf.mxu0
        %765 = vmatprep.mubr.f32.mxu0 0.0
        %766 = vmatmul.mubr.f32.gmra.mxu0 %v686
        %v767 = vpop.f32.mrf.mxu0
        %v768 = vadd.f32 1e-05, %v767
        %v769 = vpop.f32.mrf.mxu0
        %770 = vmatprep.mubr.f32.mxu0 0.0
        %771 = vmatmul.mubr.f32.gmra.mxu0 %v689
        %v772 = vpop.f32.mrf.mxu0
        %v773 = vadd.f32 1e-05, %v772
        %v774 = vpop.f32.mrf.mxu0
        %775 = vdwg.mxu0
        %v776 = vrsqrt.pop %v758
        %v777 = vrsqrt.pop %v763
        %v778 = vrsqrt.pop %v768
        %v779 = vrsqrt.pop %v773
        %v780 = vmul.f32 %v675, %v776
        %v781 = vmul.f32 %v676, %v777
        %v782 = vmul.f32 %v677, %v778
        %v783 = vmul.f32 %v678, %v779
        %784 = vset.pattern.permute.xlu0 4
        %785 = vperm.xlu0 %784, %v529
        %v786 = vpop.permute.xlu0 %785
        %788 = vset.pattern.permute.xlu0 4
        %789 = vperm.xlu0 %788, %v530
        %v790 = vpop.permute.xlu0 %789
        %792 = vset.pattern.permute.xlu0 4
        %793 = vperm.xlu0 %792, %v531
        %v794 = vpop.permute.xlu0 %793
        %796 = vset.pattern.permute.xlu0 4
        %797 = vperm.xlu0 %796, %v532
        %v798 = vpop.permute.xlu0 %797
        %v800 = vadd.f32 %v780, %v786
        %v801 = vadd.f32 %v781, %v790
        %v802 = vadd.f32 %v782, %v794
        %v803 = vadd.f32 %v783, %v798
        %v804 = vsub.f32 0.0, %v800
        %v805 = vsub.f32 0.0, %v801
        %v806 = vsub.f32 0.0, %v802
        %v807 = vsub.f32 0.0, %v803
        %v808 = vmul.f32 %v804, 1.442695
        %v809 = vpow.pop %v808
        %v810 = vmul.f32 %v805, 1.442695
        %v811 = vpow.pop %v810
        %v812 = vmul.f32 %v806, 1.442695
        %v813 = vpow.pop %v812
        %v814 = vmul.f32 %v807, 1.442695
        %v815 = vpow.pop %v814
        %v816 = vadd.f32 %v809, 1.0
        %v817 = vadd.f32 %v811, 1.0
        %v818 = vadd.f32 %v813, 1.0
        %v819 = vadd.f32 %v815, 1.0
        %v820 = vrcp.pop %v816
        %v821 = vmul.f32 1.0, %v820
        %v822 = vrcp.pop %v817
        %v823 = vmul.f32 1.0, %v822
        %v824 = vrcp.pop %v818
        %v825 = vmul.f32 1.0, %v824
        %v826 = vrcp.pop %v819
        %v827 = vmul.f32 1.0, %v826
        %829 = vset.pattern.permute.xlu0 0
        %830 = vperm.xlu0 %829, %v821
        %v831 = vpop.permute.xlu0 %830
        %834 = vset.pattern.permute.xlu0 0
        %835 = vperm.xlu0 %834, %v823
        %v836 = vpop.permute.xlu0 %835
        %839 = vset.pattern.permute.xlu0 0
        %840 = vperm.xlu0 %839, %v825
        %v841 = vpop.permute.xlu0 %840
        %844 = vset.pattern.permute.xlu0 0
        %845 = vperm.xlu0 %844, %v827
        %v846 = vpop.permute.xlu0 %845
        %v848 = vmul.f32 %v831, %v223
        %v849 = vmul.f32 %v831, %v224
        %v850 = vmul.f32 %v836, %v225
        %v851 = vmul.f32 %v836, %v226
        %v852 = vmul.f32 %v841, %v227
        %v853 = vmul.f32 %v841, %v228
        %v854 = vmul.f32 %v846, %v229
        %v855 = vmul.f32 %v846, %v230
        %856 = vst [vmem:[#allocation2] sm:$0xff] %v848
        %857 = vst [vmem:[#allocation2 + $0x8] sm:$0xff] %v849
        %858 = vst [vmem:[#allocation2 + $0x10] sm:$0xff] %v850
        %859 = vst [vmem:[#allocation2 + $0x18] sm:$0xff] %v851
        %860 = vst [vmem:[#allocation2 + $0x20] sm:$0xff] %v852
        %861 = vst [vmem:[#allocation2 + $0x28] sm:$0xff] %v853
        %862 = vst [vmem:[#allocation2 + $0x30] sm:$0xff] %v854
        %863 = vst [vmem:[#allocation2 + $0x38] sm:$0xff] %v855
        %v864 = vld [vmem:[%s3] sm:$0xff]
        %v865 = vld [vmem:[%s3 + $0x8] sm:$0xff]
        %v866 = vld [vmem:[%s3 + $0x10] sm:$0xff]
        %v867 = vld [vmem:[%s3 + $0x18] sm:$0xff]
        %v868 = vld [vmem:[%s4] ss:$8 sm:$0x3]
        %869 = vrot.lane.b32.xlu0 %v848, 2
        %v870 = vpop.permute.xlu0 %869
        %871 = vrot.lane.b32.xlu0 %v850, 2
        %v872 = vpop.permute.xlu0 %871
        %873 = vrot.lane.b32.xlu0 %v852, 2
        %v874 = vpop.permute.xlu0 %873
        %875 = vrot.lane.b32.xlu0 %v854, 2
        %v876 = vpop.permute.xlu0 %875
        %877 = vrot.lane.b32.xlu0 %v849, 2
        %v878 = vpop.permute.xlu0 %877
        %879 = vrot.lane.b32.xlu0 %v851, 2
        %v880 = vpop.permute.xlu0 %879
        %881 = vrot.lane.b32.xlu0 %v853, 2
        %v882 = vpop.permute.xlu0 %881
        %883 = vrot.lane.b32.xlu0 %v855, 2
        %v884 = vpop.permute.xlu0 %883
        %v885 = vlaneseq
        %v886 = vand.u32 %v885, 127
        %vm887 = vcmp.lt.s32.totalorder %v886, 2
        %v888 = vsel %vm887, %v870, %v878
        %v889 = vsel %vm887, %v872, %v880
        %v890 = vsel %vm887, %v874, %v882
        %v891 = vsel %vm887, %v876, %v884
        %v892 = vsel %vm887, %v878, %v870
        %v893 = vsel %vm887, %v880, %v872
        %v894 = vsel %vm887, %v882, %v874
        %v895 = vsel %vm887, %v884, %v876
        %v897 = vlaneseq
        %v898 = vshrl.u32 %v897, 7
        %v899 = vsub.s32 0, %v898
        %v900 = vrot.slane %v868, %v899
        %v901 = vlaneseq
        %v902 = vshrl.u32 %v901, 7
        %v903 = vsub.s32 1, %v902
        %v904 = vrot.slane %v868, %v903
        %v907 = vmul.f32 %v892, %v900
        %v908 = vmul.f32 %v888, %v904
        %v909 = vmul.f32 %v893, %v900
        %v910 = vmul.f32 %v889, %v904
        %v911 = vmul.f32 %v894, %v900
        %v912 = vmul.f32 %v890, %v904
        %v913 = vmul.f32 %v895, %v900
        %v914 = vmul.f32 %v891, %v904
        %916 = vset.pattern.permute.xlu0 0
        %917 = vperm.xlu0 %916, %v864
        %v918 = vpop.permute.xlu0 %917
        %921 = vset.pattern.permute.xlu0 0
        %922 = vperm.xlu0 %921, %v865
        %v923 = vpop.permute.xlu0 %922
        %926 = vset.pattern.permute.xlu0 0
        %927 = vperm.xlu0 %926, %v866
        %v928 = vpop.permute.xlu0 %927
        %931 = vset.pattern.permute.xlu0 0
        %932 = vperm.xlu0 %931, %v867
        %v933 = vpop.permute.xlu0 %932
        %v935 = vmul.f32 %v918, %v907
        %v936 = vmul.f32 %v918, %v908
        %v937 = vmul.f32 %v923, %v909
        %v938 = vmul.f32 %v923, %v910
        %v939 = vmul.f32 %v928, %v911
        %v940 = vmul.f32 %v928, %v912
        %v941 = vmul.f32 %v933, %v913
        %v942 = vmul.f32 %v933, %v914
        %v943 = vadd.f32 %v935, 0.0
        %v944 = vadd.f32 %v936, 0.0
        %v945 = vadd.f32 %v937, 0.0
        %v946 = vadd.f32 %v938, 0.0
        %v947 = vadd.f32 %v939, 0.0
        %v948 = vadd.f32 %v940, 0.0
        %v949 = vadd.f32 %v941, 0.0
        %v950 = vadd.f32 %v942, 0.0
        %s951 = scalar_lea.vmem %s4, 1
        %v952 = vld [vmem:[%s951] ss:$8 sm:$0x3]
        %953 = vrot.lane.b32.xlu0 %v848, 1
        %v954 = vpop.permute.xlu0 %953
        %955 = vrot.lane.b32.xlu0 %v850, 1
        %v956 = vpop.permute.xlu0 %955
        %957 = vrot.lane.b32.xlu0 %v852, 1
        %v958 = vpop.permute.xlu0 %957
        %959 = vrot.lane.b32.xlu0 %v854, 1
        %v960 = vpop.permute.xlu0 %959
        %961 = vrot.lane.b32.xlu0 %v849, 1
        %v962 = vpop.permute.xlu0 %961
        %963 = vrot.lane.b32.xlu0 %v851, 1
        %v964 = vpop.permute.xlu0 %963
        %965 = vrot.lane.b32.xlu0 %v853, 1
        %v966 = vpop.permute.xlu0 %965
        %967 = vrot.lane.b32.xlu0 %v855, 1
        %v968 = vpop.permute.xlu0 %967
        %vm969 = vcmp.lt.s32.totalorder %v886, 1
        %v970 = vsel %vm969, %v954, %v962
        %v971 = vsel %vm969, %v956, %v964
        %v972 = vsel %vm969, %v958, %v966
        %v973 = vsel %vm969, %v960, %v968
        %v974 = vsel %vm969, %v962, %v954
        %v975 = vsel %vm969, %v964, %v956
        %v976 = vsel %vm969, %v966, %v958
        %v977 = vsel %vm969, %v968, %v960
        %v979 = vlaneseq
        %v980 = vshrl.u32 %v979, 7
        %v981 = vsub.s32 0, %v980
        %v982 = vrot.slane %v952, %v981
        %v983 = vlaneseq
        %v984 = vshrl.u32 %v983, 7
        %v985 = vsub.s32 1, %v984
        %v986 = vrot.slane %v952, %v985
        %v989 = vmul.f32 %v974, %v982
        %v990 = vmul.f32 %v970, %v986
        %v991 = vmul.f32 %v975, %v982
        %v992 = vmul.f32 %v971, %v986
        %v993 = vmul.f32 %v976, %v982
        %v994 = vmul.f32 %v972, %v986
        %v995 = vmul.f32 %v977, %v982
        %v996 = vmul.f32 %v973, %v986
        %997 = vset.pattern.permute.xlu0 1
        %998 = vperm.xlu0 %997, %v864
        %v999 = vpop.permute.xlu0 %998
        %1001 = vset.pattern.permute.xlu0 1
        %1002 = vperm.xlu0 %1001, %v865
        %v1003 = vpop.permute.xlu0 %1002
        %1005 = vset.pattern.permute.xlu0 1
        %1006 = vperm.xlu0 %1005, %v866
        %v1007 = vpop.permute.xlu0 %1006
        %1009 = vset.pattern.permute.xlu0 1
        %1010 = vperm.xlu0 %1009, %v867
        %v1011 = vpop.permute.xlu0 %1010
        %v1013 = vmul.f32 %v999, %v989
        %v1014 = vmul.f32 %v999, %v990
        %v1015 = vmul.f32 %v1003, %v991
        %v1016 = vmul.f32 %v1003, %v992
        %v1017 = vmul.f32 %v1007, %v993
        %v1018 = vmul.f32 %v1007, %v994
        %v1019 = vmul.f32 %v1011, %v995
        %v1020 = vmul.f32 %v1011, %v996
        %v1021 = vadd.f32 %v943, %v1013
        %v1022 = vadd.f32 %v944, %v1014
        %v1023 = vadd.f32 %v945, %v1015
        %v1024 = vadd.f32 %v946, %v1016
        %v1025 = vadd.f32 %v947, %v1017
        %v1026 = vadd.f32 %v948, %v1018
        %v1027 = vadd.f32 %v949, %v1019
        %v1028 = vadd.f32 %v950, %v1020
        %s1029 = scalar_lea.vmem %s4, 2
        %v1030 = vld [vmem:[%s1029] ss:$8 sm:$0x3]
        %v1032 = vlaneseq
        %v1033 = vshrl.u32 %v1032, 7
        %v1034 = vsub.s32 0, %v1033
        %v1035 = vrot.slane %v1030, %v1034
        %v1036 = vlaneseq
        %v1037 = vshrl.u32 %v1036, 7
        %v1038 = vsub.s32 1, %v1037
        %v1039 = vrot.slane %v1030, %v1038
        %v1042 = vmul.f32 %v848, %v1035
        %v1043 = vmul.f32 %v849, %v1039
        %v1044 = vmul.f32 %v850, %v1035
        %v1045 = vmul.f32 %v851, %v1039
        %v1046 = vmul.f32 %v852, %v1035
        %v1047 = vmul.f32 %v853, %v1039
        %v1048 = vmul.f32 %v854, %v1035
        %v1049 = vmul.f32 %v855, %v1039
        %1050 = vset.pattern.permute.xlu0 2
        %1051 = vperm.xlu0 %1050, %v864
        %v1052 = vpop.permute.xlu0 %1051
        %1054 = vset.pattern.permute.xlu0 2
        %1055 = vperm.xlu0 %1054, %v865
        %v1056 = vpop.permute.xlu0 %1055
        %1058 = vset.pattern.permute.xlu0 2
        %1059 = vperm.xlu0 %1058, %v866
        %v1060 = vpop.permute.xlu0 %1059
        %1062 = vset.pattern.permute.xlu0 2
        %1063 = vperm.xlu0 %1062, %v867
        %v1064 = vpop.permute.xlu0 %1063
        %v1066 = vmul.f32 %v1052, %v1042
        %v1067 = vmul.f32 %v1052, %v1043
        %v1068 = vmul.f32 %v1056, %v1044
        %v1069 = vmul.f32 %v1056, %v1045
        %v1070 = vmul.f32 %v1060, %v1046
        %v1071 = vmul.f32 %v1060, %v1047
        %v1072 = vmul.f32 %v1064, %v1048
        %v1073 = vmul.f32 %v1064, %v1049
        %v1074 = vadd.f32 %v1021, %v1066
        %v1075 = vadd.f32 %v1022, %v1067
        %v1076 = vadd.f32 %v1023, %v1068
        %v1077 = vadd.f32 %v1024, %v1069
        %v1078 = vadd.f32 %v1025, %v1070
        %v1079 = vadd.f32 %v1026, %v1071
        %v1080 = vadd.f32 %v1027, %v1072
        %v1081 = vadd.f32 %v1028, %v1073
        %s1082 = scalar_lea.vmem %s4, 3
        %v1083 = vld [vmem:[%s1082] ss:$8 sm:$0x3]
        %1084 = vrot.lane.b32.xlu0 %v848, 127
        %v1085 = vpop.permute.xlu0 %1084
        %1086 = vrot.lane.b32.xlu0 %v850, 127
        %v1087 = vpop.permute.xlu0 %1086
        %1088 = vrot.lane.b32.xlu0 %v852, 127
        %v1089 = vpop.permute.xlu0 %1088
        %1090 = vrot.lane.b32.xlu0 %v854, 127
        %v1091 = vpop.permute.xlu0 %1090
        %1092 = vrot.lane.b32.xlu0 %v849, 127
        %v1093 = vpop.permute.xlu0 %1092
        %1094 = vrot.lane.b32.xlu0 %v851, 127
        %v1095 = vpop.permute.xlu0 %1094
        %1096 = vrot.lane.b32.xlu0 %v853, 127
        %v1097 = vpop.permute.xlu0 %1096
        %1098 = vrot.lane.b32.xlu0 %v855, 127
        %v1099 = vpop.permute.xlu0 %1098
        %vm1100 = vcmp.lt.s32.totalorder %v886, 127
        %v1101 = vsel %vm1100, %v1085, %v1093
        %v1102 = vsel %vm1100, %v1087, %v1095
        %v1103 = vsel %vm1100, %v1089, %v1097
        %v1104 = vsel %vm1100, %v1091, %v1099
        %v1105 = vsel %vm1100, %v1093, %v1085
        %v1106 = vsel %vm1100, %v1095, %v1087
        %v1107 = vsel %vm1100, %v1097, %v1089
        %v1108 = vsel %vm1100, %v1099, %v1091
        %v1110 = vlaneseq
        %v1111 = vshrl.u32 %v1110, 7
        %v1112 = vsub.s32 0, %v1111
        %v1113 = vrot.slane %v1083, %v1112
        %v1114 = vlaneseq
        %v1115 = vshrl.u32 %v1114, 7
        %v1116 = vsub.s32 1, %v1115
        %v1117 = vrot.slane %v1083, %v1116
        %v1120 = vmul.f32 %v1101, %v1113
        %v1121 = vmul.f32 %v1105, %v1117
        %v1122 = vmul.f32 %v1102, %v1113
        %v1123 = vmul.f32 %v1106, %v1117
        %v1124 = vmul.f32 %v1103, %v1113
        %v1125 = vmul.f32 %v1107, %v1117
        %v1126 = vmul.f32 %v1104, %v1113
        %v1127 = vmul.f32 %v1108, %v1117
        %1128 = vset.pattern.permute.xlu0 3
        %1129 = vperm.xlu0 %1128, %v864
        %v1130 = vpop.permute.xlu0 %1129
        %1132 = vset.pattern.permute.xlu0 3
        %1133 = vperm.xlu0 %1132, %v865
        %v1134 = vpop.permute.xlu0 %1133
        %1136 = vset.pattern.permute.xlu0 3
        %1137 = vperm.xlu0 %1136, %v866
        %v1138 = vpop.permute.xlu0 %1137
        %1140 = vset.pattern.permute.xlu0 3
        %1141 = vperm.xlu0 %1140, %v867
        %v1142 = vpop.permute.xlu0 %1141
        %v1144 = vmul.f32 %v1130, %v1120
        %v1145 = vmul.f32 %v1130, %v1121
        %v1146 = vmul.f32 %v1134, %v1122
        %v1147 = vmul.f32 %v1134, %v1123
        %v1148 = vmul.f32 %v1138, %v1124
        %v1149 = vmul.f32 %v1138, %v1125
        %v1150 = vmul.f32 %v1142, %v1126
        %v1151 = vmul.f32 %v1142, %v1127
        %v1152 = vadd.f32 %v1074, %v1144
        %v1153 = vadd.f32 %v1075, %v1145
        %v1154 = vadd.f32 %v1076, %v1146
        %v1155 = vadd.f32 %v1077, %v1147
        %v1156 = vadd.f32 %v1078, %v1148
        %v1157 = vadd.f32 %v1079, %v1149
        %v1158 = vadd.f32 %v1080, %v1150
        %v1159 = vadd.f32 %v1081, %v1151
        %s1160 = scalar_lea.vmem %s4, 4
        %v1161 = vld [vmem:[%s1160] ss:$8 sm:$0x3]
        %1162 = vrot.lane.b32.xlu0 %v848, 126
        %v1163 = vpop.permute.xlu0 %1162
        %1164 = vrot.lane.b32.xlu0 %v850, 126
        %v1165 = vpop.permute.xlu0 %1164
        %1166 = vrot.lane.b32.xlu0 %v852, 126
        %v1167 = vpop.permute.xlu0 %1166
        %1168 = vrot.lane.b32.xlu0 %v854, 126
        %v1169 = vpop.permute.xlu0 %1168
        %1170 = vrot.lane.b32.xlu0 %v849, 126
        %v1171 = vpop.permute.xlu0 %1170
        %1172 = vrot.lane.b32.xlu0 %v851, 126
        %v1173 = vpop.permute.xlu0 %1172
        %1174 = vrot.lane.b32.xlu0 %v853, 126
        %v1175 = vpop.permute.xlu0 %1174
        %1176 = vrot.lane.b32.xlu0 %v855, 126
        %v1177 = vpop.permute.xlu0 %1176
        %vm1178 = vcmp.lt.s32.totalorder %v886, 126
        %v1179 = vsel %vm1178, %v1163, %v1171
        %v1180 = vsel %vm1178, %v1165, %v1173
        %v1181 = vsel %vm1178, %v1167, %v1175
        %v1182 = vsel %vm1178, %v1169, %v1177
        %v1183 = vsel %vm1178, %v1171, %v1163
        %v1184 = vsel %vm1178, %v1173, %v1165
        %v1185 = vsel %vm1178, %v1175, %v1167
        %v1186 = vsel %vm1178, %v1177, %v1169
        %v1188 = vlaneseq
        %v1189 = vshrl.u32 %v1188, 7
        %v1190 = vsub.s32 0, %v1189
        %v1191 = vrot.slane %v1161, %v1190
        %v1192 = vlaneseq
        %v1193 = vshrl.u32 %v1192, 7
        %v1194 = vsub.s32 1, %v1193
        %v1195 = vrot.slane %v1161, %v1194
        %v1198 = vmul.f32 %v1179, %v1191
        %v1199 = vmul.f32 %v1183, %v1195
        %v1200 = vmul.f32 %v1180, %v1191
        %v1201 = vmul.f32 %v1184, %v1195
        %v1202 = vmul.f32 %v1181, %v1191
        %v1203 = vmul.f32 %v1185, %v1195
        %v1204 = vmul.f32 %v1182, %v1191
        %v1205 = vmul.f32 %v1186, %v1195
        %1206 = vset.pattern.permute.xlu0 4
        %1207 = vperm.xlu0 %1206, %v864
        %v1208 = vpop.permute.xlu0 %1207
        %1210 = vset.pattern.permute.xlu0 4
        %1211 = vperm.xlu0 %1210, %v865
        %v1212 = vpop.permute.xlu0 %1211
        %1214 = vset.pattern.permute.xlu0 4
        %1215 = vperm.xlu0 %1214, %v866
        %v1216 = vpop.permute.xlu0 %1215
        %1218 = vset.pattern.permute.xlu0 4
        %1219 = vperm.xlu0 %1218, %v867
        %v1220 = vpop.permute.xlu0 %1219
        %v1222 = vmul.f32 %v1208, %v1198
        %v1223 = vmul.f32 %v1208, %v1199
        %v1224 = vmul.f32 %v1212, %v1200
        %v1225 = vmul.f32 %v1212, %v1201
        %v1226 = vmul.f32 %v1216, %v1202
        %v1227 = vmul.f32 %v1216, %v1203
        %v1228 = vmul.f32 %v1220, %v1204
        %v1229 = vmul.f32 %v1220, %v1205
        %v1230 = vadd.f32 %v1152, %v1222
        %v1231 = vadd.f32 %v1153, %v1223
        %v1232 = vadd.f32 %v1154, %v1224
        %v1233 = vadd.f32 %v1155, %v1225
        %v1234 = vadd.f32 %v1156, %v1226
        %v1235 = vadd.f32 %v1157, %v1227
        %v1236 = vadd.f32 %v1158, %v1228
        %v1237 = vadd.f32 %v1159, %v1229
        %v1238 = vld [vmem:[%s2] sm:$0xff]
        %v1239 = vld [vmem:[%s2 + $0x8] sm:$0xff]
        %v1240 = vld [vmem:[%s2 + $0x10] sm:$0xff]
        %v1241 = vld [vmem:[%s2 + $0x18] sm:$0xff]
        %1243 = vset.pattern.permute.xlu0 5
        %1244 = vperm.xlu0 %1243, %v1238
        %v1245 = vpop.permute.xlu0 %1244
        %1248 = vset.pattern.permute.xlu0 5
        %1249 = vperm.xlu0 %1248, %v1239
        %v1250 = vpop.permute.xlu0 %1249
        %1253 = vset.pattern.permute.xlu0 5
        %1254 = vperm.xlu0 %1253, %v1240
        %v1255 = vpop.permute.xlu0 %1254
        %1258 = vset.pattern.permute.xlu0 5
        %1259 = vperm.xlu0 %1258, %v1241
        %v1260 = vpop.permute.xlu0 %1259
        %v1262 = vadd.f32 %v1230, %v1245
        %v1263 = vadd.f32 %v1231, %v1245
        %v1264 = vadd.f32 %v1232, %v1250
        %v1265 = vadd.f32 %v1233, %v1250
        %v1266 = vadd.f32 %v1234, %v1255
        %v1267 = vadd.f32 %v1235, %v1255
        %v1268 = vadd.f32 %v1236, %v1260
        %v1269 = vadd.f32 %v1237, %v1260
        %s1270 = scalar_lea.vmem %s4, 5
        %v1271 = vld [vmem:[%s1270] ss:$8 sm:$0x3]
        %1272 = vrot.lane.b32.xlu0 %v1262, 32
        %v1273 = vpop.permute.xlu0 %1272
        %1274 = vrot.lane.b32.xlu0 %v1264, 32
        %v1275 = vpop.permute.xlu0 %1274
        %1276 = vrot.lane.b32.xlu0 %v1266, 32
        %v1277 = vpop.permute.xlu0 %1276
        %1278 = vrot.lane.b32.xlu0 %v1268, 32
        %v1279 = vpop.permute.xlu0 %1278
        %1280 = vrot.lane.b32.xlu0 %v1263, 32
        %v1281 = vpop.permute.xlu0 %1280
        %1282 = vrot.lane.b32.xlu0 %v1265, 32
        %v1283 = vpop.permute.xlu0 %1282
        %1284 = vrot.lane.b32.xlu0 %v1267, 32
        %v1285 = vpop.permute.xlu0 %1284
        %1286 = vrot.lane.b32.xlu0 %v1269, 32
        %v1287 = vpop.permute.xlu0 %1286
        %vm1288 = vcmp.lt.s32.totalorder %v886, 32
        %v1289 = vsel %vm1288, %v1273, %v1281
        %v1290 = vsel %vm1288, %v1275, %v1283
        %v1291 = vsel %vm1288, %v1277, %v1285
        %v1292 = vsel %vm1288, %v1279, %v1287
        %v1293 = vsel %vm1288, %v1281, %v1273
        %v1294 = vsel %vm1288, %v1283, %v1275
        %v1295 = vsel %vm1288, %v1285, %v1277
        %v1296 = vsel %vm1288, %v1287, %v1279
        %v1298 = vlaneseq
        %v1299 = vshrl.u32 %v1298, 7
        %v1300 = vsub.s32 0, %v1299
        %v1301 = vrot.slane %v1271, %v1300
        %v1302 = vlaneseq
        %v1303 = vshrl.u32 %v1302, 7
        %v1304 = vsub.s32 1, %v1303
        %v1305 = vrot.slane %v1271, %v1304
        %v1308 = vmul.f32 %v1293, %v1301
        %v1309 = vmul.f32 %v1289, %v1305
        %v1310 = vmul.f32 %v1294, %v1301
        %v1311 = vmul.f32 %v1290, %v1305
        %v1312 = vmul.f32 %v1295, %v1301
        %v1313 = vmul.f32 %v1291, %v1305
        %v1314 = vmul.f32 %v1296, %v1301
        %v1315 = vmul.f32 %v1292, %v1305
        %1316 = vset.pattern.permute.xlu0 5
        %1317 = vperm.xlu0 %1316, %v864
        %v1318 = vpop.permute.xlu0 %1317
        %1320 = vset.pattern.permute.xlu0 5
        %1321 = vperm.xlu0 %1320, %v865
        %v1322 = vpop.permute.xlu0 %1321
        %1324 = vset.pattern.permute.xlu0 5
        %1325 = vperm.xlu0 %1324, %v866
        %v1326 = vpop.permute.xlu0 %1325
        %1328 = vset.pattern.permute.xlu0 5
        %1329 = vperm.xlu0 %1328, %v867
        %v1330 = vpop.permute.xlu0 %1329
        %v1332 = vmul.f32 %v1318, %v1308
        %v1333 = vmul.f32 %v1318, %v1309
        %v1334 = vmul.f32 %v1322, %v1310
        %v1335 = vmul.f32 %v1322, %v1311
        %v1336 = vmul.f32 %v1326, %v1312
        %v1337 = vmul.f32 %v1326, %v1313
        %v1338 = vmul.f32 %v1330, %v1314
        %v1339 = vmul.f32 %v1330, %v1315
        %v1340 = vadd.f32 %v1332, 0.0
        %v1341 = vadd.f32 %v1333, 0.0
        %v1342 = vadd.f32 %v1334, 0.0
        %v1343 = vadd.f32 %v1335, 0.0
        %v1344 = vadd.f32 %v1336, 0.0
        %v1345 = vadd.f32 %v1337, 0.0
        %v1346 = vadd.f32 %v1338, 0.0
        %v1347 = vadd.f32 %v1339, 0.0
        %s1348 = scalar_lea.vmem %s4, 6
        %v1349 = vld [vmem:[%s1348] ss:$8 sm:$0x3]
        %1350 = vrot.lane.b32.xlu0 %v1262, 16
        %v1351 = vpop.permute.xlu0 %1350
        %1352 = vrot.lane.b32.xlu0 %v1264, 16
        %v1353 = vpop.permute.xlu0 %1352
        %1354 = vrot.lane.b32.xlu0 %v1266, 16
        %v1355 = vpop.permute.xlu0 %1354
        %1356 = vrot.lane.b32.xlu0 %v1268, 16
        %v1357 = vpop.permute.xlu0 %1356
        %1358 = vrot.lane.b32.xlu0 %v1263, 16
        %v1359 = vpop.permute.xlu0 %1358
        %1360 = vrot.lane.b32.xlu0 %v1265, 16
        %v1361 = vpop.permute.xlu0 %1360
        %1362 = vrot.lane.b32.xlu0 %v1267, 16
        %v1363 = vpop.permute.xlu0 %1362
        %1364 = vrot.lane.b32.xlu0 %v1269, 16
        %v1365 = vpop.permute.xlu0 %1364
        %vm1366 = vcmp.lt.s32.totalorder %v886, 16
        %v1367 = vsel %vm1366, %v1351, %v1359
        %v1368 = vsel %vm1366, %v1353, %v1361
        %v1369 = vsel %vm1366, %v1355, %v1363
        %v1370 = vsel %vm1366, %v1357, %v1365
        %v1371 = vsel %vm1366, %v1359, %v1351
        %v1372 = vsel %vm1366, %v1361, %v1353
        %v1373 = vsel %vm1366, %v1363, %v1355
        %v1374 = vsel %vm1366, %v1365, %v1357
        %v1376 = vlaneseq
        %v1377 = vshrl.u32 %v1376, 7
        %v1378 = vsub.s32 0, %v1377
        %v1379 = vrot.slane %v1349, %v1378
        %v1380 = vlaneseq
        %v1381 = vshrl.u32 %v1380, 7
        %v1382 = vsub.s32 1, %v1381
        %v1383 = vrot.slane %v1349, %v1382
        %v1386 = vmul.f32 %v1371, %v1379
        %v1387 = vmul.f32 %v1367, %v1383
        %v1388 = vmul.f32 %v1372, %v1379
        %v1389 = vmul.f32 %v1368, %v1383
        %v1390 = vmul.f32 %v1373, %v1379
        %v1391 = vmul.f32 %v1369, %v1383
        %v1392 = vmul.f32 %v1374, %v1379
        %v1393 = vmul.f32 %v1370, %v1383
        %1394 = vset.pattern.permute.xlu0 6
        %1395 = vperm.xlu0 %1394, %v864
        %v1396 = vpop.permute.xlu0 %1395
        %1398 = vset.pattern.permute.xlu0 6
        %1399 = vperm.xlu0 %1398, %v865
        %v1400 = vpop.permute.xlu0 %1399
        %1402 = vset.pattern.permute.xlu0 6
        %1403 = vperm.xlu0 %1402, %v866
        %v1404 = vpop.permute.xlu0 %1403
        %1406 = vset.pattern.permute.xlu0 6
        %1407 = vperm.xlu0 %1406, %v867
        %v1408 = vpop.permute.xlu0 %1407
        %v1410 = vmul.f32 %v1396, %v1386
        %v1411 = vmul.f32 %v1396, %v1387
        %v1412 = vmul.f32 %v1400, %v1388
        %v1413 = vmul.f32 %v1400, %v1389
        %v1414 = vmul.f32 %v1404, %v1390
        %v1415 = vmul.f32 %v1404, %v1391
        %v1416 = vmul.f32 %v1408, %v1392
        %v1417 = vmul.f32 %v1408, %v1393
        %v1418 = vadd.f32 %v1340, %v1410
        %v1419 = vadd.f32 %v1341, %v1411
        %v1420 = vadd.f32 %v1342, %v1412
        %v1421 = vadd.f32 %v1343, %v1413
        %v1422 = vadd.f32 %v1344, %v1414
        %v1423 = vadd.f32 %v1345, %v1415
        %v1424 = vadd.f32 %v1346, %v1416
        %v1425 = vadd.f32 %v1347, %v1417
        %s1426 = scalar_lea.vmem %s4, 7
        %v1427 = vld [vmem:[%s1426] ss:$8 sm:$0x3]
        %v1429 = vlaneseq
        %v1430 = vshrl.u32 %v1429, 7
        %v1431 = vsub.s32 0, %v1430
        %v1432 = vrot.slane %v1427, %v1431
        %v1433 = vlaneseq
        %v1434 = vshrl.u32 %v1433, 7
        %v1435 = vsub.s32 1, %v1434
        %v1436 = vrot.slane %v1427, %v1435
        %v1439 = vmul.f32 %v1262, %v1432
        %v1440 = vmul.f32 %v1263, %v1436
        %v1441 = vmul.f32 %v1264, %v1432
        %v1442 = vmul.f32 %v1265, %v1436
        %v1443 = vmul.f32 %v1266, %v1432
        %v1444 = vmul.f32 %v1267, %v1436
        %v1445 = vmul.f32 %v1268, %v1432
        %v1446 = vmul.f32 %v1269, %v1436
        %1447 = vset.pattern.permute.xlu0 7
        %1448 = vperm.xlu0 %1447, %v864
        %v1449 = vpop.permute.xlu0 %1448
        %1451 = vset.pattern.permute.xlu0 7
        %1452 = vperm.xlu0 %1451, %v865
        %v1453 = vpop.permute.xlu0 %1452
        %1455 = vset.pattern.permute.xlu0 7
        %1456 = vperm.xlu0 %1455, %v866
        %v1457 = vpop.permute.xlu0 %1456
        %1459 = vset.pattern.permute.xlu0 7
        %1460 = vperm.xlu0 %1459, %v867
        %v1461 = vpop.permute.xlu0 %1460
        %v1463 = vmul.f32 %v1449, %v1439
        %v1464 = vmul.f32 %v1449, %v1440
        %v1465 = vmul.f32 %v1453, %v1441
        %v1466 = vmul.f32 %v1453, %v1442
        %v1467 = vmul.f32 %v1457, %v1443
        %v1468 = vmul.f32 %v1457, %v1444
        %v1469 = vmul.f32 %v1461, %v1445
        %v1470 = vmul.f32 %v1461, %v1446
        %v1471 = vadd.f32 %v1418, %v1463
        %v1472 = vadd.f32 %v1419, %v1464
        %v1473 = vadd.f32 %v1420, %v1465
        %v1474 = vadd.f32 %v1421, %v1466
        %v1475 = vadd.f32 %v1422, %v1467
        %v1476 = vadd.f32 %v1423, %v1468
        %v1477 = vadd.f32 %v1424, %v1469
        %v1478 = vadd.f32 %v1425, %v1470
        %s1479 = scalar_lea.vmem %s4, 16
        %v1480 = vld [vmem:[%s1479] ss:$8 sm:$0x3]
        %1481 = vrot.lane.b32.xlu0 %v1262, 112
        %v1482 = vpop.permute.xlu0 %1481
        %1483 = vrot.lane.b32.xlu0 %v1264, 112
        %v1484 = vpop.permute.xlu0 %1483
        %1485 = vrot.lane.b32.xlu0 %v1266, 112
        %v1486 = vpop.permute.xlu0 %1485
        %1487 = vrot.lane.b32.xlu0 %v1268, 112
        %v1488 = vpop.permute.xlu0 %1487
        %1489 = vrot.lane.b32.xlu0 %v1263, 112
        %v1490 = vpop.permute.xlu0 %1489
        %1491 = vrot.lane.b32.xlu0 %v1265, 112
        %v1492 = vpop.permute.xlu0 %1491
        %1493 = vrot.lane.b32.xlu0 %v1267, 112
        %v1494 = vpop.permute.xlu0 %1493
        %1495 = vrot.lane.b32.xlu0 %v1269, 112
        %v1496 = vpop.permute.xlu0 %1495
        %vm1497 = vcmp.lt.s32.totalorder %v886, 112
        %v1498 = vsel %vm1497, %v1482, %v1490
        %v1499 = vsel %vm1497, %v1484, %v1492
        %v1500 = vsel %vm1497, %v1486, %v1494
        %v1501 = vsel %vm1497, %v1488, %v1496
        %v1502 = vsel %vm1497, %v1490, %v1482
        %v1503 = vsel %vm1497, %v1492, %v1484
        %v1504 = vsel %vm1497, %v1494, %v1486
        %v1505 = vsel %vm1497, %v1496, %v1488
        %v1507 = vlaneseq
        %v1508 = vshrl.u32 %v1507, 7
        %v1509 = vsub.s32 0, %v1508
        %v1510 = vrot.slane %v1480, %v1509
        %v1511 = vlaneseq
        %v1512 = vshrl.u32 %v1511, 7
        %v1513 = vsub.s32 1, %v1512
        %v1514 = vrot.slane %v1480, %v1513
        %v1517 = vmul.f32 %v1498, %v1510
        %v1518 = vmul.f32 %v1502, %v1514
        %v1519 = vmul.f32 %v1499, %v1510
        %v1520 = vmul.f32 %v1503, %v1514
        %v1521 = vmul.f32 %v1500, %v1510
        %v1522 = vmul.f32 %v1504, %v1514
        %v1523 = vmul.f32 %v1501, %v1510
        %v1524 = vmul.f32 %v1505, %v1514
        %1525 = vset.pattern.permute.xlu0 8
        %1526 = vperm.xlu0 %1525, %v864
        %v1527 = vpop.permute.xlu0 %1526
        %1529 = vset.pattern.permute.xlu0 8
        %1530 = vperm.xlu0 %1529, %v865
        %v1531 = vpop.permute.xlu0 %1530
        %1533 = vset.pattern.permute.xlu0 8
        %1534 = vperm.xlu0 %1533, %v866
        %v1535 = vpop.permute.xlu0 %1534
        %1537 = vset.pattern.permute.xlu0 8
        %1538 = vperm.xlu0 %1537, %v867
        %v1539 = vpop.permute.xlu0 %1538
        %v1541 = vmul.f32 %v1527, %v1517
        %v1542 = vmul.f32 %v1527, %v1518
        %v1543 = vmul.f32 %v1531, %v1519
        %v1544 = vmul.f32 %v1531, %v1520
        %v1545 = vmul.f32 %v1535, %v1521
        %v1546 = vmul.f32 %v1535, %v1522
        %v1547 = vmul.f32 %v1539, %v1523
        %v1548 = vmul.f32 %v1539, %v1524
        %v1549 = vadd.f32 %v1471, %v1541
        %v1550 = vadd.f32 %v1472, %v1542
        %v1551 = vadd.f32 %v1473, %v1543
        %v1552 = vadd.f32 %v1474, %v1544
        %v1553 = vadd.f32 %v1475, %v1545
        %v1554 = vadd.f32 %v1476, %v1546
        %v1555 = vadd.f32 %v1477, %v1547
        %v1556 = vadd.f32 %v1478, %v1548
        %s1557 = scalar_lea.vmem %s4, 17
        %v1558 = vld [vmem:[%s1557] ss:$8 sm:$0x3]
        %1559 = vrot.lane.b32.xlu0 %v1262, 96
        %v1560 = vpop.permute.xlu0 %1559
        %1561 = vrot.lane.b32.xlu0 %v1264, 96
        %v1562 = vpop.permute.xlu0 %1561
        %1563 = vrot.lane.b32.xlu0 %v1266, 96
        %v1564 = vpop.permute.xlu0 %1563
        %1565 = vrot.lane.b32.xlu0 %v1268, 96
        %v1566 = vpop.permute.xlu0 %1565
        %1567 = vrot.lane.b32.xlu0 %v1263, 96
        %v1568 = vpop.permute.xlu0 %1567
        %1569 = vrot.lane.b32.xlu0 %v1265, 96
        %v1570 = vpop.permute.xlu0 %1569
        %1571 = vrot.lane.b32.xlu0 %v1267, 96
        %v1572 = vpop.permute.xlu0 %1571
        %1573 = vrot.lane.b32.xlu0 %v1269, 96
        %v1574 = vpop.permute.xlu0 %1573
        %vm1575 = vcmp.lt.s32.totalorder %v886, 96
        %v1576 = vsel %vm1575, %v1560, %v1568
        %v1577 = vsel %vm1575, %v1562, %v1570
        %v1578 = vsel %vm1575, %v1564, %v1572
        %v1579 = vsel %vm1575, %v1566, %v1574
        %v1580 = vsel %vm1575, %v1568, %v1560
        %v1581 = vsel %vm1575, %v1570, %v1562
        %v1582 = vsel %vm1575, %v1572, %v1564
        %v1583 = vsel %vm1575, %v1574, %v1566
        %v1585 = vlaneseq
        %v1586 = vshrl.u32 %v1585, 7
        %v1587 = vsub.s32 0, %v1586
        %v1588 = vrot.slane %v1558, %v1587
        %v1589 = vlaneseq
        %v1590 = vshrl.u32 %v1589, 7
        %v1591 = vsub.s32 1, %v1590
        %v1592 = vrot.slane %v1558, %v1591
        %v1595 = vmul.f32 %v1576, %v1588
        %v1596 = vmul.f32 %v1580, %v1592
        %v1597 = vmul.f32 %v1577, %v1588
        %v1598 = vmul.f32 %v1581, %v1592
        %v1599 = vmul.f32 %v1578, %v1588
        %v1600 = vmul.f32 %v1582, %v1592
        %v1601 = vmul.f32 %v1579, %v1588
        %v1602 = vmul.f32 %v1583, %v1592
        %1603 = vset.pattern.permute.xlu0 9
        %1604 = vperm.xlu0 %1603, %v864
        %v1605 = vpop.permute.xlu0 %1604
        %1607 = vset.pattern.permute.xlu0 9
        %1608 = vperm.xlu0 %1607, %v865
        %v1609 = vpop.permute.xlu0 %1608
        %1611 = vset.pattern.permute.xlu0 9
        %1612 = vperm.xlu0 %1611, %v866
        %v1613 = vpop.permute.xlu0 %1612
        %1615 = vset.pattern.permute.xlu0 9
        %1616 = vperm.xlu0 %1615, %v867
        %v1617 = vpop.permute.xlu0 %1616
        %v1619 = vmul.f32 %v1605, %v1595
        %v1620 = vmul.f32 %v1605, %v1596
        %v1621 = vmul.f32 %v1609, %v1597
        %v1622 = vmul.f32 %v1609, %v1598
        %v1623 = vmul.f32 %v1613, %v1599
        %v1624 = vmul.f32 %v1613, %v1600
        %v1625 = vmul.f32 %v1617, %v1601
        %v1626 = vmul.f32 %v1617, %v1602
        %v1627 = vadd.f32 %v1549, %v1619
        %v1628 = vadd.f32 %v1550, %v1620
        %v1629 = vadd.f32 %v1551, %v1621
        %v1630 = vadd.f32 %v1552, %v1622
        %v1631 = vadd.f32 %v1553, %v1623
        %v1632 = vadd.f32 %v1554, %v1624
        %v1633 = vadd.f32 %v1555, %v1625
        %v1634 = vadd.f32 %v1556, %v1626
        %1635 = vset.pattern.permute.xlu0 6
        %1636 = vperm.xlu0 %1635, %v1238
        %v1637 = vpop.permute.xlu0 %1636
        %1639 = vset.pattern.permute.xlu0 6
        %1640 = vperm.xlu0 %1639, %v1239
        %v1641 = vpop.permute.xlu0 %1640
        %1643 = vset.pattern.permute.xlu0 6
        %1644 = vperm.xlu0 %1643, %v1240
        %v1645 = vpop.permute.xlu0 %1644
        %1647 = vset.pattern.permute.xlu0 6
        %1648 = vperm.xlu0 %1647, %v1241
        %v1649 = vpop.permute.xlu0 %1648
        %v1651 = vadd.f32 %v1627, %v1637
        %v1652 = vadd.f32 %v1628, %v1637
        %v1653 = vadd.f32 %v1629, %v1641
        %v1654 = vadd.f32 %v1630, %v1641
        %v1655 = vadd.f32 %v1631, %v1645
        %v1656 = vadd.f32 %v1632, %v1645
        %v1657 = vadd.f32 %v1633, %v1649
        %v1658 = vadd.f32 %v1634, %v1649
        %s1659 = scalar_lea.vmem %s4, 18
        %v1660 = vld [vmem:[%s1659] ss:$8 sm:$0x3]
        %1661 = vrot.lane.b32.xlu0 %v1651, 15
        %v1662 = vpop.permute.xlu0 %1661
        %1663 = vrot.lane.b32.xlu0 %v1653, 15
        %v1664 = vpop.permute.xlu0 %1663
        %1665 = vrot.lane.b32.xlu0 %v1655, 15
        %v1666 = vpop.permute.xlu0 %1665
        %1667 = vrot.lane.b32.xlu0 %v1657, 15
        %v1668 = vpop.permute.xlu0 %1667
        %1669 = vrot.lane.b32.xlu0 %v1652, 15
        %v1670 = vpop.permute.xlu0 %1669
        %1671 = vrot.lane.b32.xlu0 %v1654, 15
        %v1672 = vpop.permute.xlu0 %1671
        %1673 = vrot.lane.b32.xlu0 %v1656, 15
        %v1674 = vpop.permute.xlu0 %1673
        %1675 = vrot.lane.b32.xlu0 %v1658, 15
        %v1676 = vpop.permute.xlu0 %1675
        %vm1677 = vcmp.lt.s32.totalorder %v886, 15
        %v1678 = vsel %vm1677, %v1662, %v1670
        %v1679 = vsel %vm1677, %v1664, %v1672
        %v1680 = vsel %vm1677, %v1666, %v1674
        %v1681 = vsel %vm1677, %v1668, %v1676
        %v1682 = vsel %vm1677, %v1670, %v1662
        %v1683 = vsel %vm1677, %v1672, %v1664
        %v1684 = vsel %vm1677, %v1674, %v1666
        %v1685 = vsel %vm1677, %v1676, %v1668
        %v1687 = vlaneseq
        %v1688 = vshrl.u32 %v1687, 7
        %v1689 = vsub.s32 0, %v1688
        %v1690 = vrot.slane %v1660, %v1689
        %v1691 = vlaneseq
        %v1692 = vshrl.u32 %v1691, 7
        %v1693 = vsub.s32 1, %v1692
        %v1694 = vrot.slane %v1660, %v1693
        %v1697 = vmul.f32 %v1682, %v1690
        %v1698 = vmul.f32 %v1678, %v1694
        %v1699 = vmul.f32 %v1683, %v1690
        %v1700 = vmul.f32 %v1679, %v1694
        %v1701 = vmul.f32 %v1684, %v1690
        %v1702 = vmul.f32 %v1680, %v1694
        %v1703 = vmul.f32 %v1685, %v1690
        %v1704 = vmul.f32 %v1681, %v1694
        %1705 = vset.pattern.permute.xlu0 10
        %1706 = vperm.xlu0 %1705, %v864
        %v1707 = vpop.permute.xlu0 %1706
        %1709 = vset.pattern.permute.xlu0 10
        %1710 = vperm.xlu0 %1709, %v865
        %v1711 = vpop.permute.xlu0 %1710
        %1713 = vset.pattern.permute.xlu0 10
        %1714 = vperm.xlu0 %1713, %v866
        %v1715 = vpop.permute.xlu0 %1714
        %1717 = vset.pattern.permute.xlu0 10
        %1718 = vperm.xlu0 %1717, %v867
        %v1719 = vpop.permute.xlu0 %1718
        %v1721 = vmul.f32 %v1707, %v1697
        %v1722 = vmul.f32 %v1707, %v1698
        %v1723 = vmul.f32 %v1711, %v1699
        %v1724 = vmul.f32 %v1711, %v1700
        %v1725 = vmul.f32 %v1715, %v1701
        %v1726 = vmul.f32 %v1715, %v1702
        %v1727 = vmul.f32 %v1719, %v1703
        %v1728 = vmul.f32 %v1719, %v1704
        %v1729 = vadd.f32 %v1721, 0.0
        %v1730 = vadd.f32 %v1722, 0.0
        %v1731 = vadd.f32 %v1723, 0.0
        %v1732 = vadd.f32 %v1724, 0.0
        %v1733 = vadd.f32 %v1725, 0.0
        %v1734 = vadd.f32 %v1726, 0.0
        %v1735 = vadd.f32 %v1727, 0.0
        %v1736 = vadd.f32 %v1728, 0.0
        %s1737 = scalar_lea.vmem %s4, 19
        %v1738 = vld [vmem:[%s1737] ss:$8 sm:$0x3]
        %1739 = vrot.lane.b32.xlu0 %v1651, 12
        %v1740 = vpop.permute.xlu0 %1739
        %1741 = vrot.lane.b32.xlu0 %v1653, 12
        %v1742 = vpop.permute.xlu0 %1741
        %1743 = vrot.lane.b32.xlu0 %v1655, 12
        %v1744 = vpop.permute.xlu0 %1743
        %1745 = vrot.lane.b32.xlu0 %v1657, 12
        %v1746 = vpop.permute.xlu0 %1745
        %1747 = vrot.lane.b32.xlu0 %v1652, 12
        %v1748 = vpop.permute.xlu0 %1747
        %1749 = vrot.lane.b32.xlu0 %v1654, 12
        %v1750 = vpop.permute.xlu0 %1749
        %1751 = vrot.lane.b32.xlu0 %v1656, 12
        %v1752 = vpop.permute.xlu0 %1751
        %1753 = vrot.lane.b32.xlu0 %v1658, 12
        %v1754 = vpop.permute.xlu0 %1753
        %vm1755 = vcmp.lt.s32.totalorder %v886, 12
        %v1756 = vsel %vm1755, %v1740, %v1748
        %v1757 = vsel %vm1755, %v1742, %v1750
        %v1758 = vsel %vm1755, %v1744, %v1752
        %v1759 = vsel %vm1755, %v1746, %v1754
        %v1760 = vsel %vm1755, %v1748, %v1740
        %v1761 = vsel %vm1755, %v1750, %v1742
        %v1762 = vsel %vm1755, %v1752, %v1744
        %v1763 = vsel %vm1755, %v1754, %v1746
        %v1765 = vlaneseq
        %v1766 = vshrl.u32 %v1765, 7
        %v1767 = vsub.s32 0, %v1766
        %v1768 = vrot.slane %v1738, %v1767
        %v1769 = vlaneseq
        %v1770 = vshrl.u32 %v1769, 7
        %v1771 = vsub.s32 1, %v1770
        %v1772 = vrot.slane %v1738, %v1771
        %v1775 = vmul.f32 %v1760, %v1768
        %v1776 = vmul.f32 %v1756, %v1772
        %v1777 = vmul.f32 %v1761, %v1768
        %v1778 = vmul.f32 %v1757, %v1772
        %v1779 = vmul.f32 %v1762, %v1768
        %v1780 = vmul.f32 %v1758, %v1772
        %v1781 = vmul.f32 %v1763, %v1768
        %v1782 = vmul.f32 %v1759, %v1772
        %1783 = vset.pattern.permute.xlu0 11
        %1784 = vperm.xlu0 %1783, %v864
        %v1785 = vpop.permute.xlu0 %1784
        %1787 = vset.pattern.permute.xlu0 11
        %1788 = vperm.xlu0 %1787, %v865
        %v1789 = vpop.permute.xlu0 %1788
        %1791 = vset.pattern.permute.xlu0 11
        %1792 = vperm.xlu0 %1791, %v866
        %v1793 = vpop.permute.xlu0 %1792
        %1795 = vset.pattern.permute.xlu0 11
        %1796 = vperm.xlu0 %1795, %v867
        %v1797 = vpop.permute.xlu0 %1796
        %v1799 = vmul.f32 %v1785, %v1775
        %v1800 = vmul.f32 %v1785, %v1776
        %v1801 = vmul.f32 %v1789, %v1777
        %v1802 = vmul.f32 %v1789, %v1778
        %v1803 = vmul.f32 %v1793, %v1779
        %v1804 = vmul.f32 %v1793, %v1780
        %v1805 = vmul.f32 %v1797, %v1781
        %v1806 = vmul.f32 %v1797, %v1782
        %v1807 = vadd.f32 %v1729, %v1799
        %v1808 = vadd.f32 %v1730, %v1800
        %v1809 = vadd.f32 %v1731, %v1801
        %v1810 = vadd.f32 %v1732, %v1802
        %v1811 = vadd.f32 %v1733, %v1803
        %v1812 = vadd.f32 %v1734, %v1804
        %v1813 = vadd.f32 %v1735, %v1805
        %v1814 = vadd.f32 %v1736, %v1806
        %s1815 = scalar_lea.vmem %s4, 20
        %v1816 = vld [vmem:[%s1815] ss:$8 sm:$0x3]
        %1817 = vrot.lane.b32.xlu0 %v1651, 9
        %v1818 = vpop.permute.xlu0 %1817
        %1819 = vrot.lane.b32.xlu0 %v1653, 9
        %v1820 = vpop.permute.xlu0 %1819
        %1821 = vrot.lane.b32.xlu0 %v1655, 9
        %v1822 = vpop.permute.xlu0 %1821
        %1823 = vrot.lane.b32.xlu0 %v1657, 9
        %v1824 = vpop.permute.xlu0 %1823
        %1825 = vrot.lane.b32.xlu0 %v1652, 9
        %v1826 = vpop.permute.xlu0 %1825
        %1827 = vrot.lane.b32.xlu0 %v1654, 9
        %v1828 = vpop.permute.xlu0 %1827
        %1829 = vrot.lane.b32.xlu0 %v1656, 9
        %v1830 = vpop.permute.xlu0 %1829
        %1831 = vrot.lane.b32.xlu0 %v1658, 9
        %v1832 = vpop.permute.xlu0 %1831
        %vm1833 = vcmp.lt.s32.totalorder %v886, 9
        %v1834 = vsel %vm1833, %v1818, %v1826
        %v1835 = vsel %vm1833, %v1820, %v1828
        %v1836 = vsel %vm1833, %v1822, %v1830
        %v1837 = vsel %vm1833, %v1824, %v1832
        %v1838 = vsel %vm1833, %v1826, %v1818
        %v1839 = vsel %vm1833, %v1828, %v1820
        %v1840 = vsel %vm1833, %v1830, %v1822
        %v1841 = vsel %vm1833, %v1832, %v1824
        %v1843 = vlaneseq
        %v1844 = vshrl.u32 %v1843, 7
        %v1845 = vsub.s32 0, %v1844
        %v1846 = vrot.slane %v1816, %v1845
        %v1847 = vlaneseq
        %v1848 = vshrl.u32 %v1847, 7
        %v1849 = vsub.s32 1, %v1848
        %v1850 = vrot.slane %v1816, %v1849
        %v1853 = vmul.f32 %v1838, %v1846
        %v1854 = vmul.f32 %v1834, %v1850
        %v1855 = vmul.f32 %v1839, %v1846
        %v1856 = vmul.f32 %v1835, %v1850
        %v1857 = vmul.f32 %v1840, %v1846
        %v1858 = vmul.f32 %v1836, %v1850
        %v1859 = vmul.f32 %v1841, %v1846
        %v1860 = vmul.f32 %v1837, %v1850
        %1861 = vset.pattern.permute.xlu0 12
        %1862 = vperm.xlu0 %1861, %v864
        %v1863 = vpop.permute.xlu0 %1862
        %1865 = vset.pattern.permute.xlu0 12
        %1866 = vperm.xlu0 %1865, %v865
        %v1867 = vpop.permute.xlu0 %1866
        %1869 = vset.pattern.permute.xlu0 12
        %1870 = vperm.xlu0 %1869, %v866
        %v1871 = vpop.permute.xlu0 %1870
        %1873 = vset.pattern.permute.xlu0 12
        %1874 = vperm.xlu0 %1873, %v867
        %v1875 = vpop.permute.xlu0 %1874
        %v1877 = vmul.f32 %v1863, %v1853
        %v1878 = vmul.f32 %v1863, %v1854
        %v1879 = vmul.f32 %v1867, %v1855
        %v1880 = vmul.f32 %v1867, %v1856
        %v1881 = vmul.f32 %v1871, %v1857
        %v1882 = vmul.f32 %v1871, %v1858
        %v1883 = vmul.f32 %v1875, %v1859
        %v1884 = vmul.f32 %v1875, %v1860
        %v1885 = vadd.f32 %v1807, %v1877
        %v1886 = vadd.f32 %v1808, %v1878
        %v1887 = vadd.f32 %v1809, %v1879
        %v1888 = vadd.f32 %v1810, %v1880
        %v1889 = vadd.f32 %v1811, %v1881
        %v1890 = vadd.f32 %v1812, %v1882
        %v1891 = vadd.f32 %v1813, %v1883
        %v1892 = vadd.f32 %v1814, %v1884
        %s1893 = scalar_lea.vmem %s4, 21
        %v1894 = vld [vmem:[%s1893] ss:$8 sm:$0x3]
        %1895 = vrot.lane.b32.xlu0 %v1651, 6
        %v1896 = vpop.permute.xlu0 %1895
        %1897 = vrot.lane.b32.xlu0 %v1653, 6
        %v1898 = vpop.permute.xlu0 %1897
        %1899 = vrot.lane.b32.xlu0 %v1655, 6
        %v1900 = vpop.permute.xlu0 %1899
        %1901 = vrot.lane.b32.xlu0 %v1657, 6
        %v1902 = vpop.permute.xlu0 %1901
        %1903 = vrot.lane.b32.xlu0 %v1652, 6
        %v1904 = vpop.permute.xlu0 %1903
        %1905 = vrot.lane.b32.xlu0 %v1654, 6
        %v1906 = vpop.permute.xlu0 %1905
        %1907 = vrot.lane.b32.xlu0 %v1656, 6
        %v1908 = vpop.permute.xlu0 %1907
        %1909 = vrot.lane.b32.xlu0 %v1658, 6
        %v1910 = vpop.permute.xlu0 %1909
        %vm1911 = vcmp.lt.s32.totalorder %v886, 6
        %v1912 = vsel %vm1911, %v1896, %v1904
        %v1913 = vsel %vm1911, %v1898, %v1906
        %v1914 = vsel %vm1911, %v1900, %v1908
        %v1915 = vsel %vm1911, %v1902, %v1910
        %v1916 = vsel %vm1911, %v1904, %v1896
        %v1917 = vsel %vm1911, %v1906, %v1898
        %v1918 = vsel %vm1911, %v1908, %v1900
        %v1919 = vsel %vm1911, %v1910, %v1902
        %v1921 = vlaneseq
        %v1922 = vshrl.u32 %v1921, 7
        %v1923 = vsub.s32 0, %v1922
        %v1924 = vrot.slane %v1894, %v1923
        %v1925 = vlaneseq
        %v1926 = vshrl.u32 %v1925, 7
        %v1927 = vsub.s32 1, %v1926
        %v1928 = vrot.slane %v1894, %v1927
        %v1931 = vmul.f32 %v1916, %v1924
        %v1932 = vmul.f32 %v1912, %v1928
        %v1933 = vmul.f32 %v1917, %v1924
        %v1934 = vmul.f32 %v1913, %v1928
        %v1935 = vmul.f32 %v1918, %v1924
        %v1936 = vmul.f32 %v1914, %v1928
        %v1937 = vmul.f32 %v1919, %v1924
        %v1938 = vmul.f32 %v1915, %v1928
        %1939 = vset.pattern.permute.xlu0 13
        %1940 = vperm.xlu0 %1939, %v864
        %v1941 = vpop.permute.xlu0 %1940
        %1943 = vset.pattern.permute.xlu0 13
        %1944 = vperm.xlu0 %1943, %v865
        %v1945 = vpop.permute.xlu0 %1944
        %1947 = vset.pattern.permute.xlu0 13
        %1948 = vperm.xlu0 %1947, %v866
        %v1949 = vpop.permute.xlu0 %1948
        %1951 = vset.pattern.permute.xlu0 13
        %1952 = vperm.xlu0 %1951, %v867
        %v1953 = vpop.permute.xlu0 %1952
        %v1955 = vmul.f32 %v1941, %v1931
        %v1956 = vmul.f32 %v1941, %v1932
        %v1957 = vmul.f32 %v1945, %v1933
        %v1958 = vmul.f32 %v1945, %v1934
        %v1959 = vmul.f32 %v1949, %v1935
        %v1960 = vmul.f32 %v1949, %v1936
        %v1961 = vmul.f32 %v1953, %v1937
        %v1962 = vmul.f32 %v1953, %v1938
        %v1963 = vadd.f32 %v1885, %v1955
        %v1964 = vadd.f32 %v1886, %v1956
        %v1965 = vadd.f32 %v1887, %v1957
        %v1966 = vadd.f32 %v1888, %v1958
        %v1967 = vadd.f32 %v1889, %v1959
        %v1968 = vadd.f32 %v1890, %v1960
        %v1969 = vadd.f32 %v1891, %v1961
        %v1970 = vadd.f32 %v1892, %v1962
        %s1971 = scalar_lea.vmem %s4, 22
        %v1972 = vld [vmem:[%s1971] ss:$8 sm:$0x3]
        %1973 = vrot.lane.b32.xlu0 %v1651, 3
        %v1974 = vpop.permute.xlu0 %1973
        %1975 = vrot.lane.b32.xlu0 %v1653, 3
        %v1976 = vpop.permute.xlu0 %1975
        %1977 = vrot.lane.b32.xlu0 %v1655, 3
        %v1978 = vpop.permute.xlu0 %1977
        %1979 = vrot.lane.b32.xlu0 %v1657, 3
        %v1980 = vpop.permute.xlu0 %1979
        %1981 = vrot.lane.b32.xlu0 %v1652, 3
        %v1982 = vpop.permute.xlu0 %1981
        %1983 = vrot.lane.b32.xlu0 %v1654, 3
        %v1984 = vpop.permute.xlu0 %1983
        %1985 = vrot.lane.b32.xlu0 %v1656, 3
        %v1986 = vpop.permute.xlu0 %1985
        %1987 = vrot.lane.b32.xlu0 %v1658, 3
        %v1988 = vpop.permute.xlu0 %1987
        %vm1989 = vcmp.lt.s32.totalorder %v886, 3
        %v1990 = vsel %vm1989, %v1974, %v1982
        %v1991 = vsel %vm1989, %v1976, %v1984
        %v1992 = vsel %vm1989, %v1978, %v1986
        %v1993 = vsel %vm1989, %v1980, %v1988
        %v1994 = vsel %vm1989, %v1982, %v1974
        %v1995 = vsel %vm1989, %v1984, %v1976
        %v1996 = vsel %vm1989, %v1986, %v1978
        %v1997 = vsel %vm1989, %v1988, %v1980
        %v1999 = vlaneseq
        %v2000 = vshrl.u32 %v1999, 7
        %v2001 = vsub.s32 0, %v2000
        %v2002 = vrot.slane %v1972, %v2001
        %v2003 = vlaneseq
        %v2004 = vshrl.u32 %v2003, 7
        %v2005 = vsub.s32 1, %v2004
        %v2006 = vrot.slane %v1972, %v2005
        %v2009 = vmul.f32 %v1994, %v2002
        %v2010 = vmul.f32 %v1990, %v2006
        %v2011 = vmul.f32 %v1995, %v2002
        %v2012 = vmul.f32 %v1991, %v2006
        %v2013 = vmul.f32 %v1996, %v2002
        %v2014 = vmul.f32 %v1992, %v2006
        %v2015 = vmul.f32 %v1997, %v2002
        %v2016 = vmul.f32 %v1993, %v2006
        %2017 = vset.pattern.permute.xlu0 14
        %2018 = vperm.xlu0 %2017, %v864
        %v2019 = vpop.permute.xlu0 %2018
        %2021 = vset.pattern.permute.xlu0 14
        %2022 = vperm.xlu0 %2021, %v865
        %v2023 = vpop.permute.xlu0 %2022
        %2025 = vset.pattern.permute.xlu0 14
        %2026 = vperm.xlu0 %2025, %v866
        %v2027 = vpop.permute.xlu0 %2026
        %2029 = vset.pattern.permute.xlu0 14
        %2030 = vperm.xlu0 %2029, %v867
        %v2031 = vpop.permute.xlu0 %2030
        %v2033 = vmul.f32 %v2019, %v2009
        %v2034 = vmul.f32 %v2019, %v2010
        %v2035 = vmul.f32 %v2023, %v2011
        %v2036 = vmul.f32 %v2023, %v2012
        %v2037 = vmul.f32 %v2027, %v2013
        %v2038 = vmul.f32 %v2027, %v2014
        %v2039 = vmul.f32 %v2031, %v2015
        %v2040 = vmul.f32 %v2031, %v2016
        %v2041 = vadd.f32 %v1963, %v2033
        %v2042 = vadd.f32 %v1964, %v2034
        %v2043 = vadd.f32 %v1965, %v2035
        %v2044 = vadd.f32 %v1966, %v2036
        %v2045 = vadd.f32 %v1967, %v2037
        %v2046 = vadd.f32 %v1968, %v2038
        %v2047 = vadd.f32 %v1969, %v2039
        %v2048 = vadd.f32 %v1970, %v2040
        %s2049 = scalar_lea.vmem %s4, 23
        %v2050 = vld [vmem:[%s2049] ss:$8 sm:$0x3]
        %v2052 = vlaneseq
        %v2053 = vshrl.u32 %v2052, 7
        %v2054 = vsub.s32 0, %v2053
        %v2055 = vrot.slane %v2050, %v2054
        %v2056 = vlaneseq
        %v2057 = vshrl.u32 %v2056, 7
        %v2058 = vsub.s32 1, %v2057
        %v2059 = vrot.slane %v2050, %v2058
        %v2062 = vmul.f32 %v1651, %v2055
        %v2063 = vmul.f32 %v1652, %v2059
        %v2064 = vmul.f32 %v1653, %v2055
        %v2065 = vmul.f32 %v1654, %v2059
        %v2066 = vmul.f32 %v1655, %v2055
        %v2067 = vmul.f32 %v1656, %v2059
        %v2068 = vmul.f32 %v1657, %v2055
        %v2069 = vmul.f32 %v1658, %v2059
        %2070 = vset.pattern.permute.xlu0 15
        %2071 = vperm.xlu0 %2070, %v864
        %v2072 = vpop.permute.xlu0 %2071
        %2074 = vset.pattern.permute.xlu0 15
        %2075 = vperm.xlu0 %2074, %v865
        %v2076 = vpop.permute.xlu0 %2075
        %2078 = vset.pattern.permute.xlu0 15
        %2079 = vperm.xlu0 %2078, %v866
        %v2080 = vpop.permute.xlu0 %2079
        %2082 = vset.pattern.permute.xlu0 15
        %2083 = vperm.xlu0 %2082, %v867
        %v2084 = vpop.permute.xlu0 %2083
        %v2086 = vmul.f32 %v2072, %v2062
        %v2087 = vmul.f32 %v2072, %v2063
        %v2088 = vmul.f32 %v2076, %v2064
        %v2089 = vmul.f32 %v2076, %v2065
        %v2090 = vmul.f32 %v2080, %v2066
        %v2091 = vmul.f32 %v2080, %v2067
        %v2092 = vmul.f32 %v2084, %v2068
        %v2093 = vmul.f32 %v2084, %v2069
        %v2094 = vadd.f32 %v2041, %v2086
        %v2095 = vadd.f32 %v2042, %v2087
        %v2096 = vadd.f32 %v2043, %v2088
        %v2097 = vadd.f32 %v2044, %v2089
        %v2098 = vadd.f32 %v2045, %v2090
        %v2099 = vadd.f32 %v2046, %v2091
        %v2100 = vadd.f32 %v2047, %v2092
        %v2101 = vadd.f32 %v2048, %v2093
        %s2102 = scalar_lea.vmem %s4, 32
        %v2103 = vld [vmem:[%s2102] ss:$8 sm:$0x3]
        %2104 = vrot.lane.b32.xlu0 %v1651, 125
        %v2105 = vpop.permute.xlu0 %2104
        %2106 = vrot.lane.b32.xlu0 %v1653, 125
        %v2107 = vpop.permute.xlu0 %2106
        %2108 = vrot.lane.b32.xlu0 %v1655, 125
        %v2109 = vpop.permute.xlu0 %2108
        %2110 = vrot.lane.b32.xlu0 %v1657, 125
        %v2111 = vpop.permute.xlu0 %2110
        %2112 = vrot.lane.b32.xlu0 %v1652, 125
        %v2113 = vpop.permute.xlu0 %2112
        %2114 = vrot.lane.b32.xlu0 %v1654, 125
        %v2115 = vpop.permute.xlu0 %2114
        %2116 = vrot.lane.b32.xlu0 %v1656, 125
        %v2117 = vpop.permute.xlu0 %2116
        %2118 = vrot.lane.b32.xlu0 %v1658, 125
        %v2119 = vpop.permute.xlu0 %2118
        %vm2120 = vcmp.lt.s32.totalorder %v886, 125
        %v2121 = vsel %vm2120, %v2105, %v2113
        %v2122 = vsel %vm2120, %v2107, %v2115
        %v2123 = vsel %vm2120, %v2109, %v2117
        %v2124 = vsel %vm2120, %v2111, %v2119
        %v2125 = vsel %vm2120, %v2113, %v2105
        %v2126 = vsel %vm2120, %v2115, %v2107
        %v2127 = vsel %vm2120, %v2117, %v2109
        %v2128 = vsel %vm2120, %v2119, %v2111
        %v2130 = vlaneseq
        %v2131 = vshrl.u32 %v2130, 7
        %v2132 = vsub.s32 0, %v2131
        %v2133 = vrot.slane %v2103, %v2132
        %v2134 = vlaneseq
        %v2135 = vshrl.u32 %v2134, 7
        %v2136 = vsub.s32 1, %v2135
        %v2137 = vrot.slane %v2103, %v2136
        %v2140 = vmul.f32 %v2121, %v2133
        %v2141 = vmul.f32 %v2125, %v2137
        %v2142 = vmul.f32 %v2122, %v2133
        %v2143 = vmul.f32 %v2126, %v2137
        %v2144 = vmul.f32 %v2123, %v2133
        %v2145 = vmul.f32 %v2127, %v2137
        %v2146 = vmul.f32 %v2124, %v2133
        %v2147 = vmul.f32 %v2128, %v2137
        %2148 = vset.pattern.permute.xlu0 16
        %2149 = vperm.xlu0 %2148, %v864
        %v2150 = vpop.permute.xlu0 %2149
        %2152 = vset.pattern.permute.xlu0 16
        %2153 = vperm.xlu0 %2152, %v865
        %v2154 = vpop.permute.xlu0 %2153
        %2156 = vset.pattern.permute.xlu0 16
        %2157 = vperm.xlu0 %2156, %v866
        %v2158 = vpop.permute.xlu0 %2157
        %2160 = vset.pattern.permute.xlu0 16
        %2161 = vperm.xlu0 %2160, %v867
        %v2162 = vpop.permute.xlu0 %2161
        %v2164 = vmul.f32 %v2150, %v2140
        %v2165 = vmul.f32 %v2150, %v2141
        %v2166 = vmul.f32 %v2154, %v2142
        %v2167 = vmul.f32 %v2154, %v2143
        %v2168 = vmul.f32 %v2158, %v2144
        %v2169 = vmul.f32 %v2158, %v2145
        %v2170 = vmul.f32 %v2162, %v2146
        %v2171 = vmul.f32 %v2162, %v2147
        %v2172 = vadd.f32 %v2094, %v2164
        %v2173 = vadd.f32 %v2095, %v2165
        %v2174 = vadd.f32 %v2096, %v2166
        %v2175 = vadd.f32 %v2097, %v2167
        %v2176 = vadd.f32 %v2098, %v2168
        %v2177 = vadd.f32 %v2099, %v2169
        %v2178 = vadd.f32 %v2100, %v2170
        %v2179 = vadd.f32 %v2101, %v2171
        %s2180 = scalar_lea.vmem %s4, 33
        %v2181 = vld [vmem:[%s2180] ss:$8 sm:$0x3]
        %2182 = vrot.lane.b32.xlu0 %v1651, 122
        %v2183 = vpop.permute.xlu0 %2182
        %2184 = vrot.lane.b32.xlu0 %v1653, 122
        %v2185 = vpop.permute.xlu0 %2184
        %2186 = vrot.lane.b32.xlu0 %v1655, 122
        %v2187 = vpop.permute.xlu0 %2186
        %2188 = vrot.lane.b32.xlu0 %v1657, 122
        %v2189 = vpop.permute.xlu0 %2188
        %2190 = vrot.lane.b32.xlu0 %v1652, 122
        %v2191 = vpop.permute.xlu0 %2190
        %2192 = vrot.lane.b32.xlu0 %v1654, 122
        %v2193 = vpop.permute.xlu0 %2192
        %2194 = vrot.lane.b32.xlu0 %v1656, 122
        %v2195 = vpop.permute.xlu0 %2194
        %2196 = vrot.lane.b32.xlu0 %v1658, 122
        %v2197 = vpop.permute.xlu0 %2196
        %vm2198 = vcmp.lt.s32.totalorder %v886, 122
        %v2199 = vsel %vm2198, %v2183, %v2191
        %v2200 = vsel %vm2198, %v2185, %v2193
        %v2201 = vsel %vm2198, %v2187, %v2195
        %v2202 = vsel %vm2198, %v2189, %v2197
        %v2203 = vsel %vm2198, %v2191, %v2183
        %v2204 = vsel %vm2198, %v2193, %v2185
        %v2205 = vsel %vm2198, %v2195, %v2187
        %v2206 = vsel %vm2198, %v2197, %v2189
        %v2208 = vlaneseq
        %v2209 = vshrl.u32 %v2208, 7
        %v2210 = vsub.s32 0, %v2209
        %v2211 = vrot.slane %v2181, %v2210
        %v2212 = vlaneseq
        %v2213 = vshrl.u32 %v2212, 7
        %v2214 = vsub.s32 1, %v2213
        %v2215 = vrot.slane %v2181, %v2214
        %v2218 = vmul.f32 %v2199, %v2211
        %v2219 = vmul.f32 %v2203, %v2215
        %v2220 = vmul.f32 %v2200, %v2211
        %v2221 = vmul.f32 %v2204, %v2215
        %v2222 = vmul.f32 %v2201, %v2211
        %v2223 = vmul.f32 %v2205, %v2215
        %v2224 = vmul.f32 %v2202, %v2211
        %v2225 = vmul.f32 %v2206, %v2215
        %2226 = vset.pattern.permute.xlu0 17
        %2227 = vperm.xlu0 %2226, %v864
        %v2228 = vpop.permute.xlu0 %2227
        %2230 = vset.pattern.permute.xlu0 17
        %2231 = vperm.xlu0 %2230, %v865
        %v2232 = vpop.permute.xlu0 %2231
        %2234 = vset.pattern.permute.xlu0 17
        %2235 = vperm.xlu0 %2234, %v866
        %v2236 = vpop.permute.xlu0 %2235
        %2238 = vset.pattern.permute.xlu0 17
        %2239 = vperm.xlu0 %2238, %v867
        %v2240 = vpop.permute.xlu0 %2239
        %v2242 = vmul.f32 %v2228, %v2218
        %v2243 = vmul.f32 %v2228, %v2219
        %v2244 = vmul.f32 %v2232, %v2220
        %v2245 = vmul.f32 %v2232, %v2221
        %v2246 = vmul.f32 %v2236, %v2222
        %v2247 = vmul.f32 %v2236, %v2223
        %v2248 = vmul.f32 %v2240, %v2224
        %v2249 = vmul.f32 %v2240, %v2225
        %v2250 = vadd.f32 %v2172, %v2242
        %v2251 = vadd.f32 %v2173, %v2243
        %v2252 = vadd.f32 %v2174, %v2244
        %v2253 = vadd.f32 %v2175, %v2245
        %v2254 = vadd.f32 %v2176, %v2246
        %v2255 = vadd.f32 %v2177, %v2247
        %v2256 = vadd.f32 %v2178, %v2248
        %v2257 = vadd.f32 %v2179, %v2249
        %s2258 = scalar_lea.vmem %s4, 34
        %v2259 = vld [vmem:[%s2258] ss:$8 sm:$0x3]
        %2260 = vrot.lane.b32.xlu0 %v1651, 119
        %v2261 = vpop.permute.xlu0 %2260
        %2262 = vrot.lane.b32.xlu0 %v1653, 119
        %v2263 = vpop.permute.xlu0 %2262
        %2264 = vrot.lane.b32.xlu0 %v1655, 119
        %v2265 = vpop.permute.xlu0 %2264
        %2266 = vrot.lane.b32.xlu0 %v1657, 119
        %v2267 = vpop.permute.xlu0 %2266
        %2268 = vrot.lane.b32.xlu0 %v1652, 119
        %v2269 = vpop.permute.xlu0 %2268
        %2270 = vrot.lane.b32.xlu0 %v1654, 119
        %v2271 = vpop.permute.xlu0 %2270
        %2272 = vrot.lane.b32.xlu0 %v1656, 119
        %v2273 = vpop.permute.xlu0 %2272
        %2274 = vrot.lane.b32.xlu0 %v1658, 119
        %v2275 = vpop.permute.xlu0 %2274
        %vm2276 = vcmp.lt.s32.totalorder %v886, 119
        %v2277 = vsel %vm2276, %v2261, %v2269
        %v2278 = vsel %vm2276, %v2263, %v2271
        %v2279 = vsel %vm2276, %v2265, %v2273
        %v2280 = vsel %vm2276, %v2267, %v2275
        %v2281 = vsel %vm2276, %v2269, %v2261
        %v2282 = vsel %vm2276, %v2271, %v2263
        %v2283 = vsel %vm2276, %v2273, %v2265
        %v2284 = vsel %vm2276, %v2275, %v2267
        %v2286 = vlaneseq
        %v2287 = vshrl.u32 %v2286, 7
        %v2288 = vsub.s32 0, %v2287
        %v2289 = vrot.slane %v2259, %v2288
        %v2290 = vlaneseq
        %v2291 = vshrl.u32 %v2290, 7
        %v2292 = vsub.s32 1, %v2291
        %v2293 = vrot.slane %v2259, %v2292
        %v2296 = vmul.f32 %v2277, %v2289
        %v2297 = vmul.f32 %v2281, %v2293
        %v2298 = vmul.f32 %v2278, %v2289
        %v2299 = vmul.f32 %v2282, %v2293
        %v2300 = vmul.f32 %v2279, %v2289
        %v2301 = vmul.f32 %v2283, %v2293
        %v2302 = vmul.f32 %v2280, %v2289
        %v2303 = vmul.f32 %v2284, %v2293
        %2304 = vset.pattern.permute.xlu0 18
        %2305 = vperm.xlu0 %2304, %v864
        %v2306 = vpop.permute.xlu0 %2305
        %2308 = vset.pattern.permute.xlu0 18
        %2309 = vperm.xlu0 %2308, %v865
        %v2310 = vpop.permute.xlu0 %2309
        %2312 = vset.pattern.permute.xlu0 18
        %2313 = vperm.xlu0 %2312, %v866
        %v2314 = vpop.permute.xlu0 %2313
        %2316 = vset.pattern.permute.xlu0 18
        %2317 = vperm.xlu0 %2316, %v867
        %v2318 = vpop.permute.xlu0 %2317
        %v2320 = vmul.f32 %v2306, %v2296
        %v2321 = vmul.f32 %v2306, %v2297
        %v2322 = vmul.f32 %v2310, %v2298
        %v2323 = vmul.f32 %v2310, %v2299
        %v2324 = vmul.f32 %v2314, %v2300
        %v2325 = vmul.f32 %v2314, %v2301
        %v2326 = vmul.f32 %v2318, %v2302
        %v2327 = vmul.f32 %v2318, %v2303
        %v2328 = vadd.f32 %v2250, %v2320
        %v2329 = vadd.f32 %v2251, %v2321
        %v2330 = vadd.f32 %v2252, %v2322
        %v2331 = vadd.f32 %v2253, %v2323
        %v2332 = vadd.f32 %v2254, %v2324
        %v2333 = vadd.f32 %v2255, %v2325
        %v2334 = vadd.f32 %v2256, %v2326
        %v2335 = vadd.f32 %v2257, %v2327
        %s2336 = scalar_lea.vmem %s4, 35
        %v2337 = vld [vmem:[%s2336] ss:$8 sm:$0x3]
        %2338 = vrot.lane.b32.xlu0 %v1651, 116
        %v2339 = vpop.permute.xlu0 %2338
        %2340 = vrot.lane.b32.xlu0 %v1653, 116
        %v2341 = vpop.permute.xlu0 %2340
        %2342 = vrot.lane.b32.xlu0 %v1655, 116
        %v2343 = vpop.permute.xlu0 %2342
        %2344 = vrot.lane.b32.xlu0 %v1657, 116
        %v2345 = vpop.permute.xlu0 %2344
        %2346 = vrot.lane.b32.xlu0 %v1652, 116
        %v2347 = vpop.permute.xlu0 %2346
        %2348 = vrot.lane.b32.xlu0 %v1654, 116
        %v2349 = vpop.permute.xlu0 %2348
        %2350 = vrot.lane.b32.xlu0 %v1656, 116
        %v2351 = vpop.permute.xlu0 %2350
        %2352 = vrot.lane.b32.xlu0 %v1658, 116
        %v2353 = vpop.permute.xlu0 %2352
        %vm2354 = vcmp.lt.s32.totalorder %v886, 116
        %v2355 = vsel %vm2354, %v2339, %v2347
        %v2356 = vsel %vm2354, %v2341, %v2349
        %v2357 = vsel %vm2354, %v2343, %v2351
        %v2358 = vsel %vm2354, %v2345, %v2353
        %v2359 = vsel %vm2354, %v2347, %v2339
        %v2360 = vsel %vm2354, %v2349, %v2341
        %v2361 = vsel %vm2354, %v2351, %v2343
        %v2362 = vsel %vm2354, %v2353, %v2345
        %v2364 = vlaneseq
        %v2365 = vshrl.u32 %v2364, 7
        %v2366 = vsub.s32 0, %v2365
        %v2367 = vrot.slane %v2337, %v2366
        %v2368 = vlaneseq
        %v2369 = vshrl.u32 %v2368, 7
        %v2370 = vsub.s32 1, %v2369
        %v2371 = vrot.slane %v2337, %v2370
        %v2374 = vmul.f32 %v2355, %v2367
        %v2375 = vmul.f32 %v2359, %v2371
        %v2376 = vmul.f32 %v2356, %v2367
        %v2377 = vmul.f32 %v2360, %v2371
        %v2378 = vmul.f32 %v2357, %v2367
        %v2379 = vmul.f32 %v2361, %v2371
        %v2380 = vmul.f32 %v2358, %v2367
        %v2381 = vmul.f32 %v2362, %v2371
        %2382 = vset.pattern.permute.xlu0 19
        %2383 = vperm.xlu0 %2382, %v864
        %v2384 = vpop.permute.xlu0 %2383
        %2386 = vset.pattern.permute.xlu0 19
        %2387 = vperm.xlu0 %2386, %v865
        %v2388 = vpop.permute.xlu0 %2387
        %2390 = vset.pattern.permute.xlu0 19
        %2391 = vperm.xlu0 %2390, %v866
        %v2392 = vpop.permute.xlu0 %2391
        %2394 = vset.pattern.permute.xlu0 19
        %2395 = vperm.xlu0 %2394, %v867
        %v2396 = vpop.permute.xlu0 %2395
        %v2398 = vmul.f32 %v2384, %v2374
        %v2399 = vmul.f32 %v2384, %v2375
        %v2400 = vmul.f32 %v2388, %v2376
        %v2401 = vmul.f32 %v2388, %v2377
        %v2402 = vmul.f32 %v2392, %v2378
        %v2403 = vmul.f32 %v2392, %v2379
        %v2404 = vmul.f32 %v2396, %v2380
        %v2405 = vmul.f32 %v2396, %v2381
        %v2406 = vadd.f32 %v2328, %v2398
        %v2407 = vadd.f32 %v2329, %v2399
        %v2408 = vadd.f32 %v2330, %v2400
        %v2409 = vadd.f32 %v2331, %v2401
        %v2410 = vadd.f32 %v2332, %v2402
        %v2411 = vadd.f32 %v2333, %v2403
        %v2412 = vadd.f32 %v2334, %v2404
        %v2413 = vadd.f32 %v2335, %v2405
        %s2414 = scalar_lea.vmem %s4, 36
        %v2415 = vld [vmem:[%s2414] ss:$8 sm:$0x3]
        %2416 = vrot.lane.b32.xlu0 %v1651, 113
        %v2417 = vpop.permute.xlu0 %2416
        %2418 = vrot.lane.b32.xlu0 %v1653, 113
        %v2419 = vpop.permute.xlu0 %2418
        %2420 = vrot.lane.b32.xlu0 %v1655, 113
        %v2421 = vpop.permute.xlu0 %2420
        %2422 = vrot.lane.b32.xlu0 %v1657, 113
        %v2423 = vpop.permute.xlu0 %2422
        %2424 = vrot.lane.b32.xlu0 %v1652, 113
        %v2425 = vpop.permute.xlu0 %2424
        %2426 = vrot.lane.b32.xlu0 %v1654, 113
        %v2427 = vpop.permute.xlu0 %2426
        %2428 = vrot.lane.b32.xlu0 %v1656, 113
        %v2429 = vpop.permute.xlu0 %2428
        %2430 = vrot.lane.b32.xlu0 %v1658, 113
        %v2431 = vpop.permute.xlu0 %2430
        %vm2432 = vcmp.lt.s32.totalorder %v886, 113
        %v2433 = vsel %vm2432, %v2417, %v2425
        %v2434 = vsel %vm2432, %v2419, %v2427
        %v2435 = vsel %vm2432, %v2421, %v2429
        %v2436 = vsel %vm2432, %v2423, %v2431
        %v2437 = vsel %vm2432, %v2425, %v2417
        %v2438 = vsel %vm2432, %v2427, %v2419
        %v2439 = vsel %vm2432, %v2429, %v2421
        %v2440 = vsel %vm2432, %v2431, %v2423
        %v2442 = vlaneseq
        %v2443 = vshrl.u32 %v2442, 7
        %v2444 = vsub.s32 0, %v2443
        %v2445 = vrot.slane %v2415, %v2444
        %v2446 = vlaneseq
        %v2447 = vshrl.u32 %v2446, 7
        %v2448 = vsub.s32 1, %v2447
        %v2449 = vrot.slane %v2415, %v2448
        %v2452 = vmul.f32 %v2433, %v2445
        %v2453 = vmul.f32 %v2437, %v2449
        %v2454 = vmul.f32 %v2434, %v2445
        %v2455 = vmul.f32 %v2438, %v2449
        %v2456 = vmul.f32 %v2435, %v2445
        %v2457 = vmul.f32 %v2439, %v2449
        %v2458 = vmul.f32 %v2436, %v2445
        %v2459 = vmul.f32 %v2440, %v2449
        %2460 = vset.pattern.permute.xlu0 20
        %2461 = vperm.xlu0 %2460, %v864
        %v2462 = vpop.permute.xlu0 %2461
        %2464 = vset.pattern.permute.xlu0 20
        %2465 = vperm.xlu0 %2464, %v865
        %v2466 = vpop.permute.xlu0 %2465
        %2468 = vset.pattern.permute.xlu0 20
        %2469 = vperm.xlu0 %2468, %v866
        %v2470 = vpop.permute.xlu0 %2469
        %2472 = vset.pattern.permute.xlu0 20
        %2473 = vperm.xlu0 %2472, %v867
        %v2474 = vpop.permute.xlu0 %2473
        %v2476 = vmul.f32 %v2462, %v2452
        %v2477 = vmul.f32 %v2462, %v2453
        %v2478 = vmul.f32 %v2466, %v2454
        %v2479 = vmul.f32 %v2466, %v2455
        %v2480 = vmul.f32 %v2470, %v2456
        %v2481 = vmul.f32 %v2470, %v2457
        %v2482 = vmul.f32 %v2474, %v2458
        %v2483 = vmul.f32 %v2474, %v2459
        %v2484 = vadd.f32 %v2406, %v2476
        %v2485 = vadd.f32 %v2407, %v2477
        %v2486 = vadd.f32 %v2408, %v2478
        %v2487 = vadd.f32 %v2409, %v2479
        %v2488 = vadd.f32 %v2410, %v2480
        %v2489 = vadd.f32 %v2411, %v2481
        %v2490 = vadd.f32 %v2412, %v2482
        %v2491 = vadd.f32 %v2413, %v2483
        %2492 = vset.pattern.permute.xlu0 7
        %2493 = vperm.xlu0 %2492, %v1238
        %v2494 = vpop.permute.xlu0 %2493
        %2496 = vset.pattern.permute.xlu0 7
        %2497 = vperm.xlu0 %2496, %v1239
        %v2498 = vpop.permute.xlu0 %2497
        %2500 = vset.pattern.permute.xlu0 7
        %2501 = vperm.xlu0 %2500, %v1240
        %v2502 = vpop.permute.xlu0 %2501
        %2504 = vset.pattern.permute.xlu0 7
        %2505 = vperm.xlu0 %2504, %v1241
        %v2506 = vpop.permute.xlu0 %2505
        %v2508 = vadd.f32 %v2484, %v2494
        %v2509 = vadd.f32 %v2485, %v2494
        %v2510 = vadd.f32 %v2486, %v2498
        %v2511 = vadd.f32 %v2487, %v2498
        %v2512 = vadd.f32 %v2488, %v2502
        %v2513 = vadd.f32 %v2489, %v2502
        %v2514 = vadd.f32 %v2490, %v2506
        %v2515 = vadd.f32 %v2491, %v2506
        %s2516 = scalar_lea.vmem %s4, 37
        %v2517 = vld [vmem:[%s2516] ss:$8 sm:$0x3]
        %2518 = vrot.lane.b32.xlu0 %v2508, 112
        %v2519 = vpop.permute.xlu0 %2518
        %2520 = vrot.lane.b32.xlu0 %v2510, 112
        %v2521 = vpop.permute.xlu0 %2520
        %2522 = vrot.lane.b32.xlu0 %v2512, 112
        %v2523 = vpop.permute.xlu0 %2522
        %2524 = vrot.lane.b32.xlu0 %v2514, 112
        %v2525 = vpop.permute.xlu0 %2524
        %2526 = vrot.lane.b32.xlu0 %v2509, 112
        %v2527 = vpop.permute.xlu0 %2526
        %2528 = vrot.lane.b32.xlu0 %v2511, 112
        %v2529 = vpop.permute.xlu0 %2528
        %2530 = vrot.lane.b32.xlu0 %v2513, 112
        %v2531 = vpop.permute.xlu0 %2530
        %2532 = vrot.lane.b32.xlu0 %v2515, 112
        %v2533 = vpop.permute.xlu0 %2532
        %v2534 = vsel %vm1497, %v2519, %v2527
        %v2535 = vsel %vm1497, %v2521, %v2529
        %v2536 = vsel %vm1497, %v2523, %v2531
        %v2537 = vsel %vm1497, %v2525, %v2533
        %v2538 = vsel %vm1497, %v2527, %v2519
        %v2539 = vsel %vm1497, %v2529, %v2521
        %v2540 = vsel %vm1497, %v2531, %v2523
        %v2541 = vsel %vm1497, %v2533, %v2525
        %v2543 = vlaneseq
        %v2544 = vshrl.u32 %v2543, 7
        %v2545 = vsub.s32 0, %v2544
        %v2546 = vrot.slane %v2517, %v2545
        %v2547 = vlaneseq
        %v2548 = vshrl.u32 %v2547, 7
        %v2549 = vsub.s32 1, %v2548
        %v2550 = vrot.slane %v2517, %v2549
        %v2553 = vmul.f32 %v2534, %v2546
        %v2554 = vmul.f32 %v2538, %v2550
        %v2555 = vmul.f32 %v2535, %v2546
        %v2556 = vmul.f32 %v2539, %v2550
        %v2557 = vmul.f32 %v2536, %v2546
        %v2558 = vmul.f32 %v2540, %v2550
        %v2559 = vmul.f32 %v2537, %v2546
        %v2560 = vmul.f32 %v2541, %v2550
        %2561 = vset.pattern.permute.xlu0 21
        %2562 = vperm.xlu0 %2561, %v864
        %v2563 = vpop.permute.xlu0 %2562
        %2565 = vset.pattern.permute.xlu0 21
        %2566 = vperm.xlu0 %2565, %v865
        %v2567 = vpop.permute.xlu0 %2566
        %2569 = vset.pattern.permute.xlu0 21
        %2570 = vperm.xlu0 %2569, %v866
        %v2571 = vpop.permute.xlu0 %2570
        %2573 = vset.pattern.permute.xlu0 21
        %2574 = vperm.xlu0 %2573, %v867
        %v2575 = vpop.permute.xlu0 %2574
        %v2577 = vmul.f32 %v2563, %v2553
        %v2578 = vmul.f32 %v2563, %v2554
        %v2579 = vmul.f32 %v2567, %v2555
        %v2580 = vmul.f32 %v2567, %v2556
        %v2581 = vmul.f32 %v2571, %v2557
        %v2582 = vmul.f32 %v2571, %v2558
        %v2583 = vmul.f32 %v2575, %v2559
        %v2584 = vmul.f32 %v2575, %v2560
        %v2585 = vadd.f32 %v2577, 0.0
        %v2586 = vadd.f32 %v2578, 0.0
        %v2587 = vadd.f32 %v2579, 0.0
        %v2588 = vadd.f32 %v2580, 0.0
        %v2589 = vadd.f32 %v2581, 0.0
        %v2590 = vadd.f32 %v2582, 0.0
        %v2591 = vadd.f32 %v2583, 0.0
        %v2592 = vadd.f32 %v2584, 0.0
        %s2593 = scalar_lea.vmem %s4, 38
        %v2594 = vld [vmem:[%s2593] ss:$8 sm:$0x3]
        %2595 = vrot.lane.b32.xlu0 %v2508, 64
        %v2596 = vpop.permute.xlu0 %2595
        %2597 = vrot.lane.b32.xlu0 %v2510, 64
        %v2598 = vpop.permute.xlu0 %2597
        %2599 = vrot.lane.b32.xlu0 %v2512, 64
        %v2600 = vpop.permute.xlu0 %2599
        %2601 = vrot.lane.b32.xlu0 %v2514, 64
        %v2602 = vpop.permute.xlu0 %2601
        %2603 = vrot.lane.b32.xlu0 %v2509, 64
        %v2604 = vpop.permute.xlu0 %2603
        %2605 = vrot.lane.b32.xlu0 %v2511, 64
        %v2606 = vpop.permute.xlu0 %2605
        %2607 = vrot.lane.b32.xlu0 %v2513, 64
        %v2608 = vpop.permute.xlu0 %2607
        %2609 = vrot.lane.b32.xlu0 %v2515, 64
        %v2610 = vpop.permute.xlu0 %2609
        %vm2611 = vcmp.lt.s32.totalorder %v886, 64
        %v2612 = vsel %vm2611, %v2596, %v2604
        %v2613 = vsel %vm2611, %v2598, %v2606
        %v2614 = vsel %vm2611, %v2600, %v2608
        %v2615 = vsel %vm2611, %v2602, %v2610
        %v2616 = vsel %vm2611, %v2604, %v2596
        %v2617 = vsel %vm2611, %v2606, %v2598
        %v2618 = vsel %vm2611, %v2608, %v2600
        %v2619 = vsel %vm2611, %v2610, %v2602
        %v2621 = vlaneseq
        %v2622 = vshrl.u32 %v2621, 7
        %v2623 = vsub.s32 0, %v2622
        %v2624 = vrot.slane %v2594, %v2623
        %v2625 = vlaneseq
        %v2626 = vshrl.u32 %v2625, 7
        %v2627 = vsub.s32 1, %v2626
        %v2628 = vrot.slane %v2594, %v2627
        %v2631 = vmul.f32 %v2612, %v2624
        %v2632 = vmul.f32 %v2616, %v2628
        %v2633 = vmul.f32 %v2613, %v2624
        %v2634 = vmul.f32 %v2617, %v2628
        %v2635 = vmul.f32 %v2614, %v2624
        %v2636 = vmul.f32 %v2618, %v2628
        %v2637 = vmul.f32 %v2615, %v2624
        %v2638 = vmul.f32 %v2619, %v2628
        %2639 = vset.pattern.permute.xlu0 22
        %2640 = vperm.xlu0 %2639, %v864
        %v2641 = vpop.permute.xlu0 %2640
        %2643 = vset.pattern.permute.xlu0 22
        %2644 = vperm.xlu0 %2643, %v865
        %v2645 = vpop.permute.xlu0 %2644
        %2647 = vset.pattern.permute.xlu0 22
        %2648 = vperm.xlu0 %2647, %v866
        %v2649 = vpop.permute.xlu0 %2648
        %2651 = vset.pattern.permute.xlu0 22
        %2652 = vperm.xlu0 %2651, %v867
        %v2653 = vpop.permute.xlu0 %2652
        %v2655 = vmul.f32 %v2641, %v2631
        %v2656 = vmul.f32 %v2641, %v2632
        %v2657 = vmul.f32 %v2645, %v2633
        %v2658 = vmul.f32 %v2645, %v2634
        %v2659 = vmul.f32 %v2649, %v2635
        %v2660 = vmul.f32 %v2649, %v2636
        %v2661 = vmul.f32 %v2653, %v2637
        %v2662 = vmul.f32 %v2653, %v2638
        %v2663 = vadd.f32 %v2585, %v2655
        %v2664 = vadd.f32 %v2586, %v2656
        %v2665 = vadd.f32 %v2587, %v2657
        %v2666 = vadd.f32 %v2588, %v2658
        %v2667 = vadd.f32 %v2589, %v2659
        %v2668 = vadd.f32 %v2590, %v2660
        %v2669 = vadd.f32 %v2591, %v2661
        %v2670 = vadd.f32 %v2592, %v2662
        %s2671 = scalar_lea.vmem %s4, 39
        %v2672 = vld [vmem:[%s2671] ss:$8 sm:$0x3]
        %2673 = vrot.lane.b32.xlu0 %v2508, 16
        %v2674 = vpop.permute.xlu0 %2673
        %2675 = vrot.lane.b32.xlu0 %v2510, 16
        %v2676 = vpop.permute.xlu0 %2675
        %2677 = vrot.lane.b32.xlu0 %v2512, 16
        %v2678 = vpop.permute.xlu0 %2677
        %2679 = vrot.lane.b32.xlu0 %v2514, 16
        %v2680 = vpop.permute.xlu0 %2679
        %2681 = vrot.lane.b32.xlu0 %v2509, 16
        %v2682 = vpop.permute.xlu0 %2681
        %2683 = vrot.lane.b32.xlu0 %v2511, 16
        %v2684 = vpop.permute.xlu0 %2683
        %2685 = vrot.lane.b32.xlu0 %v2513, 16
        %v2686 = vpop.permute.xlu0 %2685
        %2687 = vrot.lane.b32.xlu0 %v2515, 16
        %v2688 = vpop.permute.xlu0 %2687
        %v2689 = vsel %vm1366, %v2674, %v2682
        %v2690 = vsel %vm1366, %v2676, %v2684
        %v2691 = vsel %vm1366, %v2678, %v2686
        %v2692 = vsel %vm1366, %v2680, %v2688
        %v2693 = vsel %vm1366, %v2682, %v2674
        %v2694 = vsel %vm1366, %v2684, %v2676
        %v2695 = vsel %vm1366, %v2686, %v2678
        %v2696 = vsel %vm1366, %v2688, %v2680
        %v2698 = vlaneseq
        %v2699 = vshrl.u32 %v2698, 7
        %v2700 = vsub.s32 0, %v2699
        %v2701 = vrot.slane %v2672, %v2700
        %v2702 = vlaneseq
        %v2703 = vshrl.u32 %v2702, 7
        %v2704 = vsub.s32 1, %v2703
        %v2705 = vrot.slane %v2672, %v2704
        %v2708 = vmul.f32 %v2689, %v2701
        %v2709 = vmul.f32 %v2693, %v2705
        %v2710 = vmul.f32 %v2690, %v2701
        %v2711 = vmul.f32 %v2694, %v2705
        %v2712 = vmul.f32 %v2691, %v2701
        %v2713 = vmul.f32 %v2695, %v2705
        %v2714 = vmul.f32 %v2692, %v2701
        %v2715 = vmul.f32 %v2696, %v2705
        %2716 = vset.pattern.permute.xlu0 23
        %2717 = vperm.xlu0 %2716, %v864
        %v2718 = vpop.permute.xlu0 %2717
        %2720 = vset.pattern.permute.xlu0 23
        %2721 = vperm.xlu0 %2720, %v865
        %v2722 = vpop.permute.xlu0 %2721
        %2724 = vset.pattern.permute.xlu0 23
        %2725 = vperm.xlu0 %2724, %v866
        %v2726 = vpop.permute.xlu0 %2725
        %2728 = vset.pattern.permute.xlu0 23
        %2729 = vperm.xlu0 %2728, %v867
        %v2730 = vpop.permute.xlu0 %2729
        %v2732 = vmul.f32 %v2718, %v2708
        %v2733 = vmul.f32 %v2718, %v2709
        %v2734 = vmul.f32 %v2722, %v2710
        %v2735 = vmul.f32 %v2722, %v2711
        %v2736 = vmul.f32 %v2726, %v2712
        %v2737 = vmul.f32 %v2726, %v2713
        %v2738 = vmul.f32 %v2730, %v2714
        %v2739 = vmul.f32 %v2730, %v2715
        %v2740 = vadd.f32 %v2663, %v2732
        %v2741 = vadd.f32 %v2664, %v2733
        %v2742 = vadd.f32 %v2665, %v2734
        %v2743 = vadd.f32 %v2666, %v2735
        %v2744 = vadd.f32 %v2667, %v2736
        %v2745 = vadd.f32 %v2668, %v2737
        %v2746 = vadd.f32 %v2669, %v2738
        %v2747 = vadd.f32 %v2670, %v2739
        %s2748 = scalar_lea.vmem %s4, 48
        %v2749 = vld [vmem:[%s2748] ss:$8 sm:$0x3]
        %2750 = vrot.lane.b32.xlu0 %v2508, 96
        %v2751 = vpop.permute.xlu0 %2750
        %2752 = vrot.lane.b32.xlu0 %v2510, 96
        %v2753 = vpop.permute.xlu0 %2752
        %2754 = vrot.lane.b32.xlu0 %v2512, 96
        %v2755 = vpop.permute.xlu0 %2754
        %2756 = vrot.lane.b32.xlu0 %v2514, 96
        %v2757 = vpop.permute.xlu0 %2756
        %2758 = vrot.lane.b32.xlu0 %v2509, 96
        %v2759 = vpop.permute.xlu0 %2758
        %2760 = vrot.lane.b32.xlu0 %v2511, 96
        %v2761 = vpop.permute.xlu0 %2760
        %2762 = vrot.lane.b32.xlu0 %v2513, 96
        %v2763 = vpop.permute.xlu0 %2762
        %2764 = vrot.lane.b32.xlu0 %v2515, 96
        %v2765 = vpop.permute.xlu0 %2764
        %v2766 = vsel %vm1575, %v2751, %v2759
        %v2767 = vsel %vm1575, %v2753, %v2761
        %v2768 = vsel %vm1575, %v2755, %v2763
        %v2769 = vsel %vm1575, %v2757, %v2765
        %v2770 = vsel %vm1575, %v2759, %v2751
        %v2771 = vsel %vm1575, %v2761, %v2753
        %v2772 = vsel %vm1575, %v2763, %v2755
        %v2773 = vsel %vm1575, %v2765, %v2757
        %v2775 = vlaneseq
        %v2776 = vshrl.u32 %v2775, 7
        %v2777 = vsub.s32 0, %v2776
        %v2778 = vrot.slane %v2749, %v2777
        %v2779 = vlaneseq
        %v2780 = vshrl.u32 %v2779, 7
        %v2781 = vsub.s32 1, %v2780
        %v2782 = vrot.slane %v2749, %v2781
        %v2785 = vmul.f32 %v2770, %v2778
        %v2786 = vmul.f32 %v2766, %v2782
        %v2787 = vmul.f32 %v2771, %v2778
        %v2788 = vmul.f32 %v2767, %v2782
        %v2789 = vmul.f32 %v2772, %v2778
        %v2790 = vmul.f32 %v2768, %v2782
        %v2791 = vmul.f32 %v2773, %v2778
        %v2792 = vmul.f32 %v2769, %v2782
        %2793 = vset.pattern.permute.xlu0 24
        %2794 = vperm.xlu0 %2793, %v864
        %v2795 = vpop.permute.xlu0 %2794
        %2797 = vset.pattern.permute.xlu0 24
        %2798 = vperm.xlu0 %2797, %v865
        %v2799 = vpop.permute.xlu0 %2798
        %2801 = vset.pattern.permute.xlu0 24
        %2802 = vperm.xlu0 %2801, %v866
        %v2803 = vpop.permute.xlu0 %2802
        %2805 = vset.pattern.permute.xlu0 24
        %2806 = vperm.xlu0 %2805, %v867
        %v2807 = vpop.permute.xlu0 %2806
        %v2809 = vmul.f32 %v2795, %v2785
        %v2810 = vmul.f32 %v2795, %v2786
        %v2811 = vmul.f32 %v2799, %v2787
        %v2812 = vmul.f32 %v2799, %v2788
        %v2813 = vmul.f32 %v2803, %v2789
        %v2814 = vmul.f32 %v2803, %v2790
        %v2815 = vmul.f32 %v2807, %v2791
        %v2816 = vmul.f32 %v2807, %v2792
        %v2817 = vadd.f32 %v2740, %v2809
        %v2818 = vadd.f32 %v2741, %v2810
        %v2819 = vadd.f32 %v2742, %v2811
        %v2820 = vadd.f32 %v2743, %v2812
        %v2821 = vadd.f32 %v2744, %v2813
        %v2822 = vadd.f32 %v2745, %v2814
        %v2823 = vadd.f32 %v2746, %v2815
        %v2824 = vadd.f32 %v2747, %v2816
        %s2825 = scalar_lea.vmem %s4, 49
        %v2826 = vld [vmem:[%s2825] ss:$8 sm:$0x3]
        %2827 = vrot.lane.b32.xlu0 %v2508, 48
        %v2828 = vpop.permute.xlu0 %2827
        %2829 = vrot.lane.b32.xlu0 %v2510, 48
        %v2830 = vpop.permute.xlu0 %2829
        %2831 = vrot.lane.b32.xlu0 %v2512, 48
        %v2832 = vpop.permute.xlu0 %2831
        %2833 = vrot.lane.b32.xlu0 %v2514, 48
        %v2834 = vpop.permute.xlu0 %2833
        %2835 = vrot.lane.b32.xlu0 %v2509, 48
        %v2836 = vpop.permute.xlu0 %2835
        %2837 = vrot.lane.b32.xlu0 %v2511, 48
        %v2838 = vpop.permute.xlu0 %2837
        %2839 = vrot.lane.b32.xlu0 %v2513, 48
        %v2840 = vpop.permute.xlu0 %2839
        %2841 = vrot.lane.b32.xlu0 %v2515, 48
        %v2842 = vpop.permute.xlu0 %2841
        %vm2843 = vcmp.lt.s32.totalorder %v886, 48
        %v2844 = vsel %vm2843, %v2828, %v2836
        %v2845 = vsel %vm2843, %v2830, %v2838
        %v2846 = vsel %vm2843, %v2832, %v2840
        %v2847 = vsel %vm2843, %v2834, %v2842
        %v2848 = vsel %vm2843, %v2836, %v2828
        %v2849 = vsel %vm2843, %v2838, %v2830
        %v2850 = vsel %vm2843, %v2840, %v2832
        %v2851 = vsel %vm2843, %v2842, %v2834
        %v2853 = vlaneseq
        %v2854 = vshrl.u32 %v2853, 7
        %v2855 = vsub.s32 0, %v2854
        %v2856 = vrot.slane %v2826, %v2855
        %v2857 = vlaneseq
        %v2858 = vshrl.u32 %v2857, 7
        %v2859 = vsub.s32 1, %v2858
        %v2860 = vrot.slane %v2826, %v2859
        %v2863 = vmul.f32 %v2848, %v2856
        %v2864 = vmul.f32 %v2844, %v2860
        %v2865 = vmul.f32 %v2849, %v2856
        %v2866 = vmul.f32 %v2845, %v2860
        %v2867 = vmul.f32 %v2850, %v2856
        %v2868 = vmul.f32 %v2846, %v2860
        %v2869 = vmul.f32 %v2851, %v2856
        %v2870 = vmul.f32 %v2847, %v2860
        %2871 = vset.pattern.permute.xlu0 25
        %2872 = vperm.xlu0 %2871, %v864
        %v2873 = vpop.permute.xlu0 %2872
        %2875 = vset.pattern.permute.xlu0 25
        %2876 = vperm.xlu0 %2875, %v865
        %v2877 = vpop.permute.xlu0 %2876
        %2879 = vset.pattern.permute.xlu0 25
        %2880 = vperm.xlu0 %2879, %v866
        %v2881 = vpop.permute.xlu0 %2880
        %2883 = vset.pattern.permute.xlu0 25
        %2884 = vperm.xlu0 %2883, %v867
        %v2885 = vpop.permute.xlu0 %2884
        %v2887 = vmul.f32 %v2873, %v2863
        %v2888 = vmul.f32 %v2873, %v2864
        %v2889 = vmul.f32 %v2877, %v2865
        %v2890 = vmul.f32 %v2877, %v2866
        %v2891 = vmul.f32 %v2881, %v2867
        %v2892 = vmul.f32 %v2881, %v2868
        %v2893 = vmul.f32 %v2885, %v2869
        %v2894 = vmul.f32 %v2885, %v2870
        %v2895 = vadd.f32 %v2817, %v2887
        %v2896 = vadd.f32 %v2818, %v2888
        %v2897 = vadd.f32 %v2819, %v2889
        %v2898 = vadd.f32 %v2820, %v2890
        %v2899 = vadd.f32 %v2821, %v2891
        %v2900 = vadd.f32 %v2822, %v2892
        %v2901 = vadd.f32 %v2823, %v2893
        %v2902 = vadd.f32 %v2824, %v2894
        %s2903 = scalar_lea.vmem %s4, 50
        %v2904 = vld [vmem:[%s2903] ss:$8 sm:$0x3]
        %v2906 = vlaneseq
        %v2907 = vshrl.u32 %v2906, 7
        %v2908 = vsub.s32 0, %v2907
        %v2909 = vrot.slane %v2904, %v2908
        %v2910 = vlaneseq
        %v2911 = vshrl.u32 %v2910, 7
        %v2912 = vsub.s32 1, %v2911
        %v2913 = vrot.slane %v2904, %v2912
        %v2916 = vmul.f32 %v2508, %v2909
        %v2917 = vmul.f32 %v2509, %v2913
        %v2918 = vmul.f32 %v2510, %v2909
        %v2919 = vmul.f32 %v2511, %v2913
        %v2920 = vmul.f32 %v2512, %v2909
        %v2921 = vmul.f32 %v2513, %v2913
        %v2922 = vmul.f32 %v2514, %v2909
        %v2923 = vmul.f32 %v2515, %v2913
        %2924 = vset.pattern.permute.xlu0 26
        %2925 = vperm.xlu0 %2924, %v864
        %v2926 = vpop.permute.xlu0 %2925
        %2928 = vset.pattern.permute.xlu0 26
        %2929 = vperm.xlu0 %2928, %v865
        %v2930 = vpop.permute.xlu0 %2929
        %2932 = vset.pattern.permute.xlu0 26
        %2933 = vperm.xlu0 %2932, %v866
        %v2934 = vpop.permute.xlu0 %2933
        %2936 = vset.pattern.permute.xlu0 26
        %2937 = vperm.xlu0 %2936, %v867
        %v2938 = vpop.permute.xlu0 %2937
        %v2940 = vmul.f32 %v2926, %v2916
        %v2941 = vmul.f32 %v2926, %v2917
        %v2942 = vmul.f32 %v2930, %v2918
        %v2943 = vmul.f32 %v2930, %v2919
        %v2944 = vmul.f32 %v2934, %v2920
        %v2945 = vmul.f32 %v2934, %v2921
        %v2946 = vmul.f32 %v2938, %v2922
        %v2947 = vmul.f32 %v2938, %v2923
        %v2948 = vadd.f32 %v2895, %v2940
        %v2949 = vadd.f32 %v2896, %v2941
        %v2950 = vadd.f32 %v2897, %v2942
        %v2951 = vadd.f32 %v2898, %v2943
        %v2952 = vadd.f32 %v2899, %v2944
        %v2953 = vadd.f32 %v2900, %v2945
        %v2954 = vadd.f32 %v2901, %v2946
        %v2955 = vadd.f32 %v2902, %v2947
        %s2956 = scalar_lea.vmem %s4, 51
        %v2957 = vld [vmem:[%s2956] ss:$8 sm:$0x3]
        %2958 = vrot.lane.b32.xlu0 %v2508, 80
        %v2959 = vpop.permute.xlu0 %2958
        %2960 = vrot.lane.b32.xlu0 %v2510, 80
        %v2961 = vpop.permute.xlu0 %2960
        %2962 = vrot.lane.b32.xlu0 %v2512, 80
        %v2963 = vpop.permute.xlu0 %2962
        %2964 = vrot.lane.b32.xlu0 %v2514, 80
        %v2965 = vpop.permute.xlu0 %2964
        %2966 = vrot.lane.b32.xlu0 %v2509, 80
        %v2967 = vpop.permute.xlu0 %2966
        %2968 = vrot.lane.b32.xlu0 %v2511, 80
        %v2969 = vpop.permute.xlu0 %2968
        %2970 = vrot.lane.b32.xlu0 %v2513, 80
        %v2971 = vpop.permute.xlu0 %2970
        %2972 = vrot.lane.b32.xlu0 %v2515, 80
        %v2973 = vpop.permute.xlu0 %2972
        %vm2974 = vcmp.lt.s32.totalorder %v886, 80
        %v2975 = vsel %vm2974, %v2959, %v2967
        %v2976 = vsel %vm2974, %v2961, %v2969
        %v2977 = vsel %vm2974, %v2963, %v2971
        %v2978 = vsel %vm2974, %v2965, %v2973
        %v2979 = vsel %vm2974, %v2967, %v2959
        %v2980 = vsel %vm2974, %v2969, %v2961
        %v2981 = vsel %vm2974, %v2971, %v2963
        %v2982 = vsel %vm2974, %v2973, %v2965
        %v2984 = vlaneseq
        %v2985 = vshrl.u32 %v2984, 7
        %v2986 = vsub.s32 0, %v2985
        %v2987 = vrot.slane %v2957, %v2986
        %v2988 = vlaneseq
        %v2989 = vshrl.u32 %v2988, 7
        %v2990 = vsub.s32 1, %v2989
        %v2991 = vrot.slane %v2957, %v2990
        %v2994 = vmul.f32 %v2975, %v2987
        %v2995 = vmul.f32 %v2979, %v2991
        %v2996 = vmul.f32 %v2976, %v2987
        %v2997 = vmul.f32 %v2980, %v2991
        %v2998 = vmul.f32 %v2977, %v2987
        %v2999 = vmul.f32 %v2981, %v2991
        %v3000 = vmul.f32 %v2978, %v2987
        %v3001 = vmul.f32 %v2982, %v2991
        %3002 = vset.pattern.permute.xlu0 27
        %3003 = vperm.xlu0 %3002, %v864
        %v3004 = vpop.permute.xlu0 %3003
        %3006 = vset.pattern.permute.xlu0 27
        %3007 = vperm.xlu0 %3006, %v865
        %v3008 = vpop.permute.xlu0 %3007
        %3010 = vset.pattern.permute.xlu0 27
        %3011 = vperm.xlu0 %3010, %v866
        %v3012 = vpop.permute.xlu0 %3011
        %3014 = vset.pattern.permute.xlu0 27
        %3015 = vperm.xlu0 %3014, %v867
        %v3016 = vpop.permute.xlu0 %3015
        %v3018 = vmul.f32 %v3004, %v2994
        %v3019 = vmul.f32 %v3004, %v2995
        %v3020 = vmul.f32 %v3008, %v2996
        %v3021 = vmul.f32 %v3008, %v2997
        %v3022 = vmul.f32 %v3012, %v2998
        %v3023 = vmul.f32 %v3012, %v2999
        %v3024 = vmul.f32 %v3016, %v3000
        %v3025 = vmul.f32 %v3016, %v3001
        %v3026 = vadd.f32 %v2948, %v3018
        %v3027 = vadd.f32 %v2949, %v3019
        %v3028 = vadd.f32 %v2950, %v3020
        %v3029 = vadd.f32 %v2951, %v3021
        %v3030 = vadd.f32 %v2952, %v3022
        %v3031 = vadd.f32 %v2953, %v3023
        %v3032 = vadd.f32 %v2954, %v3024
        %v3033 = vadd.f32 %v2955, %v3025
        %s3034 = scalar_lea.vmem %s4, 52
        %v3035 = vld [vmem:[%s3034] ss:$8 sm:$0x3]
        %3036 = vrot.lane.b32.xlu0 %v2508, 32
        %v3037 = vpop.permute.xlu0 %3036
        %3038 = vrot.lane.b32.xlu0 %v2510, 32
        %v3039 = vpop.permute.xlu0 %3038
        %3040 = vrot.lane.b32.xlu0 %v2512, 32
        %v3041 = vpop.permute.xlu0 %3040
        %3042 = vrot.lane.b32.xlu0 %v2514, 32
        %v3043 = vpop.permute.xlu0 %3042
        %3044 = vrot.lane.b32.xlu0 %v2509, 32
        %v3045 = vpop.permute.xlu0 %3044
        %3046 = vrot.lane.b32.xlu0 %v2511, 32
        %v3047 = vpop.permute.xlu0 %3046
        %3048 = vrot.lane.b32.xlu0 %v2513, 32
        %v3049 = vpop.permute.xlu0 %3048
        %3050 = vrot.lane.b32.xlu0 %v2515, 32
        %v3051 = vpop.permute.xlu0 %3050
        %v3052 = vsel %vm1288, %v3037, %v3045
        %v3053 = vsel %vm1288, %v3039, %v3047
        %v3054 = vsel %vm1288, %v3041, %v3049
        %v3055 = vsel %vm1288, %v3043, %v3051
        %v3056 = vsel %vm1288, %v3045, %v3037
        %v3057 = vsel %vm1288, %v3047, %v3039
        %v3058 = vsel %vm1288, %v3049, %v3041
        %v3059 = vsel %vm1288, %v3051, %v3043
        %v3061 = vlaneseq
        %v3062 = vshrl.u32 %v3061, 7
        %v3063 = vsub.s32 0, %v3062
        %v3064 = vrot.slane %v3035, %v3063
        %v3065 = vlaneseq
        %v3066 = vshrl.u32 %v3065, 7
        %v3067 = vsub.s32 1, %v3066
        %v3068 = vrot.slane %v3035, %v3067
        %v3071 = vmul.f32 %v3052, %v3064
        %v3072 = vmul.f32 %v3056, %v3068
        %v3073 = vmul.f32 %v3053, %v3064
        %v3074 = vmul.f32 %v3057, %v3068
        %v3075 = vmul.f32 %v3054, %v3064
        %v3076 = vmul.f32 %v3058, %v3068
        %v3077 = vmul.f32 %v3055, %v3064
        %v3078 = vmul.f32 %v3059, %v3068
        %3079 = vset.pattern.permute.xlu0 28
        %3080 = vperm.xlu0 %3079, %v864
        %v3081 = vpop.permute.xlu0 %3080
        %3083 = vset.pattern.permute.xlu0 28
        %3084 = vperm.xlu0 %3083, %v865
        %v3085 = vpop.permute.xlu0 %3084
        %3087 = vset.pattern.permute.xlu0 28
        %3088 = vperm.xlu0 %3087, %v866
        %v3089 = vpop.permute.xlu0 %3088
        %3091 = vset.pattern.permute.xlu0 28
        %3092 = vperm.xlu0 %3091, %v867
        %v3093 = vpop.permute.xlu0 %3092
        %v3095 = vmul.f32 %v3081, %v3071
        %v3096 = vmul.f32 %v3081, %v3072
        %v3097 = vmul.f32 %v3085, %v3073
        %v3098 = vmul.f32 %v3085, %v3074
        %v3099 = vmul.f32 %v3089, %v3075
        %v3100 = vmul.f32 %v3089, %v3076
        %v3101 = vmul.f32 %v3093, %v3077
        %v3102 = vmul.f32 %v3093, %v3078
        %v3103 = vadd.f32 %v3026, %v3095
        %v3104 = vadd.f32 %v3027, %v3096
        %v3105 = vadd.f32 %v3028, %v3097
        %v3106 = vadd.f32 %v3029, %v3098
        %v3107 = vadd.f32 %v3030, %v3099
        %v3108 = vadd.f32 %v3031, %v3100
        %v3109 = vadd.f32 %v3032, %v3101
        %v3110 = vadd.f32 %v3033, %v3102
        %s3111 = scalar_lea.vmem %s4, 53
        %v3112 = vld [vmem:[%s3111] ss:$8 sm:$0x3]
        %v3114 = vlaneseq
        %v3115 = vshrl.u32 %v3114, 7
        %v3116 = vsub.s32 0, %v3115
        %v3117 = vrot.slane %v3112, %v3116
        %v3118 = vlaneseq
        %v3119 = vshrl.u32 %v3118, 7
        %v3120 = vsub.s32 1, %v3119
        %v3121 = vrot.slane %v3112, %v3120
        %v3124 = vmul.f32 %v2538, %v3117
        %v3125 = vmul.f32 %v2534, %v3121
        %v3126 = vmul.f32 %v2539, %v3117
        %v3127 = vmul.f32 %v2535, %v3121
        %v3128 = vmul.f32 %v2540, %v3117
        %v3129 = vmul.f32 %v2536, %v3121
        %v3130 = vmul.f32 %v2541, %v3117
        %v3131 = vmul.f32 %v2537, %v3121
        %3132 = vset.pattern.permute.xlu0 29
        %3133 = vperm.xlu0 %3132, %v864
        %v3134 = vpop.permute.xlu0 %3133
        %3136 = vset.pattern.permute.xlu0 29
        %3137 = vperm.xlu0 %3136, %v865
        %v3138 = vpop.permute.xlu0 %3137
        %3140 = vset.pattern.permute.xlu0 29
        %3141 = vperm.xlu0 %3140, %v866
        %v3142 = vpop.permute.xlu0 %3141
        %3144 = vset.pattern.permute.xlu0 29
        %3145 = vperm.xlu0 %3144, %v867
        %v3146 = vpop.permute.xlu0 %3145
        %v3148 = vmul.f32 %v3134, %v3124
        %v3149 = vmul.f32 %v3134, %v3125
        %v3150 = vmul.f32 %v3138, %v3126
        %v3151 = vmul.f32 %v3138, %v3127
        %v3152 = vmul.f32 %v3142, %v3128
        %v3153 = vmul.f32 %v3142, %v3129
        %v3154 = vmul.f32 %v3146, %v3130
        %v3155 = vmul.f32 %v3146, %v3131
        %v3156 = vadd.f32 %v3103, %v3148
        %v3157 = vadd.f32 %v3104, %v3149
        %v3158 = vadd.f32 %v3105, %v3150
        %v3159 = vadd.f32 %v3106, %v3151
        %v3160 = vadd.f32 %v3107, %v3152
        %v3161 = vadd.f32 %v3108, %v3153
        %v3162 = vadd.f32 %v3109, %v3154
        %v3163 = vadd.f32 %v3110, %v3155
        %s3164 = scalar_lea.vmem %s4, 54
        %v3165 = vld [vmem:[%s3164] ss:$8 sm:$0x3]
        %v3167 = vlaneseq
        %v3168 = vshrl.u32 %v3167, 7
        %v3169 = vsub.s32 0, %v3168
        %v3170 = vrot.slane %v3165, %v3169
        %v3171 = vlaneseq
        %v3172 = vshrl.u32 %v3171, 7
        %v3173 = vsub.s32 1, %v3172
        %v3174 = vrot.slane %v3165, %v3173
        %v3177 = vmul.f32 %v2616, %v3170
        %v3178 = vmul.f32 %v2612, %v3174
        %v3179 = vmul.f32 %v2617, %v3170
        %v3180 = vmul.f32 %v2613, %v3174
        %v3181 = vmul.f32 %v2618, %v3170
        %v3182 = vmul.f32 %v2614, %v3174
        %v3183 = vmul.f32 %v2619, %v3170
        %v3184 = vmul.f32 %v2615, %v3174
        %3185 = vset.pattern.permute.xlu0 30
        %3186 = vperm.xlu0 %3185, %v864
        %v3187 = vpop.permute.xlu0 %3186
        %3189 = vset.pattern.permute.xlu0 30
        %3190 = vperm.xlu0 %3189, %v865
        %v3191 = vpop.permute.xlu0 %3190
        %3193 = vset.pattern.permute.xlu0 30
        %3194 = vperm.xlu0 %3193, %v866
        %v3195 = vpop.permute.xlu0 %3194
        %3197 = vset.pattern.permute.xlu0 30
        %3198 = vperm.xlu0 %3197, %v867
        %v3199 = vpop.permute.xlu0 %3198
        %v3201 = vmul.f32 %v3187, %v3177
        %v3202 = vmul.f32 %v3187, %v3178
        %v3203 = vmul.f32 %v3191, %v3179
        %v3204 = vmul.f32 %v3191, %v3180
        %v3205 = vmul.f32 %v3195, %v3181
        %v3206 = vmul.f32 %v3195, %v3182
        %v3207 = vmul.f32 %v3199, %v3183
        %v3208 = vmul.f32 %v3199, %v3184
        %v3209 = vadd.f32 %v3156, %v3201
        %v3210 = vadd.f32 %v3157, %v3202
        %v3211 = vadd.f32 %v3158, %v3203
        %v3212 = vadd.f32 %v3159, %v3204
        %v3213 = vadd.f32 %v3160, %v3205
        %v3214 = vadd.f32 %v3161, %v3206
        %v3215 = vadd.f32 %v3162, %v3207
        %v3216 = vadd.f32 %v3163, %v3208
        %s3217 = scalar_lea.vmem %s4, 55
        %v3218 = vld [vmem:[%s3217] ss:$8 sm:$0x3]
        %v3220 = vlaneseq
        %v3221 = vshrl.u32 %v3220, 7
        %v3222 = vsub.s32 0, %v3221
        %v3223 = vrot.slane %v3218, %v3222
        %v3224 = vlaneseq
        %v3225 = vshrl.u32 %v3224, 7
        %v3226 = vsub.s32 1, %v3225
        %v3227 = vrot.slane %v3218, %v3226
        %v3230 = vmul.f32 %v2693, %v3223
        %v3231 = vmul.f32 %v2689, %v3227
        %v3232 = vmul.f32 %v2694, %v3223
        %v3233 = vmul.f32 %v2690, %v3227
        %v3234 = vmul.f32 %v2695, %v3223
        %v3235 = vmul.f32 %v2691, %v3227
        %v3236 = vmul.f32 %v2696, %v3223
        %v3237 = vmul.f32 %v2692, %v3227
        %3238 = vset.pattern.permute.xlu0 31
        %3239 = vperm.xlu0 %3238, %v864
        %v3240 = vpop.permute.xlu0 %3239
        %3242 = vset.pattern.permute.xlu0 31
        %3243 = vperm.xlu0 %3242, %v865
        %v3244 = vpop.permute.xlu0 %3243
        %3246 = vset.pattern.permute.xlu0 31
        %3247 = vperm.xlu0 %3246, %v866
        %v3248 = vpop.permute.xlu0 %3247
        %3250 = vset.pattern.permute.xlu0 31
        %3251 = vperm.xlu0 %3250, %v867
        %v3252 = vpop.permute.xlu0 %3251
        %v3254 = vmul.f32 %v3240, %v3230
        %v3255 = vmul.f32 %v3240, %v3231
        %v3256 = vmul.f32 %v3244, %v3232
        %v3257 = vmul.f32 %v3244, %v3233
        %v3258 = vmul.f32 %v3248, %v3234
        %v3259 = vmul.f32 %v3248, %v3235
        %v3260 = vmul.f32 %v3252, %v3236
        %v3261 = vmul.f32 %v3252, %v3237
        %v3262 = vadd.f32 %v3209, %v3254
        %v3263 = vadd.f32 %v3210, %v3255
        %v3264 = vadd.f32 %v3211, %v3256
        %v3265 = vadd.f32 %v3212, %v3257
        %v3266 = vadd.f32 %v3213, %v3258
        %v3267 = vadd.f32 %v3214, %v3259
        %v3268 = vadd.f32 %v3215, %v3260
        %v3269 = vadd.f32 %v3216, %v3261
        %3270 = vset.pattern.permute.xlu0 8
        %3271 = vperm.xlu0 %3270, %v1238
        %v3272 = vpop.permute.xlu0 %3271
        %3274 = vset.pattern.permute.xlu0 8
        %3275 = vperm.xlu0 %3274, %v1239
        %v3276 = vpop.permute.xlu0 %3275
        %3278 = vset.pattern.permute.xlu0 8
        %3279 = vperm.xlu0 %3278, %v1240
        %v3280 = vpop.permute.xlu0 %3279
        %3282 = vset.pattern.permute.xlu0 8
        %3283 = vperm.xlu0 %3282, %v1241
        %v3284 = vpop.permute.xlu0 %3283
        %v3286 = vadd.f32 %v3262, %v3272
        %v3287 = vadd.f32 %v3263, %v3272
        %v3288 = vadd.f32 %v3264, %v3276
        %v3289 = vadd.f32 %v3265, %v3276
        %v3290 = vadd.f32 %v3266, %v3280
        %v3291 = vadd.f32 %v3267, %v3280
        %v3292 = vadd.f32 %v3268, %v3284
        %v3293 = vadd.f32 %v3269, %v3284
        %v3294 = vld [vmem:[%s1 + $0x68] sm:$0xff]
        %v3295 = vld [vmem:[%s1 + $0x70] sm:$0xff]
        %v3296 = vld [vmem:[%s1 + $0x78] sm:$0xff]
        %v3297 = vld [vmem:[%s1 + $0x80] sm:$0xff]
        %3298 = vset.pattern.permute.xlu0 9
        %3299 = vperm.xlu0 %3298, %v1238
        %v3300 = vpop.permute.xlu0 %3299
        %3302 = vset.pattern.permute.xlu0 9
        %3303 = vperm.xlu0 %3302, %v1239
        %v3304 = vpop.permute.xlu0 %3303
        %3306 = vset.pattern.permute.xlu0 9
        %3307 = vperm.xlu0 %3306, %v1240
        %v3308 = vpop.permute.xlu0 %3307
        %3310 = vset.pattern.permute.xlu0 9
        %3311 = vperm.xlu0 %3310, %v1241
        %v3312 = vpop.permute.xlu0 %3311
        %v3315 = vsel %vm245, %v3294, 0
        %v3318 = vsel %vm245, %v3295, 0
        %v3321 = vsel %vm245, %v3296, 0
        %v3324 = vsel %vm245, %v3297, 0
        %3326 = vmatprep.subr.mxu0 0.0
        %3327 = vmatpush1.msra.mxu0 0.0
        %3328 = vmatprep.subr.mxu0 0.0
        %3329 = vmatpush1.msra.mxu0 0.0
        %3330 = vmatprep.subr.mxu0 0.0
        %3331 = vmatpush1.msra.mxu0 0.0
        %3332 = vmatprep.subr.mxu0 0.0
        %3333 = vmatpush1.msra.mxu0 0.0
        %3334 = vmatprep.subr.mxu0 0.0
        %3335 = vmatpush1.msra.mxu0 0.0
        %3336 = vmatprep.subr.mxu0 0.0
        %3337 = vmatpush1.msra.mxu0 0.0
        %3338 = vmatprep.subr.mxu0 0.0
        %3339 = vmatpush1.msra.mxu0 0.0
        %3340 = vmatprep.subr.mxu0 0.0
        %3341 = vmatpush1.msra.mxu0 0.0
        %3342 = vmatprep.subr.mxu0 0.0
        %3343 = vmatpush1.msra.mxu0 0.0
        %3344 = vmatprep.subr.mxu0 0.0
        %3345 = vmatpush1.msra.mxu0 0.0
        %3346 = vmatprep.subr.mxu0 0.0
        %3347 = vmatpush1.msra.mxu0 0.0
        %3348 = vmatprep.subr.mxu0 0.0
        %3349 = vmatpush1.msra.mxu0 0.0
        %3350 = vmatprep.subr.mxu0 %v3293
        %3351 = vmatpush1.msra.mxu0 %v3292
        %3352 = vmatprep.subr.mxu0 %v3291
        %3353 = vmatpush1.msra.mxu0 %v3290
        %3354 = vmatprep.subr.mxu0 %v3289
        %3355 = vmatpush1.msra.mxu0 %v3288
        %3356 = vmatprep.subr.mxu0 %v3287
        %3357 = vmatpush1.msra.mxu0 %v3286
        %3358 = vmatprep.subr.mxu0 0.0
        %3359 = vmatpush2.msra.mxu0 0.0
        %3360 = vmatprep.subr.mxu0 0.0
        %3361 = vmatpush2.msra.mxu0 0.0
        %3362 = vmatprep.subr.mxu0 0.0
        %3363 = vmatpush2.msra.mxu0 0.0
        %3364 = vmatprep.subr.mxu0 0.0
        %3365 = vmatpush2.msra.mxu0 0.0
        %3366 = vmatprep.subr.mxu0 0.0
        %3367 = vmatpush2.msra.mxu0 0.0
        %3368 = vmatprep.subr.mxu0 0.0
        %3369 = vmatpush2.msra.mxu0 0.0
        %3370 = vmatprep.subr.mxu0 0.0
        %3371 = vmatpush2.msra.mxu0 0.0
        %3372 = vmatprep.subr.mxu0 0.0
        %3373 = vmatpush2.msra.mxu0 0.0
        %3374 = vmatprep.subr.mxu0 0.0
        %3375 = vmatpush2.msra.mxu0 0.0
        %3376 = vmatprep.subr.mxu0 0.0
        %3377 = vmatpush2.msra.mxu0 0.0
        %3378 = vmatprep.subr.mxu0 0.0
        %3379 = vmatpush2.msra.mxu0 0.0
        %3380 = vmatprep.subr.mxu0 0.0
        %3381 = vmatpush2.msra.mxu0 0.0
        %3382 = vmatprep.subr.mxu0 0.0
        %3383 = vmatpush2.msra.mxu0 0.0
        %3384 = vmatprep.subr.mxu0 0.0
        %3385 = vmatpush2.msra.mxu0 0.0
        %3386 = vmatprep.subr.mxu0 0.0
        %3387 = vmatpush2.msra.mxu0 0.0
        %3388 = vmatprep.subr.mxu0 0.0
        %3389 = vmatpush2.msra.mxu0 0.0
        %3390 = vmatprep.mubr.f32.mxu0 0.0
        %3391 = vmatmul.mubr.f32.gmra.mxu0 %v3315
        %v3392 = vpop.f32.mrf.mxu0
        %v3393 = vadd.f32 %v3300, %v3392
        %v3394 = vpop.f32.mrf.mxu0
        %v3395 = vadd.f32 %v3300, %v3394
        %3396 = vmatprep.mubr.f32.mxu0 0.0
        %3397 = vmatmul.mubr.f32.gmra.mxu0 %v3318
        %v3398 = vpop.f32.mrf.mxu0
        %v3399 = vadd.f32 %v3304, %v3398
        %v3400 = vpop.f32.mrf.mxu0
        %v3401 = vadd.f32 %v3304, %v3400
        %3402 = vmatprep.mubr.f32.mxu0 0.0
        %3403 = vmatmul.mubr.f32.gmra.mxu0 %v3321
        %v3404 = vpop.f32.mrf.mxu0
        %v3405 = vadd.f32 %v3308, %v3404
        %v3406 = vpop.f32.mrf.mxu0
        %v3407 = vadd.f32 %v3308, %v3406
        %3408 = vmatprep.mubr.f32.mxu0 0.0
        %3409 = vmatmul.mubr.f32.gmra.mxu0 %v3324
        %v3410 = vpop.f32.mrf.mxu0
        %v3411 = vadd.f32 %v3312, %v3410
        %v3412 = vpop.f32.mrf.mxu0
        %v3413 = vadd.f32 %v3312, %v3412
        %3414 = vdwg.mxu0
        %v3415 = vld [vmem:[#allocation2] sm:$0xff]
        %v3416 = vld [vmem:[#allocation2 + $0x8] sm:$0xff]
        %v3417 = vld [vmem:[#allocation2 + $0x10] sm:$0xff]
        %v3418 = vld [vmem:[#allocation2 + $0x18] sm:$0xff]
        %v3419 = vld [vmem:[#allocation2 + $0x20] sm:$0xff]
        %v3420 = vld [vmem:[#allocation2 + $0x28] sm:$0xff]
        %v3421 = vld [vmem:[#allocation2 + $0x30] sm:$0xff]
        %v3422 = vld [vmem:[#allocation2 + $0x38] sm:$0xff]
        %v3423 = vmul.f32 %v3415, %v3393
        %v3424 = vmul.f32 %v3416, %v3395
        %v3425 = vmul.f32 %v3417, %v3399
        %v3426 = vmul.f32 %v3418, %v3401
        %v3427 = vmul.f32 %v3419, %v3405
        %v3428 = vmul.f32 %v3420, %v3407
        %v3429 = vmul.f32 %v3421, %v3411
        %v3430 = vmul.f32 %v3422, %v3413
        %3431 = vst [vmem:[%s217] sm:$0xff] %v3423
        %3432 = vst [vmem:[%s217 + $0x8] sm:$0xff] %v3424
        %3433 = vst [vmem:[%s217 + $0x10] sm:$0xff] %v3425
        %3434 = vst [vmem:[%s217 + $0x18] sm:$0xff] %v3426
        %3435 = vst [vmem:[%s217 + $0x20] sm:$0xff] %v3427
        %3436 = vst [vmem:[%s217 + $0x28] sm:$0xff] %v3428
        %3437 = vst [vmem:[%s217 + $0x30] sm:$0xff] %v3429
        %3438 = vst [vmem:[%s217 + $0x38] sm:$0xff] %v3430
        %s3439 = sand.u32 %s137, 1
        %s3440 = scalar_lea.sflag [#allocation4], %s3439
        %s3441 = sand.u32 %s137, 1
        %s3442 = smul.addr %s3441, 64
        %s3443 = scalar_lea.vmem [#allocation3], %s3442
        // Predicated region
        $region41: #{tpu_custom_call.1} parent=39 // pred_check
          %p3444 = pneg %p147
        $region42: #{tpu_custom_call.1} parent=39 // pred_check_branch
          %3446 = sbr.rel (%p3444) target = $region44
        $region43: #{tpu_custom_call.1} parent=39 // pred_region
          %s3448 = ssub.s32 1024, 1024
          %3449 = vsyncadd %s3440, %s3448
          %s3450 = smul.addr %s19, 8
          %s3451 = smul.addr %s3450, 128
          %s3452 = scalar_lea.hbm %s5, %s3451
          %s3453 = sshll.u32 %s3443, 4
          %s3454 = int_to_ptr.vmem [resolvable:$true] %s3453
          %3459 = dma.vmem_to_hbm [thread:$0]  %s3454, 1024, %s3452, %s3440, 256, 256, 16
        $region44: #{tpu_custom_call.1} parent=39 // pred_fallthru
          _
      $region40: #{tpu_custom_call.1} parent=5 // pred_fallthru
        _
      %p3460 = scmp.le.s32.totalorder 2, %s14
      // Predicated region
      $region45: #{tpu_custom_call.1} parent=5 // pred_check
        %p3461 = pneg %p3460
      $region46: #{tpu_custom_call.1} parent=5 // pred_check_branch
        %3463 = sbr.rel (%p3461) target = $region48
      $region47: #{tpu_custom_call.1} parent=5 // pred_region
        %s3464 = ssub.s32 %s14, 2
        // Predicated region
        $region49: #{tpu_custom_call.1} parent=47 // pred_check
          %p3465 = pneg %p153
        $region50: #{tpu_custom_call.1} parent=47 // pred_check_branch
          %3467 = sbr.rel (%p3465) target = $region52
        $region51: #{tpu_custom_call.1} parent=47 // pred_region
          %s3468 = sand.u32 %s138, 1
          %s3469 = scalar_lea.sflag [#allocation4], %s3468
          %s3470 = sand.u32 %s138, 1
          %s3471 = smul.addr %s3470, 64
          %s3472 = scalar_lea.vmem [#allocation3], %s3471
          %3473 = dma.done %s3469, 1024
        $region52: #{tpu_custom_call.1} parent=47 // pred_fallthru
          _
      $region48: #{tpu_custom_call.1} parent=5 // pred_fallthru
        _
    $region6: #{tpu_custom_call.1} parent=1 // loop_footer
      %s18 = sadd.s32 1, %s14
    $region7: #{tpu_custom_call.1} parent=1 // loop_footer_branch
      %13 = sbr.rel target = $region3
    $region8: #{tpu_custom_call.1} parent=1 // loop_exit
      _
    %3474 = vsyncpa [#allocation4], 1
    %s3475 = scalar_lea.sflag [#allocation4], 1
    %3476 = vsyncpa %s3475, 1

</llo_original>
